<compile_context>
chip_gen: v6e
topology: v6e:2x2x1
jax: 0.10.0
libtpu: 0.0.40
codegen_flags: <defaults>
</compile_context>

<pallas_src>
import functools

import jax
import jax.numpy as jnp
from jax import lax
from jax.experimental import pallas as pl
from jax.experimental.pallas import tpu as pltpu


def sam_kernel(mask_ref, x1_ref, x2_ref, w1_ref, b1_ref, w2p_ref, b2p_ref,
               w3p_ref, b3p_ref, gamma_ref, out_ref, *, H, W, C):
    Cm = C // 8
    HW = H * W

    x1 = x1_ref[0]            # (HW, C)
    x2 = x2_ref[0]            # (HW, C)
    masks = mask_ref[...]     # (HW, 9) f32 {0,1}, tap index (dy+1)*3+(dx+1)

    # ---- conv1 (1x1): single taller matmul over both images (sublane stack).
    x12 = jnp.concatenate([x1, x2], axis=0)                          # (2HW, C)
    c1s = jnp.dot(x12, w1_ref[...],
                  preferred_element_type=jnp.float32) + b1_ref[...]  # (2HW, Cm)

    # Lane-stack the two images so the 9 rolls/masks below are shared:
    # lanes [0:Cm] = image 1, lanes [Cm:2Cm] = image 2.
    c1 = jnp.concatenate([c1s[:HW, :], c1s[HW:, :]], axis=1)         # (HW, 2Cm)

    # ---- conv2 (3x3, pad=1): 9 shifted+masked taps packed along lanes,
    # contracted in ONE matmul against the block-diagonal (9*2Cm, 2Cm) weight.
    taps = []
    t = 0
    for dy in (-1, 0, 1):
        for dx in (-1, 0, 1):
            s = dy * W + dx
            shifted = pltpu.roll(c1, shift=(-s) % HW, axis=0)        # out[p]=c1[p+s]
            taps.append(shifted * masks[:, t:t + 1])
            t += 1
    tapmat = jnp.concatenate(taps, axis=1)                           # (HW, 18Cm)
    c2 = jnp.dot(tapmat, w2p_ref[...],
                 preferred_element_type=jnp.float32) + b2p_ref[...]  # (HW, 2Cm)

    # ---- conv3 (1x1): block-diagonal weight keeps both images lane-stacked.
    c3 = jnp.dot(c2, w3p_ref[...],
                 preferred_element_type=jnp.float32) + b3p_ref[...]  # (HW, 2C)

    # ---- global avg / max pools for both images at once (c3 = [c3_1 | c3_2]).
    colsum = jnp.sum(c3, axis=0, keepdims=True)                      # (1, 2C)
    colmax = jnp.max(c3, axis=0, keepdims=True)                      # (1, 2C)
    avg = colsum * (1.0 / HW)                                        # (1, 2C)

    # Softmax over the 4C vector [avg1, max1, avg2, max2]; the forward only
    # consumes entries 0..3 (= avg-pool of image 1, channels 0..3), but the
    # denominator runs over all 4C values.
    m = jnp.max(jnp.maximum(avg, colmax), axis=1, keepdims=True)     # (1, 1)
    denom = jnp.sum(jnp.exp(avg - m) + jnp.exp(colmax - m),
                    axis=1, keepdims=True)                           # (1, 1)
    inv = pl.reciprocal(denom, approx=True)                          # EUP slot
    inv = inv * (2.0 - denom * inv)                                  # Newton step -> f32 accurate
    e4 = jnp.exp(avg[:, 0:4] - m)                                    # (1, 4)
    sa = (e4[:, 0:1] + e4[:, 1:2]) * inv                             # (1, 1)
    sb = (e4[:, 2:3] + e4[:, 3:4]) * inv                             # (1, 1)

    c3_1 = c3[:, :C]
    c3_2 = c3[:, C:]
    gamma = gamma_ref[...]                                           # (1, 1)
    out_ref[0] = gamma * (c3_1 * sa + c3_2 * sb) + x1


def _make_tap_masks(H, W):
    # mask[p, t] = 1 iff pixel p's neighbour at (dy, dx) [t = (dy+1)*3+(dx+1)]
    # lies inside the image (zero padding elsewhere).
    i = jnp.arange(H * W, dtype=jnp.int32) // W
    j = jnp.arange(H * W, dtype=jnp.int32) % W
    cols = []
    for dy in (-1, 0, 1):
        for dx in (-1, 0, 1):
            ok = (i + dy >= 0) & (i + dy < H) & (j + dx >= 0) & (j + dx < W)
            cols.append(ok)
    return jnp.stack(cols, axis=1).astype(jnp.float32)               # (HW, 9)


@jax.jit
def sam_pallas(x1_nchw, x2_nchw, params):
    w1, b1, w2, b2, w3, b3, gamma = params
    B, C, H1, W1 = x1_nchw.shape
    B2, C2, H2, W2 = x2_nchw.shape
    assert (B, C) == (B2, C2)
    # The module's final `out1 + out3` add requires matching spatial sizes;
    # the shared-roll optimization relies on it as well.
    assert (H1, W1) == (H2, W2), "SAM requires x1/x2 with equal spatial size"
    H, W = H1, W1
    Cm = C // 8
    HW = H * W
    assert HW % 8 == 0

    # NCHW -> (B, H*W, C): channels on the lane (minor) axis for the matmuls.
    x1f = jnp.transpose(x1_nchw, (0, 2, 3, 1)).reshape(B, HW, C)
    x2f = jnp.transpose(x2_nchw, (0, 2, 3, 1)).reshape(B, HW, C)

    # Pack both images along lanes via block-diagonal weights so every conv
    # stage handles image1/image2 in one wider op.
    zb2 = jnp.zeros((9, Cm, Cm), w2.dtype)
    w2p = jnp.concatenate(
        [jnp.concatenate([w2, zb2], axis=2),
         jnp.concatenate([zb2, w2], axis=2)], axis=1).reshape(18 * Cm, 2 * Cm)
    b2p = jnp.concatenate([b2, b2], axis=1)                          # (1, 2Cm)
    zb3 = jnp.zeros((Cm, C), w3.dtype)
    w3p = jnp.concatenate(
        [jnp.concatenate([w3, zb3], axis=1),
         jnp.concatenate([zb3, w3], axis=1)], axis=0)                # (2Cm, 2C)
    b3p = jnp.concatenate([b3, b3], axis=1)                          # (1, 2C)

    mask = _make_tap_masks(H, W)                                     # (HW, 9)

    kernel = functools.partial(sam_kernel, H=H, W=W, C=C)
    const = lambda b: (0, 0)
    out = pl.pallas_call(
        kernel,
        out_shape=jax.ShapeDtypeStruct((B, HW, C), jnp.float32),
        grid_spec=pltpu.PrefetchScalarGridSpec(
            num_scalar_prefetch=0,
            grid=(B,),
            in_specs=[
                pl.BlockSpec((HW, 9), const),                        # masks
                pl.BlockSpec((1, HW, C), lambda b: (b, 0, 0)),       # x1
                pl.BlockSpec((1, HW, C), lambda b: (b, 0, 0)),       # x2
                pl.BlockSpec((C, Cm), const),                        # w1
                pl.BlockSpec((1, Cm), const),                        # b1
                pl.BlockSpec((18 * Cm, 2 * Cm), const),              # w2 packed
                pl.BlockSpec((1, 2 * Cm), const),                    # b2 packed
                pl.BlockSpec((2 * Cm, 2 * C), const),                # w3 packed
                pl.BlockSpec((1, 2 * C), const),                     # b3 packed
                pl.BlockSpec((1, 1), const),                         # gamma
            ],
            out_specs=pl.BlockSpec((1, HW, C), lambda b: (b, 0, 0)),
        ),
        # out = gamma*attn + x1 is written tile-for-tile over x1's index map.
        input_output_aliases={1: 0},
        compiler_params=pltpu.CompilerParams(
            dimension_semantics=("parallel",),       # shard B over TCs (v7x)
            vmem_limit_bytes=48 * 1024 * 1024,       # > 16/32MiB defaults, < v7x 64MiB
        ),
    )(mask, x1f, x2f, w1, b1, w2p, b2p, w3p, b3p, gamma)

    # (B, H*W, C) -> NCHW
    return jnp.transpose(out.reshape(B, H, W, C), (0, 3, 1, 2))


# ---------------- pure-JAX reference (for correctness check) ----------------
def _conv_nhwc(x, w_hwio, b, padding):
    y = lax.conv_general_dilated(
        x, w_hwio, window_strides=(1, 1), padding=padding,
        dimension_numbers=("NHWC", "HWIO", "NHWC"))
    return y + b.reshape(1, 1, 1, -1)


def sam_reference(x1_nchw, x2_nchw, params):
    w1, b1, w2, b2, w3, b3, gamma = params
    B, C, H1, W1 = x1_nchw.shape
    Cm = C // 8
    x1 = jnp.transpose(x1_nchw, (0, 2, 3, 1))
    x2 = jnp.transpose(x2_nchw, (0, 2, 3, 1))
    w1h = w1.reshape(1, 1, C, Cm)
    w2h = w2.reshape(3, 3, Cm, Cm)
    w3h = w3.reshape(1, 1, Cm, C)

    def trunk(x):
        y = _conv_nhwc(x, w1h, b1[0], "VALID")
        y = _conv_nhwc(y, w2h, b2[0], [(1, 1), (1, 1)])
        return _conv_nhwc(y, w3h, b3[0], "VALID")

    c3_1 = trunk(x1)
    c3_2 = trunk(x2)
    avg1 = jnp.mean(c3_1, axis=(1, 2))
    max1 = jnp.max(c3_1, axis=(1, 2))
    avg2 = jnp.mean(c3_2, axis=(1, 2))
    max2 = jnp.max(c3_2, axis=(1, 2))
    vec = jnp.concatenate([avg1, max1, avg2, max2], axis=1)          # (B, 4C)
    soft = jax.nn.softmax(vec, axis=1)
    sa = (soft[:, 0] + soft[:, 1]).reshape(B, 1, 1, 1)
    sb = (soft[:, 2] + soft[:, 3]).reshape(B, 1, 1, 1)
    out = c3_1 * sa + c3_2 * sb
    out = gamma[0, 0] * out + x1
    return jnp.transpose(out, (0, 3, 1, 2))


if __name__ == "__main__":
    B, C, H, W = 2, 32, 16, 16          # in_channels=32 -> hidden C//8 = 4
    Cm = C // 8
    ks = jax.random.split(jax.random.PRNGKey(0), 8)
    x1 = jax.random.normal(ks[0], (B, C, H, W), jnp.float32)
    x2 = jax.random.normal(ks[1], (B, C, H, W), jnp.float32)
    w1 = jax.random.normal(ks[2], (C, Cm), jnp.float32) * 0.1
    b1 = jax.random.normal(ks[3], (1, Cm), jnp.float32) * 0.1
    w2 = jax.random.normal(ks[4], (9, Cm, Cm), jnp.float32) * 0.1
    b2 = jax.random.normal(ks[5], (1, Cm), jnp.float32) * 0.1
    w3 = jax.random.normal(ks[6], (Cm, C), jnp.float32) * 0.1
    b3 = jax.random.normal(ks[7], (1, C), jnp.float32) * 0.1
    # PyTorch inits gamma to 0 (which would make out == x1); use a nonzero
    # deterministic value so the attention path is actually exercised.
    gamma = jnp.full((1, 1), 0.7, jnp.float32)
    params = (w1, b1, w2, b2, w3, b3, gamma)

    out = sam_pallas(x1, x2, params)
    out = jax.block_until_ready(out)
    assert out.shape == (B, C, H, W)

    ref = sam_reference(x1, x2, params)
    err = float(jnp.max(jnp.abs(out - ref)))
    assert err < 1e-4, f"max abs error {err}"
    print("KERNEL_OK")
</pallas_src>

<mosaic_0001>
module attributes {stable_mosaic.version = 11 : i64} {
  func.func @sam_kernel(%arg0: i32, %arg1: memref<256x9xf32, #tpu.memory_space<vmem>>, %arg2: memref<1x256x32xf32, #tpu.memory_space<vmem>>, %arg3: memref<1x256x32xf32, #tpu.memory_space<vmem>>, %arg4: memref<32x4xf32, #tpu.memory_space<vmem>>, %arg5: memref<1x4xf32, #tpu.memory_space<vmem>>, %arg6: memref<72x8xf32, #tpu.memory_space<vmem>>, %arg7: memref<1x8xf32, #tpu.memory_space<vmem>>, %arg8: memref<8x64xf32, #tpu.memory_space<vmem>>, %arg9: memref<1x64xf32, #tpu.memory_space<vmem>>, %arg10: memref<1x1xf32, #tpu.memory_space<vmem>>, %arg11: memref<1x256x32xf32, #tpu.memory_space<vmem>>) attributes {dimension_semantics = [#tpu.dimension_semantics<parallel>], iteration_bounds = array<i64: 2>, scalar_prefetch = 0 : i64, scratch_operands = 0 : i64, tpu.core_type = #tpu.core_type<tc>, window_params = [{pipeline_mode = #tpu.pipeline_mode<synchronous>, transform_indices = @transform_0, window_bounds = array<i64: 256, 9>}, {transform_indices = @transform_1, window_bounds = array<i64: 1, 256, 32>}, {transform_indices = @transform_2, window_bounds = array<i64: 1, 256, 32>}, {pipeline_mode = #tpu.pipeline_mode<synchronous>, transform_indices = @transform_3, window_bounds = array<i64: 32, 4>}, {pipeline_mode = #tpu.pipeline_mode<synchronous>, transform_indices = @transform_4, window_bounds = array<i64: 1, 4>}, {pipeline_mode = #tpu.pipeline_mode<synchronous>, transform_indices = @transform_5, window_bounds = array<i64: 72, 8>}, {pipeline_mode = #tpu.pipeline_mode<synchronous>, transform_indices = @transform_6, window_bounds = array<i64: 1, 8>}, {pipeline_mode = #tpu.pipeline_mode<synchronous>, transform_indices = @transform_7, window_bounds = array<i64: 8, 64>}, {pipeline_mode = #tpu.pipeline_mode<synchronous>, transform_indices = @transform_8, window_bounds = array<i64: 1, 64>}, {pipeline_mode = #tpu.pipeline_mode<synchronous>, transform_indices = @transform_9, window_bounds = array<i64: 1, 1>}, {transform_indices = @transform_10, window_bounds = array<i64: 1, 256, 32>}]} {
    %c0 = arith.constant 0 : index
    %c0_0 = arith.constant 0 : index
    %c0_1 = arith.constant 0 : index
    %0 = vector.load %arg2[%c0, %c0_0, %c0_1] : memref<1x256x32xf32, #tpu.memory_space<vmem>>, vector<1x256x32xf32>
    %1 = vector.shape_cast %0 : vector<1x256x32xf32> to vector<256x32xf32>
    %c0_2 = arith.constant 0 : index
    %c0_3 = arith.constant 0 : index
    %c0_4 = arith.constant 0 : index
    %2 = vector.load %arg3[%c0_2, %c0_3, %c0_4] : memref<1x256x32xf32, #tpu.memory_space<vmem>>, vector<1x256x32xf32>
    %3 = vector.shape_cast %2 : vector<1x256x32xf32> to vector<256x32xf32>
    %c0_5 = arith.constant 0 : index
    %c0_6 = arith.constant 0 : index
    %4 = vector.load %arg1[%c0_5, %c0_6] : memref<256x9xf32, #tpu.memory_space<vmem>>, vector<256x9xf32>
    %5 = tpu.concatenate %1, %3 in 0 : vector<256x32xf32>, vector<256x32xf32> -> vector<512x32xf32>
    %c0_7 = arith.constant 0 : index
    %c0_8 = arith.constant 0 : index
    %6 = vector.load %arg4[%c0_7, %c0_8] : memref<32x4xf32, #tpu.memory_space<vmem>>, vector<32x4xf32>
    %cst = arith.constant dense<0.000000e+00> : vector<512x4xf32>
    %7 = tpu.matmul %5, %6, %cst {dimension_numbers = #tpu.dot_dimension_numbers<[1], [0], [0], [1], [0, 0, 1, 1], [], []>} : vector<512x32xf32>, vector<32x4xf32>, vector<512x4xf32> -> vector<512x4xf32>
    %c0_9 = arith.constant 0 : index
    %c0_10 = arith.constant 0 : index
    %8 = vector.load %arg5[%c0_9, %c0_10] : memref<1x4xf32, #tpu.memory_space<vmem>>, vector<1x4xf32>
    %9 = vector.broadcast %8 : vector<1x4xf32> to vector<512x4xf32>
    %10 = arith.addf %7, %9 : vector<512x4xf32>
    %11 = vector.extract_strided_slice %10 {offsets = [0, 0], sizes = [256, 4], strides = [1, 1]} : vector<512x4xf32> to vector<256x4xf32>
    %12 = vector.extract_strided_slice %10 {offsets = [256, 0], sizes = [256, 4], strides = [1, 1]} : vector<512x4xf32> to vector<256x4xf32>
    %13 = tpu.concatenate %11, %12 in 1 : vector<256x4xf32>, vector<256x4xf32> -> vector<256x8xf32>
    %c17_i32 = arith.constant 17 : i32
    %14 = tpu.dynamic_rotate %13 by %c17_i32 dim 0 : vector<256x8xf32>, i32 -> vector<256x8xf32>
    %15 = vector.extract_strided_slice %4 {offsets = [0, 0], sizes = [256, 1], strides = [1, 1]} : vector<256x9xf32> to vector<256x1xf32>
    %16 = vector.broadcast %15 : vector<256x1xf32> to vector<256x8xf32>
    %17 = arith.mulf %14, %16 : vector<256x8xf32>
    %c16_i32 = arith.constant 16 : i32
    %18 = tpu.dynamic_rotate %13 by %c16_i32 dim 0 : vector<256x8xf32>, i32 -> vector<256x8xf32>
    %19 = vector.extract_strided_slice %4 {offsets = [0, 1], sizes = [256, 1], strides = [1, 1]} : vector<256x9xf32> to vector<256x1xf32>
    %20 = vector.broadcast %19 : vector<256x1xf32> to vector<256x8xf32>
    %21 = arith.mulf %18, %20 : vector<256x8xf32>
    %c15_i32 = arith.constant 15 : i32
    %22 = tpu.dynamic_rotate %13 by %c15_i32 dim 0 : vector<256x8xf32>, i32 -> vector<256x8xf32>
    %23 = vector.extract_strided_slice %4 {offsets = [0, 2], sizes = [256, 1], strides = [1, 1]} : vector<256x9xf32> to vector<256x1xf32>
    %24 = vector.broadcast %23 : vector<256x1xf32> to vector<256x8xf32>
    %25 = arith.mulf %22, %24 : vector<256x8xf32>
    %c1_i32 = arith.constant 1 : i32
    %26 = tpu.dynamic_rotate %13 by %c1_i32 dim 0 : vector<256x8xf32>, i32 -> vector<256x8xf32>
    %27 = vector.extract_strided_slice %4 {offsets = [0, 3], sizes = [256, 1], strides = [1, 1]} : vector<256x9xf32> to vector<256x1xf32>
    %28 = vector.broadcast %27 : vector<256x1xf32> to vector<256x8xf32>
    %29 = arith.mulf %26, %28 : vector<256x8xf32>
    %c0_i32 = arith.constant 0 : i32
    %30 = tpu.dynamic_rotate %13 by %c0_i32 dim 0 : vector<256x8xf32>, i32 -> vector<256x8xf32>
    %31 = vector.extract_strided_slice %4 {offsets = [0, 4], sizes = [256, 1], strides = [1, 1]} : vector<256x9xf32> to vector<256x1xf32>
    %32 = vector.broadcast %31 : vector<256x1xf32> to vector<256x8xf32>
    %33 = arith.mulf %30, %32 : vector<256x8xf32>
    %c255_i32 = arith.constant 255 : i32
    %34 = tpu.dynamic_rotate %13 by %c255_i32 dim 0 : vector<256x8xf32>, i32 -> vector<256x8xf32>
    %35 = vector.extract_strided_slice %4 {offsets = [0, 5], sizes = [256, 1], strides = [1, 1]} : vector<256x9xf32> to vector<256x1xf32>
    %36 = vector.broadcast %35 : vector<256x1xf32> to vector<256x8xf32>
    %37 = arith.mulf %34, %36 : vector<256x8xf32>
    %c241_i32 = arith.constant 241 : i32
    %38 = tpu.dynamic_rotate %13 by %c241_i32 dim 0 : vector<256x8xf32>, i32 -> vector<256x8xf32>
    %39 = vector.extract_strided_slice %4 {offsets = [0, 6], sizes = [256, 1], strides = [1, 1]} : vector<256x9xf32> to vector<256x1xf32>
    %40 = vector.broadcast %39 : vector<256x1xf32> to vector<256x8xf32>
    %41 = arith.mulf %38, %40 : vector<256x8xf32>
    %c240_i32 = arith.constant 240 : i32
    %42 = tpu.dynamic_rotate %13 by %c240_i32 dim 0 : vector<256x8xf32>, i32 -> vector<256x8xf32>
    %43 = vector.extract_strided_slice %4 {offsets = [0, 7], sizes = [256, 1], strides = [1, 1]} : vector<256x9xf32> to vector<256x1xf32>
    %44 = vector.broadcast %43 : vector<256x1xf32> to vector<256x8xf32>
    %45 = arith.mulf %42, %44 : vector<256x8xf32>
    %c239_i32 = arith.constant 239 : i32
    %46 = tpu.dynamic_rotate %13 by %c239_i32 dim 0 : vector<256x8xf32>, i32 -> vector<256x8xf32>
    %47 = vector.extract_strided_slice %4 {offsets = [0, 8], sizes = [256, 1], strides = [1, 1]} : vector<256x9xf32> to vector<256x1xf32>
    %48 = vector.broadcast %47 : vector<256x1xf32> to vector<256x8xf32>
    %49 = arith.mulf %46, %48 : vector<256x8xf32>
    %50 = tpu.concatenate %17, %21, %25, %29, %33, %37, %41, %45, %49 in 1 : vector<256x8xf32>, vector<256x8xf32>, vector<256x8xf32>, vector<256x8xf32>, vector<256x8xf32>, vector<256x8xf32>, vector<256x8xf32>, vector<256x8xf32>, vector<256x8xf32> -> vector<256x72xf32>
    %c0_11 = arith.constant 0 : index
    %c0_12 = arith.constant 0 : index
    %51 = vector.load %arg6[%c0_11, %c0_12] : memref<72x8xf32, #tpu.memory_space<vmem>>, vector<72x8xf32>
    %cst_13 = arith.constant dense<0.000000e+00> : vector<256x8xf32>
    %52 = tpu.matmul %50, %51, %cst_13 {dimension_numbers = #tpu.dot_dimension_numbers<[1], [0], [0], [1], [0, 0, 1, 1], [], []>} : vector<256x72xf32>, vector<72x8xf32>, vector<256x8xf32> -> vector<256x8xf32>
    %c0_14 = arith.constant 0 : index
    %c0_15 = arith.constant 0 : index
    %53 = vector.load %arg7[%c0_14, %c0_15] : memref<1x8xf32, #tpu.memory_space<vmem>>, vector<1x8xf32>
    %54 = vector.broadcast %53 : vector<1x8xf32> to vector<256x8xf32>
    %55 = arith.addf %52, %54 : vector<256x8xf32>
    %c0_16 = arith.constant 0 : index
    %c0_17 = arith.constant 0 : index
    %56 = vector.load %arg8[%c0_16, %c0_17] : memref<8x64xf32, #tpu.memory_space<vmem>>, vector<8x64xf32>
    %cst_18 = arith.constant dense<0.000000e+00> : vector<256x64xf32>
    %57 = tpu.matmul %55, %56, %cst_18 {dimension_numbers = #tpu.dot_dimension_numbers<[1], [0], [0], [1], [0, 0, 1, 1], [], []>} : vector<256x8xf32>, vector<8x64xf32>, vector<256x64xf32> -> vector<256x64xf32>
    %c0_19 = arith.constant 0 : index
    %c0_20 = arith.constant 0 : index
    %58 = vector.load %arg9[%c0_19, %c0_20] : memref<1x64xf32, #tpu.memory_space<vmem>>, vector<1x64xf32>
    %59 = vector.broadcast %58 : vector<1x64xf32> to vector<256x64xf32>
    %60 = arith.addf %57, %59 : vector<256x64xf32>
    %cst_21 = arith.constant dense<0.000000e+00> : vector<64xf32>
    %61 = vector.multi_reduction <add>, %60, %cst_21 [0] : vector<256x64xf32> to vector<64xf32>
    %62 = vector.shape_cast %61 : vector<64xf32> to vector<1x64xf32>
    %cst_22 = arith.constant dense<0xFF800000> : vector<64xf32>
    %63 = vector.multi_reduction <maximumf>, %60, %cst_22 [0] : vector<256x64xf32> to vector<64xf32>
    %64 = vector.shape_cast %63 : vector<64xf32> to vector<1x64xf32>
    %cst_23 = arith.constant 3.906250e-03 : f32
    %65 = vector.broadcast %cst_23 : f32 to vector<1x64xf32>
    %66 = arith.mulf %62, %65 : vector<1x64xf32>
    %67 = arith.maximumf %66, %64 : vector<1x64xf32>
    %cst_24 = arith.constant dense<0xFF800000> : vector<1xf32>
    %68 = vector.multi_reduction <maximumf>, %67, %cst_24 [1] : vector<1x64xf32> to vector<1xf32>
    %69 = vector.shape_cast %68 : vector<1xf32> to vector<1x1xf32>
    %70 = vector.broadcast %69 : vector<1x1xf32> to vector<1x64xf32>
    %71 = arith.subf %66, %70 : vector<1x64xf32>
    %72 = math.exp %71 : vector<1x64xf32>
    %73 = vector.broadcast %69 : vector<1x1xf32> to vector<1x64xf32>
    %74 = arith.subf %64, %73 : vector<1x64xf32>
    %75 = math.exp %74 : vector<1x64xf32>
    %76 = arith.addf %72, %75 : vector<1x64xf32>
    %cst_25 = arith.constant dense<0.000000e+00> : vector<1xf32>
    %77 = vector.multi_reduction <add>, %76, %cst_25 [1] : vector<1x64xf32> to vector<1xf32>
    %78 = vector.shape_cast %77 : vector<1xf32> to vector<1x1xf32>
    %79 = tpu.reciprocal %78 {approx = true} : vector<1x1xf32> -> vector<1x1xf32>
    %80 = arith.mulf %78, %79 : vector<1x1xf32>
    %cst_26 = arith.constant 2.000000e+00 : f32
    %81 = vector.broadcast %cst_26 : f32 to vector<1x1xf32>
    %82 = arith.subf %81, %80 : vector<1x1xf32>
    %83 = arith.mulf %79, %82 : vector<1x1xf32>
    %84 = vector.extract_strided_slice %66 {offsets = [0, 0], sizes = [1, 4], strides = [1, 1]} : vector<1x64xf32> to vector<1x4xf32>
    %85 = vector.broadcast %69 : vector<1x1xf32> to vector<1x4xf32>
    %86 = arith.subf %84, %85 : vector<1x4xf32>
    %87 = math.exp %86 : vector<1x4xf32>
    %88 = vector.extract_strided_slice %87 {offsets = [0, 0], sizes = [1, 1], strides = [1, 1]} : vector<1x4xf32> to vector<1x1xf32>
    %89 = vector.extract_strided_slice %87 {offsets = [0, 1], sizes = [1, 1], strides = [1, 1]} : vector<1x4xf32> to vector<1x1xf32>
    %90 = arith.addf %88, %89 : vector<1x1xf32>
    %91 = arith.mulf %90, %83 : vector<1x1xf32>
    %92 = vector.extract_strided_slice %87 {offsets = [0, 2], sizes = [1, 1], strides = [1, 1]} : vector<1x4xf32> to vector<1x1xf32>
    %93 = vector.extract_strided_slice %87 {offsets = [0, 3], sizes = [1, 1], strides = [1, 1]} : vector<1x4xf32> to vector<1x1xf32>
    %94 = arith.addf %92, %93 : vector<1x1xf32>
    %95 = arith.mulf %94, %83 : vector<1x1xf32>
    %96 = vector.extract_strided_slice %60 {offsets = [0, 0], sizes = [256, 32], strides = [1, 1]} : vector<256x64xf32> to vector<256x32xf32>
    %97 = vector.extract_strided_slice %60 {offsets = [0, 32], sizes = [256, 32], strides = [1, 1]} : vector<256x64xf32> to vector<256x32xf32>
    %c0_27 = arith.constant 0 : index
    %c0_28 = arith.constant 0 : index
    %98 = vector.load %arg10[%c0_27, %c0_28] : memref<1x1xf32, #tpu.memory_space<vmem>>, vector<1x1xf32>
    %99 = vector.broadcast %91 : vector<1x1xf32> to vector<256x32xf32>
    %100 = arith.mulf %96, %99 : vector<256x32xf32>
    %101 = vector.broadcast %95 : vector<1x1xf32> to vector<256x32xf32>
    %102 = arith.mulf %97, %101 : vector<256x32xf32>
    %103 = arith.addf %100, %102 : vector<256x32xf32>
    %104 = vector.broadcast %98 : vector<1x1xf32> to vector<256x32xf32>
    %105 = arith.mulf %104, %103 : vector<256x32xf32>
    %106 = arith.addf %105, %1 : vector<256x32xf32>
    %c0_29 = arith.constant 0 : index
    %c0_30 = arith.constant 0 : index
    %c0_31 = arith.constant 0 : index
    %107 = vector.load %arg11[%c0_29, %c0_30, %c0_31] : memref<1x256x32xf32, #tpu.memory_space<vmem>>, vector<1x256x32xf32>
    %108 = vector.shape_cast %107 : vector<1x256x32xf32> to vector<256x32xf32>
    %109 = vector.shape_cast %106 : vector<256x32xf32> to vector<1x256x32xf32>
    tpu.vector_store %arg11[%c0_29, %c0_30, %c0_31], %109 {strides = array<i32>} : memref<1x256x32xf32, #tpu.memory_space<vmem>>, vector<1x256x32xf32>,
    return
  }
  func.func @transform_0(%arg0: i32) -> (i32, i32) {
    %c0_i32 = arith.constant 0 : i32
    %c0_i32_0 = arith.constant 0 : i32
    %c0_i32_1 = arith.constant 0 : i32
    return %c0_i32, %c0_i32_0 : i32, i32
  }
  func.func @transform_1(%arg0: i32) -> (i32, i32, i32) {
    %c0_i32 = arith.constant 0 : i32
    %c0_i32_0 = arith.constant 0 : i32
    %c0_i32_1 = arith.constant 0 : i32
    return %arg0, %c0_i32, %c0_i32_0 : i32, i32, i32
  }
  func.func @transform_2(%arg0: i32) -> (i32, i32, i32) {
    %c0_i32 = arith.constant 0 : i32
    %c0_i32_0 = arith.constant 0 : i32
    %c0_i32_1 = arith.constant 0 : i32
    return %arg0, %c0_i32, %c0_i32_0 : i32, i32, i32
  }
  func.func @transform_3(%arg0: i32) -> (i32, i32) {
    %c0_i32 = arith.constant 0 : i32
    %c0_i32_0 = arith.constant 0 : i32
    %c0_i32_1 = arith.constant 0 : i32
    return %c0_i32, %c0_i32_0 : i32, i32
  }
  func.func @transform_4(%arg0: i32) -> (i32, i32) {
    %c0_i32 = arith.constant 0 : i32
    %c0_i32_0 = arith.constant 0 : i32
    %c0_i32_1 = arith.constant 0 : i32
    return %c0_i32, %c0_i32_0 : i32, i32
  }
  func.func @transform_5(%arg0: i32) -> (i32, i32) {
    %c0_i32 = arith.constant 0 : i32
    %c0_i32_0 = arith.constant 0 : i32
    %c0_i32_1 = arith.constant 0 : i32
    return %c0_i32, %c0_i32_0 : i32, i32
  }
  func.func @transform_6(%arg0: i32) -> (i32, i32) {
    %c0_i32 = arith.constant 0 : i32
    %c0_i32_0 = arith.constant 0 : i32
    %c0_i32_1 = arith.constant 0 : i32
    return %c0_i32, %c0_i32_0 : i32, i32
  }
  func.func @transform_7(%arg0: i32) -> (i32, i32) {
    %c0_i32 = arith.constant 0 : i32
    %c0_i32_0 = arith.constant 0 : i32
    %c0_i32_1 = arith.constant 0 : i32
    return %c0_i32, %c0_i32_0 : i32, i32
  }
  func.func @transform_8(%arg0: i32) -> (i32, i32) {
    %c0_i32 = arith.constant 0 : i32
    %c0_i32_0 = arith.constant 0 : i32
    %c0_i32_1 = arith.constant 0 : i32
    return %c0_i32, %c0_i32_0 : i32, i32
  }
  func.func @transform_9(%arg0: i32) -> (i32, i32) {
    %c0_i32 = arith.constant 0 : i32
    %c0_i32_0 = arith.constant 0 : i32
    %c0_i32_1 = arith.constant 0 : i32
    return %c0_i32, %c0_i32_0 : i32, i32
  }
  func.func @transform_10(%arg0: i32) -> (i32, i32, i32) {
    %c0_i32 = arith.constant 0 : i32
    %c0_i32_0 = arith.constant 0 : i32
    %c0_i32_1 = arith.constant 0 : i32
    return %arg0, %c0_i32, %c0_i32_0 : i32, i32, i32
  }
}

</mosaic_0001>

<llo_original>
// kernel: sam_pallas.1
$region0: #{sam_pallas.1}
  #allocation0 [shape = 'u32[]', space=smem, size = 0x4, offset = 0x4, fixed_abs, tag = 'smem constant byte address 0x4 - core index']
  #allocation1 [shape = 'u32[144,128]{1,0:T(1,128)}', space=vmem, size = 0x12000, scoped, tag = 'internal scratch']
  #allocation2 [shape = 'f32[1,1]{1,0:T(1,128)S(1)}', space=vmem, size = 0x200, scoped, tag = 'scoped memory for sam_pallas.1']
  %s0 = inlined_call_operand.vmem [shape: f32[256,9], index: 0, kind: input, shape index: {}]
  %s1 = inlined_call_operand.vmem [shape: f32[2,256,32], index: 1, kind: input, shape index: {}, may-alias: {1,10}]
  %s2 = inlined_call_operand.vmem [shape: f32[2,256,32], index: 2, kind: input, shape index: {}]
  %s3 = inlined_call_operand.vmem [shape: f32[32,4], index: 3, kind: input, shape index: {}]
  %s4 = inlined_call_operand.vmem [shape: f32[1,4], index: 4, kind: input, shape index: {}]
  %s5 = inlined_call_operand.vmem [shape: f32[72,8], index: 5, kind: input, shape index: {}]
  %s6 = inlined_call_operand.vmem [shape: f32[1,8], index: 6, kind: input, shape index: {}]
  %s7 = inlined_call_operand.vmem [shape: f32[8,64], index: 7, kind: input, shape index: {}]
  %s8 = inlined_call_operand.vmem [shape: f32[1,64], index: 8, kind: input, shape index: {}]
  %s9 = inlined_call_operand.<no memory space> [shape: f32[1,1], index: 9, kind: input, shape index: {}]
  %s10 = inlined_call_operand.vmem [shape: f32[2,256,32], index: 10, kind: output, shape index: {}, may-alias: {1,10}]
  %s11 = sld [smem:[#allocation0]]
  $region73: #{sam_pallas.1} parent=0
    _
  %s13 = ssub.s32 1, %s11
  %s14 = scalar_select 0, %s13, %s11
  %v15 = vstv %s9
  %16 = vst [vmem:[#allocation2] sm:$0x1] %v15
  loop: start=0, step=1, limit=4
  $region2: #{sam_pallas.1} parent=0 // loop_pre_header
    _
  $region3: #{sam_pallas.1} parent=0 // loop_header
    %s18 = sphi 0, %s22
    %p19 = scmp.ge.s32.totalorder %s18, 4
    %s26 = sphi 0, %s26
    %s28 = sphi 0, %s26
    %s29 = sphi 0, %s28
    %s43 = sphi 0, %s29
    %s49 = sphi 0, %s51
    %s52 = sphi 0, %s49
    %s53 = sphi 0, %s52
    %s69 = sphi 0, %s53
    %s75 = sphi 0, %s77
    %s78 = sphi 0, %s75
    %s79 = sphi 0, %s78
    %s95 = sphi 0, %s79
    %s99 = sphi 0, %s99
    %s101 = sphi 0, %s99
    %s102 = sphi 0, %s101
    %s116 = sphi 0, %s102
    %s120 = sphi 0, %s120
    %s122 = sphi 0, %s120
    %s123 = sphi 0, %s122
    %s137 = sphi 0, %s123
    %s141 = sphi 0, %s141
    %s143 = sphi 0, %s141
    %s144 = sphi 0, %s143
    %s158 = sphi 0, %s144
    %s162 = sphi 0, %s162
    %s164 = sphi 0, %s162
    %s165 = sphi 0, %s164
    %s179 = sphi 0, %s165
    %s183 = sphi 0, %s183
    %s185 = sphi 0, %s183
    %s186 = sphi 0, %s185
    %s200 = sphi 0, %s186
    %s204 = sphi 0, %s204
    %s206 = sphi 0, %s204
    %s207 = sphi 0, %s206
    %s221 = sphi 0, %s207
    %s225 = sphi 0, %s225
    %s227 = sphi 0, %s225
    %s228 = sphi 0, %s227
    %s242 = sphi 0, %s228
    %s248 = sphi 0, %s250
    %s251 = sphi 0, %s248
    %s252 = sphi 0, %s251
    %s268 = sphi 0, %s252
  $region4: #{sam_pallas.1} parent=0 // loop_header_branch
    %21 = sbr.rel (%p19) target = $region8
  $region5: #{sam_pallas.1} parent=0 // loop_body
    %s23 = ssub.s32 %s18, 1
    %s24 = ssub.s32 %s18, 2
    %s25 = sadd.s32 %s18, 1
    %s27 = sadd.s32 %s26, 1
    %p30 = scmp.eq.s32.totalorder %s18, 1
    %p31 = scmp.ne.s32.totalorder %s26, %s28
    %p32 = scmp.eq.s32.totalorder %s18, 0
    %p33 = por %p31, %p32
    %p34 = scmp.ne.s32.totalorder %s26, %s28
    %p35 = scmp.eq.s32.totalorder %s23, 1
    %p36 = por %p34, %p35
    %p37 = scmp.ne.s32.totalorder %s28, %s29
    %p38 = scmp.eq.s32.totalorder %s23, 0
    %p39 = por %p37, %p38
    %p40 = scmp.ne.s32.totalorder %s28, %s29
    %p41 = scmp.eq.s32.totalorder %s24, 1
    %p42 = por %p40, %p41
    %p44 = scmp.ne.s32.totalorder %s29, %s43
    %p45 = scmp.eq.s32.totalorder %s24, 0
    %p46 = por %p44, %p45
    %s47 = ssub.s32 %s18, %s25
    %p48 = scmp.eq.s32.totalorder %s47, 0
    %s50 = sadd.s32 %s49, 1
    %s51 = scalar_select %p48, %s49, %s50
    %p54 = pneg %p48
    %p55 = scmp.eq.s32.totalorder %s18, 1
    %p56 = por %p54, %p55
    %p57 = scmp.ne.s32.totalorder %s49, %s52
    %p58 = scmp.eq.s32.totalorder %s18, 0
    %p59 = por %p57, %p58
    %p60 = scmp.ne.s32.totalorder %s49, %s52
    %p61 = scmp.eq.s32.totalorder %s23, 1
    %p62 = por %p60, %p61
    %p63 = scmp.ne.s32.totalorder %s52, %s53
    %p64 = scmp.eq.s32.totalorder %s23, 0
    %p65 = por %p63, %p64
    %p66 = scmp.ne.s32.totalorder %s52, %s53
    %p67 = scmp.eq.s32.totalorder %s24, 1
    %p68 = por %p66, %p67
    %p70 = scmp.ne.s32.totalorder %s53, %s69
    %p71 = scmp.eq.s32.totalorder %s24, 0
    %p72 = por %p70, %p71
    %s73 = ssub.s32 %s18, %s25
    %p74 = scmp.eq.s32.totalorder %s73, 0
    %s76 = sadd.s32 %s75, 1
    %s77 = scalar_select %p74, %s75, %s76
    %p80 = pneg %p74
    %p81 = scmp.eq.s32.totalorder %s18, 1
    %p82 = por %p80, %p81
    %p83 = scmp.ne.s32.totalorder %s75, %s78
    %p84 = scmp.eq.s32.totalorder %s18, 0
    %p85 = por %p83, %p84
    %p86 = scmp.ne.s32.totalorder %s75, %s78
    %p87 = scmp.eq.s32.totalorder %s23, 1
    %p88 = por %p86, %p87
    %p89 = scmp.ne.s32.totalorder %s78, %s79
    %p90 = scmp.eq.s32.totalorder %s23, 0
    %p91 = por %p89, %p90
    %p92 = scmp.ne.s32.totalorder %s78, %s79
    %p93 = scmp.eq.s32.totalorder %s24, 1
    %p94 = por %p92, %p93
    %p96 = scmp.ne.s32.totalorder %s79, %s95
    %p97 = scmp.eq.s32.totalorder %s24, 0
    %p98 = por %p96, %p97
    %s100 = sadd.s32 %s99, 1
    %p103 = scmp.eq.s32.totalorder %s18, 1
    %p104 = scmp.ne.s32.totalorder %s99, %s101
    %p105 = scmp.eq.s32.totalorder %s18, 0
    %p106 = por %p104, %p105
    %p107 = scmp.ne.s32.totalorder %s99, %s101
    %p108 = scmp.eq.s32.totalorder %s23, 1
    %p109 = por %p107, %p108
    %p110 = scmp.ne.s32.totalorder %s101, %s102
    %p111 = scmp.eq.s32.totalorder %s23, 0
    %p112 = por %p110, %p111
    %p113 = scmp.ne.s32.totalorder %s101, %s102
    %p114 = scmp.eq.s32.totalorder %s24, 1
    %p115 = por %p113, %p114
    %p117 = scmp.ne.s32.totalorder %s102, %s116
    %p118 = scmp.eq.s32.totalorder %s24, 0
    %p119 = por %p117, %p118
    %s121 = sadd.s32 %s120, 1
    %p124 = scmp.eq.s32.totalorder %s18, 1
    %p125 = scmp.ne.s32.totalorder %s120, %s122
    %p126 = scmp.eq.s32.totalorder %s18, 0
    %p127 = por %p125, %p126
    %p128 = scmp.ne.s32.totalorder %s120, %s122
    %p129 = scmp.eq.s32.totalorder %s23, 1
    %p130 = por %p128, %p129
    %p131 = scmp.ne.s32.totalorder %s122, %s123
    %p132 = scmp.eq.s32.totalorder %s23, 0
    %p133 = por %p131, %p132
    %p134 = scmp.ne.s32.totalorder %s122, %s123
    %p135 = scmp.eq.s32.totalorder %s24, 1
    %p136 = por %p134, %p135
    %p138 = scmp.ne.s32.totalorder %s123, %s137
    %p139 = scmp.eq.s32.totalorder %s24, 0
    %p140 = por %p138, %p139
    %s142 = sadd.s32 %s141, 1
    %p145 = scmp.eq.s32.totalorder %s18, 1
    %p146 = scmp.ne.s32.totalorder %s141, %s143
    %p147 = scmp.eq.s32.totalorder %s18, 0
    %p148 = por %p146, %p147
    %p149 = scmp.ne.s32.totalorder %s141, %s143
    %p150 = scmp.eq.s32.totalorder %s23, 1
    %p151 = por %p149, %p150
    %p152 = scmp.ne.s32.totalorder %s143, %s144
    %p153 = scmp.eq.s32.totalorder %s23, 0
    %p154 = por %p152, %p153
    %p155 = scmp.ne.s32.totalorder %s143, %s144
    %p156 = scmp.eq.s32.totalorder %s24, 1
    %p157 = por %p155, %p156
    %p159 = scmp.ne.s32.totalorder %s144, %s158
    %p160 = scmp.eq.s32.totalorder %s24, 0
    %p161 = por %p159, %p160
    %s163 = sadd.s32 %s162, 1
    %p166 = scmp.eq.s32.totalorder %s18, 1
    %p167 = scmp.ne.s32.totalorder %s162, %s164
    %p168 = scmp.eq.s32.totalorder %s18, 0
    %p169 = por %p167, %p168
    %p170 = scmp.ne.s32.totalorder %s162, %s164
    %p171 = scmp.eq.s32.totalorder %s23, 1
    %p172 = por %p170, %p171
    %p173 = scmp.ne.s32.totalorder %s164, %s165
    %p174 = scmp.eq.s32.totalorder %s23, 0
    %p175 = por %p173, %p174
    %p176 = scmp.ne.s32.totalorder %s164, %s165
    %p177 = scmp.eq.s32.totalorder %s24, 1
    %p178 = por %p176, %p177
    %p180 = scmp.ne.s32.totalorder %s165, %s179
    %p181 = scmp.eq.s32.totalorder %s24, 0
    %p182 = por %p180, %p181
    %s184 = sadd.s32 %s183, 1
    %p187 = scmp.eq.s32.totalorder %s18, 1
    %p188 = scmp.ne.s32.totalorder %s183, %s185
    %p189 = scmp.eq.s32.totalorder %s18, 0
    %p190 = por %p188, %p189
    %p191 = scmp.ne.s32.totalorder %s183, %s185
    %p192 = scmp.eq.s32.totalorder %s23, 1
    %p193 = por %p191, %p192
    %p194 = scmp.ne.s32.totalorder %s185, %s186
    %p195 = scmp.eq.s32.totalorder %s23, 0
    %p196 = por %p194, %p195
    %p197 = scmp.ne.s32.totalorder %s185, %s186
    %p198 = scmp.eq.s32.totalorder %s24, 1
    %p199 = por %p197, %p198
    %p201 = scmp.ne.s32.totalorder %s186, %s200
    %p202 = scmp.eq.s32.totalorder %s24, 0
    %p203 = por %p201, %p202
    %s205 = sadd.s32 %s204, 1
    %p208 = scmp.eq.s32.totalorder %s18, 1
    %p209 = scmp.ne.s32.totalorder %s204, %s206
    %p210 = scmp.eq.s32.totalorder %s18, 0
    %p211 = por %p209, %p210
    %p212 = scmp.ne.s32.totalorder %s204, %s206
    %p213 = scmp.eq.s32.totalorder %s23, 1
    %p214 = por %p212, %p213
    %p215 = scmp.ne.s32.totalorder %s206, %s207
    %p216 = scmp.eq.s32.totalorder %s23, 0
    %p217 = por %p215, %p216
    %p218 = scmp.ne.s32.totalorder %s206, %s207
    %p219 = scmp.eq.s32.totalorder %s24, 1
    %p220 = por %p218, %p219
    %p222 = scmp.ne.s32.totalorder %s207, %s221
    %p223 = scmp.eq.s32.totalorder %s24, 0
    %p224 = por %p222, %p223
    %s226 = sadd.s32 %s225, 1
    %p229 = scmp.eq.s32.totalorder %s18, 1
    %p230 = scmp.ne.s32.totalorder %s225, %s227
    %p231 = scmp.eq.s32.totalorder %s18, 0
    %p232 = por %p230, %p231
    %p233 = scmp.ne.s32.totalorder %s225, %s227
    %p234 = scmp.eq.s32.totalorder %s23, 1
    %p235 = por %p233, %p234
    %p236 = scmp.ne.s32.totalorder %s227, %s228
    %p237 = scmp.eq.s32.totalorder %s23, 0
    %p238 = por %p236, %p237
    %p239 = scmp.ne.s32.totalorder %s227, %s228
    %p240 = scmp.eq.s32.totalorder %s24, 1
    %p241 = por %p239, %p240
    %p243 = scmp.ne.s32.totalorder %s228, %s242
    %p244 = scmp.eq.s32.totalorder %s24, 0
    %p245 = por %p243, %p244
    %s246 = ssub.s32 %s18, %s25
    %p247 = scmp.eq.s32.totalorder %s246, 0
    %s249 = sadd.s32 %s248, 1
    %s250 = scalar_select %p247, %s248, %s249
    %p253 = pneg %p247
    %p254 = scmp.eq.s32.totalorder %s18, 1
    %p255 = por %p253, %p254
    %p256 = scmp.ne.s32.totalorder %s248, %s251
    %p257 = scmp.eq.s32.totalorder %s18, 0
    %p258 = por %p256, %p257
    %p259 = scmp.ne.s32.totalorder %s248, %s251
    %p260 = scmp.eq.s32.totalorder %s23, 1
    %p261 = por %p259, %p260
    %p262 = scmp.ne.s32.totalorder %s251, %s252
    %p263 = scmp.eq.s32.totalorder %s23, 0
    %p264 = por %p262, %p263
    %p265 = scmp.ne.s32.totalorder %s251, %s252
    %p266 = scmp.eq.s32.totalorder %s24, 1
    %p267 = por %p265, %p266
    %p269 = scmp.ne.s32.totalorder %s252, %s268
    %p270 = scmp.eq.s32.totalorder %s24, 0
    %p271 = por %p269, %p270
    %p272 = scmp.le.s32.totalorder 1, %s18
    %p273 = scmp.lt.s32.totalorder %s18, 3
    %p274 = pnand %p272, %p273
    %p275 = pneg %p274
    // Predicated region
    $region9: #{sam_pallas.1} parent=5 // pred_check
      _
    $region10: #{sam_pallas.1} parent=5 // pred_check_branch
      %277 = sbr.rel (%p274) target = $region12
    $region11: #{sam_pallas.1} parent=5 // pred_region
      %s278 = ssub.s32 %s18, 1
      // Predicated region
      $region13: #{sam_pallas.1} parent=11 // pred_check
        %p279 = pneg %p39
      $region14: #{sam_pallas.1} parent=11 // pred_check_branch
        %281 = sbr.rel (%p279) target = $region16
      $region15: #{sam_pallas.1} parent=11 // pred_region
        _
      $region16: #{sam_pallas.1} parent=11 // pred_fallthru
        _
      // Predicated region
      $region17: #{sam_pallas.1} parent=11 // pred_check
        %p282 = pneg %p112
      $region18: #{sam_pallas.1} parent=11 // pred_check_branch
        %284 = sbr.rel (%p282) target = $region20
      $region19: #{sam_pallas.1} parent=11 // pred_region
        _
      $region20: #{sam_pallas.1} parent=11 // pred_fallthru
        _
      // Predicated region
      $region21: #{sam_pallas.1} parent=11 // pred_check
        %p285 = pneg %p133
      $region22: #{sam_pallas.1} parent=11 // pred_check_branch
        %287 = sbr.rel (%p285) target = $region24
      $region23: #{sam_pallas.1} parent=11 // pred_region
        _
      $region24: #{sam_pallas.1} parent=11 // pred_fallthru
        _
      // Predicated region
      $region25: #{sam_pallas.1} parent=11 // pred_check
        %p288 = pneg %p154
      $region26: #{sam_pallas.1} parent=11 // pred_check_branch
        %290 = sbr.rel (%p288) target = $region28
      $region27: #{sam_pallas.1} parent=11 // pred_region
        _
      $region28: #{sam_pallas.1} parent=11 // pred_fallthru
        _
      // Predicated region
      $region29: #{sam_pallas.1} parent=11 // pred_check
        %p291 = pneg %p175
      $region30: #{sam_pallas.1} parent=11 // pred_check_branch
        %293 = sbr.rel (%p291) target = $region32
      $region31: #{sam_pallas.1} parent=11 // pred_region
        _
      $region32: #{sam_pallas.1} parent=11 // pred_fallthru
        _
      // Predicated region
      $region33: #{sam_pallas.1} parent=11 // pred_check
        %p294 = pneg %p196
      $region34: #{sam_pallas.1} parent=11 // pred_check_branch
        %296 = sbr.rel (%p294) target = $region36
      $region35: #{sam_pallas.1} parent=11 // pred_region
        _
      $region36: #{sam_pallas.1} parent=11 // pred_fallthru
        _
      // Predicated region
      $region37: #{sam_pallas.1} parent=11 // pred_check
        %p297 = pneg %p217
      $region38: #{sam_pallas.1} parent=11 // pred_check_branch
        %299 = sbr.rel (%p297) target = $region40
      $region39: #{sam_pallas.1} parent=11 // pred_region
        _
      $region40: #{sam_pallas.1} parent=11 // pred_fallthru
        _
      // Predicated region
      $region41: #{sam_pallas.1} parent=11 // pred_check
        %p300 = pneg %p238
      $region42: #{sam_pallas.1} parent=11 // pred_check_branch
        %302 = sbr.rel (%p300) target = $region44
      $region43: #{sam_pallas.1} parent=11 // pred_region
        _
      $region44: #{sam_pallas.1} parent=11 // pred_fallthru
        _
    $region12: #{sam_pallas.1} parent=5 // pred_fallthru
      _
    %p303 = scmp.lt.s32.totalorder %s18, 2
    // Predicated region
    $region45: #{sam_pallas.1} parent=5 // pred_check
      %p304 = pneg %p303
    $region46: #{sam_pallas.1} parent=5 // pred_check_branch
      %306 = sbr.rel (%p304) target = $region48
    $region47: #{sam_pallas.1} parent=5 // pred_region
      // Predicated region
      $region49: #{sam_pallas.1} parent=47 // pred_check
        %p307 = pneg %p59
      $region50: #{sam_pallas.1} parent=47 // pred_check_branch
        %309 = sbr.rel (%p307) target = $region52
      $region51: #{sam_pallas.1} parent=47 // pred_region
        %p310 = scmp.lt.s32.totalorder %s18, 1
        %s311 = scalar_select %p310, %s18, 1
        %s312 = smul.addr %s311, 32
        %s313 = smul.addr %s312, 8
        %s314 = scalar_lea.vmem %s1, %s313
      $region52: #{sam_pallas.1} parent=47 // pred_fallthru
        _
      // Predicated region
      $region53: #{sam_pallas.1} parent=47 // pred_check
        %p315 = pneg %p85
      $region54: #{sam_pallas.1} parent=47 // pred_check_branch
        %317 = sbr.rel (%p315) target = $region56
      $region55: #{sam_pallas.1} parent=47 // pred_region
        %p318 = scmp.lt.s32.totalorder %s18, 1
        %s319 = scalar_select %p318, %s18, 1
        %s320 = smul.addr %s319, 32
        %s321 = smul.addr %s320, 8
        %s322 = scalar_lea.vmem %s2, %s321
      $region56: #{sam_pallas.1} parent=47 // pred_fallthru
        _
    $region48: #{sam_pallas.1} parent=5 // pred_fallthru
      _
    %p323 = scmp.le.s32.totalorder 1, %s18
    %p324 = scmp.lt.s32.totalorder %s18, 3
    %p325 = pnand %p323, %p324
    %p326 = pneg %p325
    // Predicated region
    $region57: #{sam_pallas.1} parent=5 // pred_check
      _
    $region58: #{sam_pallas.1} parent=5 // pred_check_branch
      %328 = sbr.rel (%p325) target = $region60
    $region59: #{sam_pallas.1} parent=5 // pred_region
      %s329 = ssub.s32 %s18, 1
      %p330 = pneg %p39
      %p331 = pneg %p36
      %p332 = scmp.lt.s32.totalorder %s23, 1
      %s333 = scalar_select %p332, %s23, 1
      %s334 = smul.addr %s333, 32
      %s335 = smul.addr %s334, 8
      %s336 = scalar_lea.vmem %s1, %s335
      %p337 = pneg %p65
      %p338 = pneg %p62
      %p339 = scmp.lt.s32.totalorder %s23, 1
      %s340 = scalar_select %p339, %s23, 1
      %s341 = smul.addr %s340, 32
      %s342 = smul.addr %s341, 8
      %s343 = scalar_lea.vmem %s2, %s342
      %p344 = pneg %p91
      %p345 = pneg %p88
      %p346 = pneg %p112
      %p347 = pneg %p109
      %p348 = pneg %p133
      %p349 = pneg %p130
      %p350 = pneg %p154
      %p351 = pneg %p151
      %p352 = pneg %p175
      %p353 = pneg %p172
      %p354 = pneg %p196
      %p355 = pneg %p193
      %p356 = pneg %p217
      %p357 = pneg %p214
      %p358 = pneg %p238
      %p359 = pneg %p235
      %p360 = pneg %p264
      %p361 = pneg %p261
      %p362 = scmp.lt.s32.totalorder %s23, 1
      %s363 = scalar_select %p362, %s23, 1
      %s364 = smul.addr %s363, 32
      %s365 = smul.addr %s364, 8
      %s366 = scalar_lea.vmem %s10, %s365
      %p367 = scmp.lt.s32.totalorder %s23, 1
      %s368 = scalar_select %p367, %s23, 1
      %s369 = smul.addr %s368, 32
      %s370 = smul.addr %s369, 8
      %s371 = scalar_lea.vmem %s1, %s370
      %p372 = scmp.lt.s32.totalorder %s23, 1
      %s373 = scalar_select %p372, %s23, 1
      %s374 = smul.addr %s373, 32
      %s375 = smul.addr %s374, 8
      %s376 = scalar_lea.vmem %s2, %s375
      %p377 = scmp.lt.s32.totalorder %s23, 1
      %s378 = scalar_select %p377, %s23, 1
      %s379 = smul.addr %s378, 32
      %s380 = smul.addr %s379, 8
      %s381 = scalar_lea.vmem %s10, %s380
      %v382 = vld [vmem:[%s371] sm:$0xff]
      %v383 = vld [vmem:[%s371 + $0x8] sm:$0xff]
      %v384 = vld [vmem:[%s371 + $0x10] sm:$0xff]
      %v385 = vld [vmem:[%s371 + $0x18] sm:$0xff]
      %v386 = vld [vmem:[%s371 + $0x20] sm:$0xff]
      %v387 = vld [vmem:[%s371 + $0x28] sm:$0xff]
      %v388 = vld [vmem:[%s371 + $0x30] sm:$0xff]
      %v389 = vld [vmem:[%s371 + $0x38] sm:$0xff]
      %v390 = vld [vmem:[%s371 + $0x40] sm:$0xff]
      %v391 = vld [vmem:[%s371 + $0x48] sm:$0xff]
      %v392 = vld [vmem:[%s371 + $0x50] sm:$0xff]
      %v393 = vld [vmem:[%s371 + $0x58] sm:$0xff]
      %v394 = vld [vmem:[%s371 + $0x60] sm:$0xff]
      %v395 = vld [vmem:[%s371 + $0x68] sm:$0xff]
      %v396 = vld [vmem:[%s371 + $0x70] sm:$0xff]
      %v397 = vld [vmem:[%s371 + $0x78] sm:$0xff]
      %v398 = vld [vmem:[%s371 + $0x80] sm:$0xff]
      %v399 = vld [vmem:[%s371 + $0x88] sm:$0xff]
      %v400 = vld [vmem:[%s371 + $0x90] sm:$0xff]
      %v401 = vld [vmem:[%s371 + $0x98] sm:$0xff]
      %v402 = vld [vmem:[%s371 + $0xa0] sm:$0xff]
      %v403 = vld [vmem:[%s371 + $0xa8] sm:$0xff]
      %v404 = vld [vmem:[%s371 + $0xb0] sm:$0xff]
      %v405 = vld [vmem:[%s371 + $0xb8] sm:$0xff]
      %v406 = vld [vmem:[%s371 + $0xc0] sm:$0xff]
      %v407 = vld [vmem:[%s371 + $0xc8] sm:$0xff]
      %v408 = vld [vmem:[%s371 + $0xd0] sm:$0xff]
      %v409 = vld [vmem:[%s371 + $0xd8] sm:$0xff]
      %v410 = vld [vmem:[%s371 + $0xe0] sm:$0xff]
      %v411 = vld [vmem:[%s371 + $0xe8] sm:$0xff]
      %v412 = vld [vmem:[%s371 + $0xf0] sm:$0xff]
      %v413 = vld [vmem:[%s371 + $0xf8] sm:$0xff]
      %v414 = vld [vmem:[%s376] sm:$0xff]
      %v415 = vld [vmem:[%s376 + $0x8] sm:$0xff]
      %v416 = vld [vmem:[%s376 + $0x10] sm:$0xff]
      %v417 = vld [vmem:[%s376 + $0x18] sm:$0xff]
      %v418 = vld [vmem:[%s376 + $0x20] sm:$0xff]
      %v419 = vld [vmem:[%s376 + $0x28] sm:$0xff]
      %v420 = vld [vmem:[%s376 + $0x30] sm:$0xff]
      %v421 = vld [vmem:[%s376 + $0x38] sm:$0xff]
      %v422 = vld [vmem:[%s376 + $0x40] sm:$0xff]
      %v423 = vld [vmem:[%s376 + $0x48] sm:$0xff]
      %v424 = vld [vmem:[%s376 + $0x50] sm:$0xff]
      %v425 = vld [vmem:[%s376 + $0x58] sm:$0xff]
      %v426 = vld [vmem:[%s376 + $0x60] sm:$0xff]
      %v427 = vld [vmem:[%s376 + $0x68] sm:$0xff]
      %v428 = vld [vmem:[%s376 + $0x70] sm:$0xff]
      %v429 = vld [vmem:[%s376 + $0x78] sm:$0xff]
      %v430 = vld [vmem:[%s376 + $0x80] sm:$0xff]
      %v431 = vld [vmem:[%s376 + $0x88] sm:$0xff]
      %v432 = vld [vmem:[%s376 + $0x90] sm:$0xff]
      %v433 = vld [vmem:[%s376 + $0x98] sm:$0xff]
      %v434 = vld [vmem:[%s376 + $0xa0] sm:$0xff]
      %v435 = vld [vmem:[%s376 + $0xa8] sm:$0xff]
      %v436 = vld [vmem:[%s376 + $0xb0] sm:$0xff]
      %v437 = vld [vmem:[%s376 + $0xb8] sm:$0xff]
      %v438 = vld [vmem:[%s376 + $0xc0] sm:$0xff]
      %v439 = vld [vmem:[%s376 + $0xc8] sm:$0xff]
      %v440 = vld [vmem:[%s376 + $0xd0] sm:$0xff]
      %v441 = vld [vmem:[%s376 + $0xd8] sm:$0xff]
      %v442 = vld [vmem:[%s376 + $0xe0] sm:$0xff]
      %v443 = vld [vmem:[%s376 + $0xe8] sm:$0xff]
      %v444 = vld [vmem:[%s376 + $0xf0] sm:$0xff]
      %v445 = vld [vmem:[%s376 + $0xf8] sm:$0xff]
      %v446 = vld [vmem:[%s0] sm:$0xff]
      %v447 = vld [vmem:[%s0 + $0x8] sm:$0xff]
      %v448 = vld [vmem:[%s0 + $0x10] sm:$0xff]
      %v449 = vld [vmem:[%s0 + $0x18] sm:$0xff]
      %v450 = vld [vmem:[%s0 + $0x20] sm:$0xff]
      %v451 = vld [vmem:[%s0 + $0x28] sm:$0xff]
      %v452 = vld [vmem:[%s0 + $0x30] sm:$0xff]
      %v453 = vld [vmem:[%s0 + $0x38] sm:$0xff]
      %v454 = vld [vmem:[%s0 + $0x40] sm:$0xff]
      %v455 = vld [vmem:[%s0 + $0x48] sm:$0xff]
      %v456 = vld [vmem:[%s0 + $0x50] sm:$0xff]
      %v457 = vld [vmem:[%s0 + $0x58] sm:$0xff]
      %v458 = vld [vmem:[%s0 + $0x60] sm:$0xff]
      %v459 = vld [vmem:[%s0 + $0x68] sm:$0xff]
      %v460 = vld [vmem:[%s0 + $0x70] sm:$0xff]
      %v461 = vld [vmem:[%s0 + $0x78] sm:$0xff]
      %v462 = vld [vmem:[%s0 + $0x80] sm:$0xff]
      %v463 = vld [vmem:[%s0 + $0x88] sm:$0xff]
      %v464 = vld [vmem:[%s0 + $0x90] sm:$0xff]
      %v465 = vld [vmem:[%s0 + $0x98] sm:$0xff]
      %v466 = vld [vmem:[%s0 + $0xa0] sm:$0xff]
      %v467 = vld [vmem:[%s0 + $0xa8] sm:$0xff]
      %v468 = vld [vmem:[%s0 + $0xb0] sm:$0xff]
      %v469 = vld [vmem:[%s0 + $0xb8] sm:$0xff]
      %v470 = vld [vmem:[%s0 + $0xc0] sm:$0xff]
      %v471 = vld [vmem:[%s0 + $0xc8] sm:$0xff]
      %v472 = vld [vmem:[%s0 + $0xd0] sm:$0xff]
      %v473 = vld [vmem:[%s0 + $0xd8] sm:$0xff]
      %v474 = vld [vmem:[%s0 + $0xe0] sm:$0xff]
      %v475 = vld [vmem:[%s0 + $0xe8] sm:$0xff]
      %v476 = vld [vmem:[%s0 + $0xf0] sm:$0xff]
      %v477 = vld [vmem:[%s0 + $0xf8] sm:$0xff]
      %v478 = vld [vmem:[%s3] sm:$0xff]
      %v479 = vld [vmem:[%s3 + $0x8] sm:$0xff]
      %v480 = vld [vmem:[%s3 + $0x10] sm:$0xff]
      %v481 = vld [vmem:[%s3 + $0x18] sm:$0xff]
      %v482 = vld [vmem:[%s4] sm:$0x1]
      %v484 = vlaneseq
      %v485 = vshrl.u32 %v484, 7
      %v486 = vsub.s32 0, %v485
      %v487 = vrot.slane %v482, %v486
      %vm489 = vcmask 261120
      %v491 = vsel %vm489, %v382, 0
      %v494 = vsel %vm489, %v383, 0
      %v497 = vsel %vm489, %v384, 0
      %v500 = vsel %vm489, %v385, 0
      %v503 = vsel %vm489, %v386, 0
      %v506 = vsel %vm489, %v387, 0
      %v509 = vsel %vm489, %v388, 0
      %v512 = vsel %vm489, %v389, 0
      %v515 = vsel %vm489, %v390, 0
      %v518 = vsel %vm489, %v391, 0
      %v521 = vsel %vm489, %v392, 0
      %v524 = vsel %vm489, %v393, 0
      %v527 = vsel %vm489, %v394, 0
      %v530 = vsel %vm489, %v395, 0
      %v533 = vsel %vm489, %v396, 0
      %v536 = vsel %vm489, %v397, 0
      %v539 = vsel %vm489, %v398, 0
      %v542 = vsel %vm489, %v399, 0
      %v545 = vsel %vm489, %v400, 0
      %v548 = vsel %vm489, %v401, 0
      %v551 = vsel %vm489, %v402, 0
      %v554 = vsel %vm489, %v403, 0
      %v557 = vsel %vm489, %v404, 0
      %v560 = vsel %vm489, %v405, 0
      %v563 = vsel %vm489, %v406, 0
      %v566 = vsel %vm489, %v407, 0
      %v569 = vsel %vm489, %v408, 0
      %v572 = vsel %vm489, %v409, 0
      %v575 = vsel %vm489, %v410, 0
      %v578 = vsel %vm489, %v411, 0
      %v581 = vsel %vm489, %v412, 0
      %v584 = vsel %vm489, %v413, 0
      %v587 = vsel %vm489, %v414, 0
      %v590 = vsel %vm489, %v415, 0
      %v593 = vsel %vm489, %v416, 0
      %v596 = vsel %vm489, %v417, 0
      %v599 = vsel %vm489, %v418, 0
      %v602 = vsel %vm489, %v419, 0
      %v605 = vsel %vm489, %v420, 0
      %v608 = vsel %vm489, %v421, 0
      %v611 = vsel %vm489, %v422, 0
      %v614 = vsel %vm489, %v423, 0
      %v617 = vsel %vm489, %v424, 0
      %v620 = vsel %vm489, %v425, 0
      %v623 = vsel %vm489, %v426, 0
      %v626 = vsel %vm489, %v427, 0
      %v629 = vsel %vm489, %v428, 0
      %v632 = vsel %vm489, %v429, 0
      %v635 = vsel %vm489, %v430, 0
      %v638 = vsel %vm489, %v431, 0
      %v641 = vsel %vm489, %v432, 0
      %v644 = vsel %vm489, %v433, 0
      %v647 = vsel %vm489, %v434, 0
      %v650 = vsel %vm489, %v435, 0
      %v653 = vsel %vm489, %v436, 0
      %v656 = vsel %vm489, %v437, 0
      %v659 = vsel %vm489, %v438, 0
      %v662 = vsel %vm489, %v439, 0
      %v665 = vsel %vm489, %v440, 0
      %v668 = vsel %vm489, %v441, 0
      %v671 = vsel %vm489, %v442, 0
      %v674 = vsel %vm489, %v443, 0
      %v677 = vsel %vm489, %v444, 0
      %v680 = vsel %vm489, %v445, 0
      %682 = vmatprep.subr.mxu0 0.0
      %683 = vmatpush1.msra.mxu0 0.0
      %684 = vmatprep.subr.mxu0 0.0
      %685 = vmatpush1.msra.mxu0 0.0
      %686 = vmatprep.subr.mxu0 0.0
      %687 = vmatpush1.msra.mxu0 0.0
      %688 = vmatprep.subr.mxu0 0.0
      %689 = vmatpush1.msra.mxu0 0.0
      %690 = vmatprep.subr.mxu0 0.0
      %691 = vmatpush1.msra.mxu0 0.0
      %692 = vmatprep.subr.mxu0 0.0
      %693 = vmatpush1.msra.mxu0 0.0
      %694 = vmatprep.subr.mxu0 0.0
      %695 = vmatpush1.msra.mxu0 0.0
      %696 = vmatprep.subr.mxu0 0.0
      %697 = vmatpush1.msra.mxu0 0.0
      %698 = vmatprep.subr.mxu0 0.0
      %699 = vmatpush1.msra.mxu0 0.0
      %700 = vmatprep.subr.mxu0 0.0
      %701 = vmatpush1.msra.mxu0 0.0
      %702 = vmatprep.subr.mxu0 0.0
      %703 = vmatpush1.msra.mxu0 0.0
      %704 = vmatprep.subr.mxu0 0.0
      %705 = vmatpush1.msra.mxu0 0.0
      %706 = vmatprep.subr.mxu0 0.0
      %707 = vmatpush1.msra.mxu0 %v481
      %708 = vmatprep.subr.mxu0 0.0
      %709 = vmatpush1.msra.mxu0 %v480
      %710 = vmatprep.subr.mxu0 0.0
      %711 = vmatpush1.msra.mxu0 %v479
      %712 = vmatprep.subr.mxu0 0.0
      %713 = vmatpush1.msra.mxu0 %v478
      %714 = vmatprep.subr.mxu0 0.0
      %715 = vmatpush2.msra.mxu0 0.0
      %716 = vmatprep.subr.mxu0 0.0
      %717 = vmatpush2.msra.mxu0 0.0
      %718 = vmatprep.subr.mxu0 0.0
      %719 = vmatpush2.msra.mxu0 0.0
      %720 = vmatprep.subr.mxu0 0.0
      %721 = vmatpush2.msra.mxu0 0.0
      %722 = vmatprep.subr.mxu0 0.0
      %723 = vmatpush2.msra.mxu0 0.0
      %724 = vmatprep.subr.mxu0 0.0
      %725 = vmatpush2.msra.mxu0 0.0
      %726 = vmatprep.subr.mxu0 0.0
      %727 = vmatpush2.msra.mxu0 0.0
      %728 = vmatprep.subr.mxu0 0.0
      %729 = vmatpush2.msra.mxu0 0.0
      %730 = vmatprep.subr.mxu0 0.0
      %731 = vmatpush2.msra.mxu0 0.0
      %732 = vmatprep.subr.mxu0 0.0
      %733 = vmatpush2.msra.mxu0 0.0
      %734 = vmatprep.subr.mxu0 0.0
      %735 = vmatpush2.msra.mxu0 0.0
      %736 = vmatprep.subr.mxu0 0.0
      %737 = vmatpush2.msra.mxu0 0.0
      %738 = vmatprep.subr.mxu0 0.0
      %739 = vmatpush2.msra.mxu0 0.0
      %740 = vmatprep.subr.mxu0 0.0
      %741 = vmatpush2.msra.mxu0 0.0
      %742 = vmatprep.subr.mxu0 0.0
      %743 = vmatpush2.msra.mxu0 0.0
      %744 = vmatprep.subr.mxu0 0.0
      %745 = vmatpush2.msra.mxu0 0.0
      %746 = vmatprep.mubr.f32.mxu0 0.0
      %747 = vmatmul.mubr.f32.gmra.mxu0 %v491
      %v748 = vpop.f32.mrf.mxu0
      %v749 = vadd.f32 %v487, %v748
      %v750 = vpop.f32.mrf.mxu0
      %751 = vmatprep.mubr.f32.mxu0 0.0
      %752 = vmatmul.mubr.f32.gmra.mxu0 %v494
      %v753 = vpop.f32.mrf.mxu0
      %v754 = vadd.f32 %v487, %v753
      %v755 = vpop.f32.mrf.mxu0
      %756 = vmatprep.mubr.f32.mxu0 0.0
      %757 = vmatmul.mubr.f32.gmra.mxu0 %v497
      %v758 = vpop.f32.mrf.mxu0
      %v759 = vadd.f32 %v487, %v758
      %v760 = vpop.f32.mrf.mxu0
      %761 = vmatprep.mubr.f32.mxu0 0.0
      %762 = vmatmul.mubr.f32.gmra.mxu0 %v500
      %v763 = vpop.f32.mrf.mxu0
      %v764 = vadd.f32 %v487, %v763
      %v765 = vpop.f32.mrf.mxu0
      %766 = vmatprep.mubr.f32.mxu0 0.0
      %767 = vmatmul.mubr.f32.gmra.mxu0 %v503
      %v768 = vpop.f32.mrf.mxu0
      %v769 = vadd.f32 %v487, %v768
      %v770 = vpop.f32.mrf.mxu0
      %771 = vmatprep.mubr.f32.mxu0 0.0
      %772 = vmatmul.mubr.f32.gmra.mxu0 %v506
      %v773 = vpop.f32.mrf.mxu0
      %v774 = vadd.f32 %v487, %v773
      %v775 = vpop.f32.mrf.mxu0
      %776 = vmatprep.mubr.f32.mxu0 0.0
      %777 = vmatmul.mubr.f32.gmra.mxu0 %v509
      %v778 = vpop.f32.mrf.mxu0
      %v779 = vadd.f32 %v487, %v778
      %v780 = vpop.f32.mrf.mxu0
      %781 = vmatprep.mubr.f32.mxu0 0.0
      %782 = vmatmul.mubr.f32.gmra.mxu0 %v512
      %v783 = vpop.f32.mrf.mxu0
      %v784 = vadd.f32 %v487, %v783
      %v785 = vpop.f32.mrf.mxu0
      %786 = vmatprep.mubr.f32.mxu0 0.0
      %787 = vmatmul.mubr.f32.gmra.mxu0 %v515
      %v788 = vpop.f32.mrf.mxu0
      %v789 = vadd.f32 %v487, %v788
      %v790 = vpop.f32.mrf.mxu0
      %791 = vmatprep.mubr.f32.mxu0 0.0
      %792 = vmatmul.mubr.f32.gmra.mxu0 %v518
      %v793 = vpop.f32.mrf.mxu0
      %v794 = vadd.f32 %v487, %v793
      %v795 = vpop.f32.mrf.mxu0
      %796 = vmatprep.mubr.f32.mxu0 0.0
      %797 = vmatmul.mubr.f32.gmra.mxu0 %v521
      %v798 = vpop.f32.mrf.mxu0
      %v799 = vadd.f32 %v487, %v798
      %v800 = vpop.f32.mrf.mxu0
      %801 = vmatprep.mubr.f32.mxu0 0.0
      %802 = vmatmul.mubr.f32.gmra.mxu0 %v524
      %v803 = vpop.f32.mrf.mxu0
      %v804 = vadd.f32 %v487, %v803
      %v805 = vpop.f32.mrf.mxu0
      %806 = vmatprep.mubr.f32.mxu0 0.0
      %807 = vmatmul.mubr.f32.gmra.mxu0 %v527
      %v808 = vpop.f32.mrf.mxu0
      %v809 = vadd.f32 %v487, %v808
      %v810 = vpop.f32.mrf.mxu0
      %811 = vmatprep.mubr.f32.mxu0 0.0
      %812 = vmatmul.mubr.f32.gmra.mxu0 %v530
      %v813 = vpop.f32.mrf.mxu0
      %v814 = vadd.f32 %v487, %v813
      %v815 = vpop.f32.mrf.mxu0
      %816 = vmatprep.mubr.f32.mxu0 0.0
      %817 = vmatmul.mubr.f32.gmra.mxu0 %v533
      %v818 = vpop.f32.mrf.mxu0
      %v819 = vadd.f32 %v487, %v818
      %v820 = vpop.f32.mrf.mxu0
      %821 = vmatprep.mubr.f32.mxu0 0.0
      %822 = vmatmul.mubr.f32.gmra.mxu0 %v536
      %v823 = vpop.f32.mrf.mxu0
      %v824 = vadd.f32 %v487, %v823
      %v825 = vpop.f32.mrf.mxu0
      %826 = vmatprep.mubr.f32.mxu0 0.0
      %827 = vmatmul.mubr.f32.gmra.mxu0 %v539
      %v828 = vpop.f32.mrf.mxu0
      %v829 = vadd.f32 %v487, %v828
      %v830 = vpop.f32.mrf.mxu0
      %831 = vmatprep.mubr.f32.mxu0 0.0
      %832 = vmatmul.mubr.f32.gmra.mxu0 %v542
      %v833 = vpop.f32.mrf.mxu0
      %v834 = vadd.f32 %v487, %v833
      %v835 = vpop.f32.mrf.mxu0
      %836 = vmatprep.mubr.f32.mxu0 0.0
      %837 = vmatmul.mubr.f32.gmra.mxu0 %v545
      %v838 = vpop.f32.mrf.mxu0
      %v839 = vadd.f32 %v487, %v838
      %v840 = vpop.f32.mrf.mxu0
      %841 = vmatprep.mubr.f32.mxu0 0.0
      %842 = vmatmul.mubr.f32.gmra.mxu0 %v548
      %v843 = vpop.f32.mrf.mxu0
      %v844 = vadd.f32 %v487, %v843
      %v845 = vpop.f32.mrf.mxu0
      %846 = vmatprep.mubr.f32.mxu0 0.0
      %847 = vmatmul.mubr.f32.gmra.mxu0 %v551
      %v848 = vpop.f32.mrf.mxu0
      %v849 = vadd.f32 %v487, %v848
      %v850 = vpop.f32.mrf.mxu0
      %851 = vmatprep.mubr.f32.mxu0 0.0
      %852 = vmatmul.mubr.f32.gmra.mxu0 %v554
      %v853 = vpop.f32.mrf.mxu0
      %v854 = vadd.f32 %v487, %v853
      %v855 = vpop.f32.mrf.mxu0
      %856 = vmatprep.mubr.f32.mxu0 0.0
      %857 = vmatmul.mubr.f32.gmra.mxu0 %v557
      %v858 = vpop.f32.mrf.mxu0
      %v859 = vadd.f32 %v487, %v858
      %v860 = vpop.f32.mrf.mxu0
      %861 = vmatprep.mubr.f32.mxu0 0.0
      %862 = vmatmul.mubr.f32.gmra.mxu0 %v560
      %v863 = vpop.f32.mrf.mxu0
      %v864 = vadd.f32 %v487, %v863
      %v865 = vpop.f32.mrf.mxu0
      %866 = vmatprep.mubr.f32.mxu0 0.0
      %867 = vmatmul.mubr.f32.gmra.mxu0 %v563
      %v868 = vpop.f32.mrf.mxu0
      %v869 = vadd.f32 %v487, %v868
      %v870 = vpop.f32.mrf.mxu0
      %871 = vmatprep.mubr.f32.mxu0 0.0
      %872 = vmatmul.mubr.f32.gmra.mxu0 %v566
      %v873 = vpop.f32.mrf.mxu0
      %v874 = vadd.f32 %v487, %v873
      %v875 = vpop.f32.mrf.mxu0
      %876 = vmatprep.mubr.f32.mxu0 0.0
      %877 = vmatmul.mubr.f32.gmra.mxu0 %v569
      %v878 = vpop.f32.mrf.mxu0
      %v879 = vadd.f32 %v487, %v878
      %v880 = vpop.f32.mrf.mxu0
      %881 = vmatprep.mubr.f32.mxu0 0.0
      %882 = vmatmul.mubr.f32.gmra.mxu0 %v572
      %v883 = vpop.f32.mrf.mxu0
      %v884 = vadd.f32 %v487, %v883
      %v885 = vpop.f32.mrf.mxu0
      %886 = vmatprep.mubr.f32.mxu0 0.0
      %887 = vmatmul.mubr.f32.gmra.mxu0 %v575
      %v888 = vpop.f32.mrf.mxu0
      %v889 = vadd.f32 %v487, %v888
      %v890 = vpop.f32.mrf.mxu0
      %891 = vmatprep.mubr.f32.mxu0 0.0
      %892 = vmatmul.mubr.f32.gmra.mxu0 %v578
      %v893 = vpop.f32.mrf.mxu0
      %v894 = vadd.f32 %v487, %v893
      %v895 = vpop.f32.mrf.mxu0
      %896 = vmatprep.mubr.f32.mxu0 0.0
      %897 = vmatmul.mubr.f32.gmra.mxu0 %v581
      %v898 = vpop.f32.mrf.mxu0
      %v899 = vadd.f32 %v487, %v898
      %v900 = vpop.f32.mrf.mxu0
      %901 = vmatprep.mubr.f32.mxu0 0.0
      %902 = vmatmul.mubr.f32.gmra.mxu0 %v584
      %v903 = vpop.f32.mrf.mxu0
      %v904 = vadd.f32 %v487, %v903
      %v905 = vpop.f32.mrf.mxu0
      %906 = vmatprep.mubr.f32.mxu0 0.0
      %907 = vmatmul.mubr.f32.gmra.mxu0 %v587
      %v908 = vpop.f32.mrf.mxu0
      %v909 = vadd.f32 %v487, %v908
      %v910 = vpop.f32.mrf.mxu0
      %911 = vmatprep.mubr.f32.mxu0 0.0
      %912 = vmatmul.mubr.f32.gmra.mxu0 %v590
      %v913 = vpop.f32.mrf.mxu0
      %v914 = vadd.f32 %v487, %v913
      %v915 = vpop.f32.mrf.mxu0
      %916 = vmatprep.mubr.f32.mxu0 0.0
      %917 = vmatmul.mubr.f32.gmra.mxu0 %v593
      %v918 = vpop.f32.mrf.mxu0
      %v919 = vadd.f32 %v487, %v918
      %v920 = vpop.f32.mrf.mxu0
      %921 = vmatprep.mubr.f32.mxu0 0.0
      %922 = vmatmul.mubr.f32.gmra.mxu0 %v596
      %v923 = vpop.f32.mrf.mxu0
      %v924 = vadd.f32 %v487, %v923
      %v925 = vpop.f32.mrf.mxu0
      %926 = vmatprep.mubr.f32.mxu0 0.0
      %927 = vmatmul.mubr.f32.gmra.mxu0 %v599
      %v928 = vpop.f32.mrf.mxu0
      %v929 = vadd.f32 %v487, %v928
      %v930 = vpop.f32.mrf.mxu0
      %931 = vmatprep.mubr.f32.mxu0 0.0
      %932 = vmatmul.mubr.f32.gmra.mxu0 %v602
      %v933 = vpop.f32.mrf.mxu0
      %v934 = vadd.f32 %v487, %v933
      %v935 = vpop.f32.mrf.mxu0
      %936 = vmatprep.mubr.f32.mxu0 0.0
      %937 = vmatmul.mubr.f32.gmra.mxu0 %v605
      %v938 = vpop.f32.mrf.mxu0
      %v939 = vadd.f32 %v487, %v938
      %v940 = vpop.f32.mrf.mxu0
      %941 = vmatprep.mubr.f32.mxu0 0.0
      %942 = vmatmul.mubr.f32.gmra.mxu0 %v608
      %v943 = vpop.f32.mrf.mxu0
      %v944 = vadd.f32 %v487, %v943
      %v945 = vpop.f32.mrf.mxu0
      %946 = vmatprep.mubr.f32.mxu0 0.0
      %947 = vmatmul.mubr.f32.gmra.mxu0 %v611
      %v948 = vpop.f32.mrf.mxu0
      %v949 = vadd.f32 %v487, %v948
      %v950 = vpop.f32.mrf.mxu0
      %951 = vmatprep.mubr.f32.mxu0 0.0
      %952 = vmatmul.mubr.f32.gmra.mxu0 %v614
      %v953 = vpop.f32.mrf.mxu0
      %v954 = vadd.f32 %v487, %v953
      %v955 = vpop.f32.mrf.mxu0
      %956 = vmatprep.mubr.f32.mxu0 0.0
      %957 = vmatmul.mubr.f32.gmra.mxu0 %v617
      %v958 = vpop.f32.mrf.mxu0
      %v959 = vadd.f32 %v487, %v958
      %v960 = vpop.f32.mrf.mxu0
      %961 = vmatprep.mubr.f32.mxu0 0.0
      %962 = vmatmul.mubr.f32.gmra.mxu0 %v620
      %v963 = vpop.f32.mrf.mxu0
      %v964 = vadd.f32 %v487, %v963
      %v965 = vpop.f32.mrf.mxu0
      %966 = vmatprep.mubr.f32.mxu0 0.0
      %967 = vmatmul.mubr.f32.gmra.mxu0 %v623
      %v968 = vpop.f32.mrf.mxu0
      %v969 = vadd.f32 %v487, %v968
      %v970 = vpop.f32.mrf.mxu0
      %971 = vmatprep.mubr.f32.mxu0 0.0
      %972 = vmatmul.mubr.f32.gmra.mxu0 %v626
      %v973 = vpop.f32.mrf.mxu0
      %v974 = vadd.f32 %v487, %v973
      %v975 = vpop.f32.mrf.mxu0
      %976 = vmatprep.mubr.f32.mxu0 0.0
      %977 = vmatmul.mubr.f32.gmra.mxu0 %v629
      %v978 = vpop.f32.mrf.mxu0
      %v979 = vadd.f32 %v487, %v978
      %v980 = vpop.f32.mrf.mxu0
      %981 = vmatprep.mubr.f32.mxu0 0.0
      %982 = vmatmul.mubr.f32.gmra.mxu0 %v632
      %v983 = vpop.f32.mrf.mxu0
      %v984 = vadd.f32 %v487, %v983
      %v985 = vpop.f32.mrf.mxu0
      %986 = vmatprep.mubr.f32.mxu0 0.0
      %987 = vmatmul.mubr.f32.gmra.mxu0 %v635
      %v988 = vpop.f32.mrf.mxu0
      %v989 = vadd.f32 %v487, %v988
      %v990 = vpop.f32.mrf.mxu0
      %991 = vmatprep.mubr.f32.mxu0 0.0
      %992 = vmatmul.mubr.f32.gmra.mxu0 %v638
      %v993 = vpop.f32.mrf.mxu0
      %v994 = vadd.f32 %v487, %v993
      %v995 = vpop.f32.mrf.mxu0
      %996 = vmatprep.mubr.f32.mxu0 0.0
      %997 = vmatmul.mubr.f32.gmra.mxu0 %v641
      %v998 = vpop.f32.mrf.mxu0
      %v999 = vadd.f32 %v487, %v998
      %v1000 = vpop.f32.mrf.mxu0
      %1001 = vmatprep.mubr.f32.mxu0 0.0
      %1002 = vmatmul.mubr.f32.gmra.mxu0 %v644
      %v1003 = vpop.f32.mrf.mxu0
      %v1004 = vadd.f32 %v487, %v1003
      %v1005 = vpop.f32.mrf.mxu0
      %1006 = vmatprep.mubr.f32.mxu0 0.0
      %1007 = vmatmul.mubr.f32.gmra.mxu0 %v647
      %v1008 = vpop.f32.mrf.mxu0
      %v1009 = vadd.f32 %v487, %v1008
      %v1010 = vpop.f32.mrf.mxu0
      %1011 = vmatprep.mubr.f32.mxu0 0.0
      %1012 = vmatmul.mubr.f32.gmra.mxu0 %v650
      %v1013 = vpop.f32.mrf.mxu0
      %v1014 = vadd.f32 %v487, %v1013
      %v1015 = vpop.f32.mrf.mxu0
      %1016 = vmatprep.mubr.f32.mxu0 0.0
      %1017 = vmatmul.mubr.f32.gmra.mxu0 %v653
      %v1018 = vpop.f32.mrf.mxu0
      %v1019 = vadd.f32 %v487, %v1018
      %v1020 = vpop.f32.mrf.mxu0
      %1021 = vmatprep.mubr.f32.mxu0 0.0
      %1022 = vmatmul.mubr.f32.gmra.mxu0 %v656
      %v1023 = vpop.f32.mrf.mxu0
      %v1024 = vadd.f32 %v487, %v1023
      %v1025 = vpop.f32.mrf.mxu0
      %1026 = vmatprep.mubr.f32.mxu0 0.0
      %1027 = vmatmul.mubr.f32.gmra.mxu0 %v659
      %v1028 = vpop.f32.mrf.mxu0
      %v1029 = vadd.f32 %v487, %v1028
      %v1030 = vpop.f32.mrf.mxu0
      %1031 = vmatprep.mubr.f32.mxu0 0.0
      %1032 = vmatmul.mubr.f32.gmra.mxu0 %v662
      %v1033 = vpop.f32.mrf.mxu0
      %v1034 = vadd.f32 %v487, %v1033
      %v1035 = vpop.f32.mrf.mxu0
      %1036 = vmatprep.mubr.f32.mxu0 0.0
      %1037 = vmatmul.mubr.f32.gmra.mxu0 %v665
      %v1038 = vpop.f32.mrf.mxu0
      %v1039 = vadd.f32 %v487, %v1038
      %v1040 = vpop.f32.mrf.mxu0
      %1041 = vmatprep.mubr.f32.mxu0 0.0
      %1042 = vmatmul.mubr.f32.gmra.mxu0 %v668
      %v1043 = vpop.f32.mrf.mxu0
      %v1044 = vadd.f32 %v487, %v1043
      %v1045 = vpop.f32.mrf.mxu0
      %1046 = vmatprep.mubr.f32.mxu0 0.0
      %1047 = vmatmul.mubr.f32.gmra.mxu0 %v671
      %v1048 = vpop.f32.mrf.mxu0
      %v1049 = vadd.f32 %v487, %v1048
      %v1050 = vpop.f32.mrf.mxu0
      %1051 = vmatprep.mubr.f32.mxu0 0.0
      %1052 = vmatmul.mubr.f32.gmra.mxu0 %v674
      %v1053 = vpop.f32.mrf.mxu0
      %v1054 = vadd.f32 %v487, %v1053
      %v1055 = vpop.f32.mrf.mxu0
      %1056 = vmatprep.mubr.f32.mxu0 0.0
      %1057 = vmatmul.mubr.f32.gmra.mxu0 %v677
      %v1058 = vpop.f32.mrf.mxu0
      %v1059 = vadd.f32 %v487, %v1058
      %v1060 = vpop.f32.mrf.mxu0
      %1061 = vmatprep.mubr.f32.mxu0 0.0
      %1062 = vmatmul.mubr.f32.gmra.mxu0 %v680
      %v1063 = vpop.f32.mrf.mxu0
      %v1064 = vadd.f32 %v487, %v1063
      %v1065 = vpop.f32.mrf.mxu0
      %1066 = vdwg.mxu0
      %1099 = vrot.lane.b32.xlu0 %v909, 4
      %v1100 = vpop.permute.xlu0 %1099
      %1101 = vrot.lane.b32.xlu0 %v914, 4
      %v1102 = vpop.permute.xlu0 %1101
      %1103 = vrot.lane.b32.xlu0 %v919, 4
      %v1104 = vpop.permute.xlu0 %1103
      %1105 = vrot.lane.b32.xlu0 %v924, 4
      %v1106 = vpop.permute.xlu0 %1105
      %1107 = vrot.lane.b32.xlu0 %v929, 4
      %v1108 = vpop.permute.xlu0 %1107
      %1109 = vrot.lane.b32.xlu0 %v934, 4
      %v1110 = vpop.permute.xlu0 %1109
      %1111 = vrot.lane.b32.xlu0 %v939, 4
      %v1112 = vpop.permute.xlu0 %1111
      %1113 = vrot.lane.b32.xlu0 %v944, 4
      %v1114 = vpop.permute.xlu0 %1113
      %1115 = vrot.lane.b32.xlu0 %v949, 4
      %v1116 = vpop.permute.xlu0 %1115
      %1117 = vrot.lane.b32.xlu0 %v954, 4
      %v1118 = vpop.permute.xlu0 %1117
      %1119 = vrot.lane.b32.xlu0 %v959, 4
      %v1120 = vpop.permute.xlu0 %1119
      %1121 = vrot.lane.b32.xlu0 %v964, 4
      %v1122 = vpop.permute.xlu0 %1121
      %1123 = vrot.lane.b32.xlu0 %v969, 4
      %v1124 = vpop.permute.xlu0 %1123
      %1125 = vrot.lane.b32.xlu0 %v974, 4
      %v1126 = vpop.permute.xlu0 %1125
      %1127 = vrot.lane.b32.xlu0 %v979, 4
      %v1128 = vpop.permute.xlu0 %1127
      %1129 = vrot.lane.b32.xlu0 %v984, 4
      %v1130 = vpop.permute.xlu0 %1129
      %1131 = vrot.lane.b32.xlu0 %v989, 4
      %v1132 = vpop.permute.xlu0 %1131
      %1133 = vrot.lane.b32.xlu0 %v994, 4
      %v1134 = vpop.permute.xlu0 %1133
      %1135 = vrot.lane.b32.xlu0 %v999, 4
      %v1136 = vpop.permute.xlu0 %1135
      %1137 = vrot.lane.b32.xlu0 %v1004, 4
      %v1138 = vpop.permute.xlu0 %1137
      %1139 = vrot.lane.b32.xlu0 %v1009, 4
      %v1140 = vpop.permute.xlu0 %1139
      %1141 = vrot.lane.b32.xlu0 %v1014, 4
      %v1142 = vpop.permute.xlu0 %1141
      %1143 = vrot.lane.b32.xlu0 %v1019, 4
      %v1144 = vpop.permute.xlu0 %1143
      %1145 = vrot.lane.b32.xlu0 %v1024, 4
      %v1146 = vpop.permute.xlu0 %1145
      %1147 = vrot.lane.b32.xlu0 %v1029, 4
      %v1148 = vpop.permute.xlu0 %1147
      %1149 = vrot.lane.b32.xlu0 %v1034, 4
      %v1150 = vpop.permute.xlu0 %1149
      %1151 = vrot.lane.b32.xlu0 %v1039, 4
      %v1152 = vpop.permute.xlu0 %1151
      %1153 = vrot.lane.b32.xlu0 %v1044, 4
      %v1154 = vpop.permute.xlu0 %1153
      %1155 = vrot.lane.b32.xlu0 %v1049, 4
      %v1156 = vpop.permute.xlu0 %1155
      %1157 = vrot.lane.b32.xlu0 %v1054, 4
      %v1158 = vpop.permute.xlu0 %1157
      %1159 = vrot.lane.b32.xlu0 %v1059, 4
      %v1160 = vpop.permute.xlu0 %1159
      %1161 = vrot.lane.b32.xlu0 %v1064, 4
      %v1162 = vpop.permute.xlu0 %1161
      %vm1195 = vcmask 31744
      %v1196 = vsel %vm1195, %v749, %v1100
      %v1197 = vsel %vm1195, %v754, %v1102
      %v1198 = vsel %vm1195, %v759, %v1104
      %v1199 = vsel %vm1195, %v764, %v1106
      %v1200 = vsel %vm1195, %v769, %v1108
      %v1201 = vsel %vm1195, %v774, %v1110
      %v1202 = vsel %vm1195, %v779, %v1112
      %v1203 = vsel %vm1195, %v784, %v1114
      %v1204 = vsel %vm1195, %v789, %v1116
      %v1205 = vsel %vm1195, %v794, %v1118
      %v1206 = vsel %vm1195, %v799, %v1120
      %v1207 = vsel %vm1195, %v804, %v1122
      %v1208 = vsel %vm1195, %v809, %v1124
      %v1209 = vsel %vm1195, %v814, %v1126
      %v1210 = vsel %vm1195, %v819, %v1128
      %v1211 = vsel %vm1195, %v824, %v1130
      %v1212 = vsel %vm1195, %v829, %v1132
      %v1213 = vsel %vm1195, %v834, %v1134
      %v1214 = vsel %vm1195, %v839, %v1136
      %v1215 = vsel %vm1195, %v844, %v1138
      %v1216 = vsel %vm1195, %v849, %v1140
      %v1217 = vsel %vm1195, %v854, %v1142
      %v1218 = vsel %vm1195, %v859, %v1144
      %v1219 = vsel %vm1195, %v864, %v1146
      %v1220 = vsel %vm1195, %v869, %v1148
      %v1221 = vsel %vm1195, %v874, %v1150
      %v1222 = vsel %vm1195, %v879, %v1152
      %v1223 = vsel %vm1195, %v884, %v1154
      %v1224 = vsel %vm1195, %v889, %v1156
      %v1225 = vsel %vm1195, %v894, %v1158
      %v1226 = vsel %vm1195, %v899, %v1160
      %v1227 = vsel %vm1195, %v904, %v1162
      %v1228 = vrot.slane %v1196, 7
      %v1229 = vrot.slane %v1197, 7
      %v1230 = vrot.slane %v1198, 7
      %v1231 = vrot.slane %v1199, 7
      %v1232 = vrot.slane %v1200, 7
      %v1233 = vrot.slane %v1201, 7
      %v1234 = vrot.slane %v1202, 7
      %v1235 = vrot.slane %v1203, 7
      %v1236 = vrot.slane %v1204, 7
      %v1237 = vrot.slane %v1205, 7
      %v1238 = vrot.slane %v1206, 7
      %v1239 = vrot.slane %v1207, 7
      %v1240 = vrot.slane %v1208, 7
      %v1241 = vrot.slane %v1209, 7
      %v1242 = vrot.slane %v1210, 7
      %v1243 = vrot.slane %v1211, 7
      %v1244 = vrot.slane %v1212, 7
      %v1245 = vrot.slane %v1213, 7
      %v1246 = vrot.slane %v1214, 7
      %v1247 = vrot.slane %v1215, 7
      %v1248 = vrot.slane %v1216, 7
      %v1249 = vrot.slane %v1217, 7
      %v1250 = vrot.slane %v1218, 7
      %v1251 = vrot.slane %v1219, 7
      %v1252 = vrot.slane %v1220, 7
      %v1253 = vrot.slane %v1221, 7
      %v1254 = vrot.slane %v1222, 7
      %v1255 = vrot.slane %v1223, 7
      %v1256 = vrot.slane %v1224, 7
      %v1257 = vrot.slane %v1225, 7
      %v1258 = vrot.slane %v1226, 7
      %v1259 = vrot.slane %v1227, 7
      %v1260 = vlaneseq
      %v1261 = vshrl.u32 %v1260, 7
      %vm1262 = vcmp.lt.s32.totalorder %v1261, 1
      %v1263 = vsel %vm1262, %v1258, %v1259
      %v1264 = vsel %vm1262, %v1257, %v1258
      %v1265 = vsel %vm1262, %v1256, %v1257
      %v1266 = vsel %vm1262, %v1255, %v1256
      %v1267 = vsel %vm1262, %v1254, %v1255
      %v1268 = vsel %vm1262, %v1253, %v1254
      %v1269 = vsel %vm1262, %v1252, %v1253
      %v1270 = vsel %vm1262, %v1251, %v1252
      %v1271 = vsel %vm1262, %v1250, %v1251
      %v1272 = vsel %vm1262, %v1249, %v1250
      %v1273 = vsel %vm1262, %v1248, %v1249
      %v1274 = vsel %vm1262, %v1247, %v1248
      %v1275 = vsel %vm1262, %v1246, %v1247
      %v1276 = vsel %vm1262, %v1245, %v1246
      %v1277 = vsel %vm1262, %v1244, %v1245
      %v1278 = vsel %vm1262, %v1243, %v1244
      %v1279 = vsel %vm1262, %v1242, %v1243
      %v1280 = vsel %vm1262, %v1241, %v1242
      %v1281 = vsel %vm1262, %v1240, %v1241
      %v1282 = vsel %vm1262, %v1239, %v1240
      %v1283 = vsel %vm1262, %v1238, %v1239
      %v1284 = vsel %vm1262, %v1237, %v1238
      %v1285 = vsel %vm1262, %v1236, %v1237
      %v1286 = vsel %vm1262, %v1235, %v1236
      %v1287 = vsel %vm1262, %v1234, %v1235
      %v1288 = vsel %vm1262, %v1233, %v1234
      %v1289 = vsel %vm1262, %v1232, %v1233
      %v1290 = vsel %vm1262, %v1231, %v1232
      %v1291 = vsel %vm1262, %v1230, %v1231
      %v1292 = vsel %vm1262, %v1229, %v1230
      %v1293 = vsel %vm1262, %v1228, %v1229
      %v1294 = vsel %vm1262, %v1259, %v1228
      %1296 = vset.pattern.permute.xlu0 0
      %1297 = vperm.xlu0 %1296, %v446
      %v1298 = vpop.permute.xlu0 %1297
      %1301 = vset.pattern.permute.xlu0 0
      %1302 = vperm.xlu0 %1301, %v447
      %v1303 = vpop.permute.xlu0 %1302
      %1306 = vset.pattern.permute.xlu0 0
      %1307 = vperm.xlu0 %1306, %v448
      %v1308 = vpop.permute.xlu0 %1307
      %1311 = vset.pattern.permute.xlu0 0
      %1312 = vperm.xlu0 %1311, %v449
      %v1313 = vpop.permute.xlu0 %1312
      %1316 = vset.pattern.permute.xlu0 0
      %1317 = vperm.xlu0 %1316, %v450
      %v1318 = vpop.permute.xlu0 %1317
      %1321 = vset.pattern.permute.xlu0 0
      %1322 = vperm.xlu0 %1321, %v451
      %v1323 = vpop.permute.xlu0 %1322
      %1326 = vset.pattern.permute.xlu0 0
      %1327 = vperm.xlu0 %1326, %v452
      %v1328 = vpop.permute.xlu0 %1327
      %1331 = vset.pattern.permute.xlu0 0
      %1332 = vperm.xlu0 %1331, %v453
      %v1333 = vpop.permute.xlu0 %1332
      %1336 = vset.pattern.permute.xlu0 0
      %1337 = vperm.xlu0 %1336, %v454
      %v1338 = vpop.permute.xlu0 %1337
      %1341 = vset.pattern.permute.xlu0 0
      %1342 = vperm.xlu0 %1341, %v455
      %v1343 = vpop.permute.xlu0 %1342
      %1346 = vset.pattern.permute.xlu0 0
      %1347 = vperm.xlu0 %1346, %v456
      %v1348 = vpop.permute.xlu0 %1347
      %1351 = vset.pattern.permute.xlu0 0
      %1352 = vperm.xlu0 %1351, %v457
      %v1353 = vpop.permute.xlu0 %1352
      %1356 = vset.pattern.permute.xlu0 0
      %1357 = vperm.xlu0 %1356, %v458
      %v1358 = vpop.permute.xlu0 %1357
      %1361 = vset.pattern.permute.xlu0 0
      %1362 = vperm.xlu0 %1361, %v459
      %v1363 = vpop.permute.xlu0 %1362
      %1366 = vset.pattern.permute.xlu0 0
      %1367 = vperm.xlu0 %1366, %v460
      %v1368 = vpop.permute.xlu0 %1367
      %1371 = vset.pattern.permute.xlu0 0
      %1372 = vperm.xlu0 %1371, %v461
      %v1373 = vpop.permute.xlu0 %1372
      %1376 = vset.pattern.permute.xlu0 0
      %1377 = vperm.xlu0 %1376, %v462
      %v1378 = vpop.permute.xlu0 %1377
      %1381 = vset.pattern.permute.xlu0 0
      %1382 = vperm.xlu0 %1381, %v463
      %v1383 = vpop.permute.xlu0 %1382
      %1386 = vset.pattern.permute.xlu0 0
      %1387 = vperm.xlu0 %1386, %v464
      %v1388 = vpop.permute.xlu0 %1387
      %1391 = vset.pattern.permute.xlu0 0
      %1392 = vperm.xlu0 %1391, %v465
      %v1393 = vpop.permute.xlu0 %1392
      %1396 = vset.pattern.permute.xlu0 0
      %1397 = vperm.xlu0 %1396, %v466
      %v1398 = vpop.permute.xlu0 %1397
      %1401 = vset.pattern.permute.xlu0 0
      %1402 = vperm.xlu0 %1401, %v467
      %v1403 = vpop.permute.xlu0 %1402
      %1406 = vset.pattern.permute.xlu0 0
      %1407 = vperm.xlu0 %1406, %v468
      %v1408 = vpop.permute.xlu0 %1407
      %1411 = vset.pattern.permute.xlu0 0
      %1412 = vperm.xlu0 %1411, %v469
      %v1413 = vpop.permute.xlu0 %1412
      %1416 = vset.pattern.permute.xlu0 0
      %1417 = vperm.xlu0 %1416, %v470
      %v1418 = vpop.permute.xlu0 %1417
      %1421 = vset.pattern.permute.xlu0 0
      %1422 = vperm.xlu0 %1421, %v471
      %v1423 = vpop.permute.xlu0 %1422
      %1426 = vset.pattern.permute.xlu0 0
      %1427 = vperm.xlu0 %1426, %v472
      %v1428 = vpop.permute.xlu0 %1427
      %1431 = vset.pattern.permute.xlu0 0
      %1432 = vperm.xlu0 %1431, %v473
      %v1433 = vpop.permute.xlu0 %1432
      %1436 = vset.pattern.permute.xlu0 0
      %1437 = vperm.xlu0 %1436, %v474
      %v1438 = vpop.permute.xlu0 %1437
      %1441 = vset.pattern.permute.xlu0 0
      %1442 = vperm.xlu0 %1441, %v475
      %v1443 = vpop.permute.xlu0 %1442
      %1446 = vset.pattern.permute.xlu0 0
      %1447 = vperm.xlu0 %1446, %v476
      %v1448 = vpop.permute.xlu0 %1447
      %1451 = vset.pattern.permute.xlu0 0
      %1452 = vperm.xlu0 %1451, %v477
      %v1453 = vpop.permute.xlu0 %1452
      %v1455 = vmul.f32 %v1264, %v1298
      %v1456 = vmul.f32 %v1263, %v1303
      %v1457 = vmul.f32 %v1294, %v1308
      %v1458 = vmul.f32 %v1293, %v1313
      %v1459 = vmul.f32 %v1292, %v1318
      %v1460 = vmul.f32 %v1291, %v1323
      %v1461 = vmul.f32 %v1290, %v1328
      %v1462 = vmul.f32 %v1289, %v1333
      %v1463 = vmul.f32 %v1288, %v1338
      %v1464 = vmul.f32 %v1287, %v1343
      %v1465 = vmul.f32 %v1286, %v1348
      %v1466 = vmul.f32 %v1285, %v1353
      %v1467 = vmul.f32 %v1284, %v1358
      %v1468 = vmul.f32 %v1283, %v1363
      %v1469 = vmul.f32 %v1282, %v1368
      %v1470 = vmul.f32 %v1281, %v1373
      %v1471 = vmul.f32 %v1280, %v1378
      %v1472 = vmul.f32 %v1279, %v1383
      %v1473 = vmul.f32 %v1278, %v1388
      %v1474 = vmul.f32 %v1277, %v1393
      %v1475 = vmul.f32 %v1276, %v1398
      %v1476 = vmul.f32 %v1275, %v1403
      %v1477 = vmul.f32 %v1274, %v1408
      %v1478 = vmul.f32 %v1273, %v1413
      %v1479 = vmul.f32 %v1272, %v1418
      %v1480 = vmul.f32 %v1271, %v1423
      %v1481 = vmul.f32 %v1270, %v1428
      %v1482 = vmul.f32 %v1269, %v1433
      %v1483 = vmul.f32 %v1268, %v1438
      %v1484 = vmul.f32 %v1267, %v1443
      %v1485 = vmul.f32 %v1266, %v1448
      %v1486 = vmul.f32 %v1265, %v1453
      %1487 = vset.pattern.permute.xlu0 1
      %1488 = vperm.xlu0 %1487, %v446
      %v1489 = vpop.permute.xlu0 %1488
      %1491 = vset.pattern.permute.xlu0 1
      %1492 = vperm.xlu0 %1491, %v447
      %v1493 = vpop.permute.xlu0 %1492
      %1495 = vset.pattern.permute.xlu0 1
      %1496 = vperm.xlu0 %1495, %v448
      %v1497 = vpop.permute.xlu0 %1496
      %1499 = vset.pattern.permute.xlu0 1
      %1500 = vperm.xlu0 %1499, %v449
      %v1501 = vpop.permute.xlu0 %1500
      %1503 = vset.pattern.permute.xlu0 1
      %1504 = vperm.xlu0 %1503, %v450
      %v1505 = vpop.permute.xlu0 %1504
      %1507 = vset.pattern.permute.xlu0 1
      %1508 = vperm.xlu0 %1507, %v451
      %v1509 = vpop.permute.xlu0 %1508
      %1511 = vset.pattern.permute.xlu0 1
      %1512 = vperm.xlu0 %1511, %v452
      %v1513 = vpop.permute.xlu0 %1512
      %1515 = vset.pattern.permute.xlu0 1
      %1516 = vperm.xlu0 %1515, %v453
      %v1517 = vpop.permute.xlu0 %1516
      %1519 = vset.pattern.permute.xlu0 1
      %1520 = vperm.xlu0 %1519, %v454
      %v1521 = vpop.permute.xlu0 %1520
      %1523 = vset.pattern.permute.xlu0 1
      %1524 = vperm.xlu0 %1523, %v455
      %v1525 = vpop.permute.xlu0 %1524
      %1527 = vset.pattern.permute.xlu0 1
      %1528 = vperm.xlu0 %1527, %v456
      %v1529 = vpop.permute.xlu0 %1528
      %1531 = vset.pattern.permute.xlu0 1
      %1532 = vperm.xlu0 %1531, %v457
      %v1533 = vpop.permute.xlu0 %1532
      %1535 = vset.pattern.permute.xlu0 1
      %1536 = vperm.xlu0 %1535, %v458
      %v1537 = vpop.permute.xlu0 %1536
      %1539 = vset.pattern.permute.xlu0 1
      %1540 = vperm.xlu0 %1539, %v459
      %v1541 = vpop.permute.xlu0 %1540
      %1543 = vset.pattern.permute.xlu0 1
      %1544 = vperm.xlu0 %1543, %v460
      %v1545 = vpop.permute.xlu0 %1544
      %1547 = vset.pattern.permute.xlu0 1
      %1548 = vperm.xlu0 %1547, %v461
      %v1549 = vpop.permute.xlu0 %1548
      %1551 = vset.pattern.permute.xlu0 1
      %1552 = vperm.xlu0 %1551, %v462
      %v1553 = vpop.permute.xlu0 %1552
      %1555 = vset.pattern.permute.xlu0 1
      %1556 = vperm.xlu0 %1555, %v463
      %v1557 = vpop.permute.xlu0 %1556
      %1559 = vset.pattern.permute.xlu0 1
      %1560 = vperm.xlu0 %1559, %v464
      %v1561 = vpop.permute.xlu0 %1560
      %1563 = vset.pattern.permute.xlu0 1
      %1564 = vperm.xlu0 %1563, %v465
      %v1565 = vpop.permute.xlu0 %1564
      %1567 = vset.pattern.permute.xlu0 1
      %1568 = vperm.xlu0 %1567, %v466
      %v1569 = vpop.permute.xlu0 %1568
      %1571 = vset.pattern.permute.xlu0 1
      %1572 = vperm.xlu0 %1571, %v467
      %v1573 = vpop.permute.xlu0 %1572
      %1575 = vset.pattern.permute.xlu0 1
      %1576 = vperm.xlu0 %1575, %v468
      %v1577 = vpop.permute.xlu0 %1576
      %1579 = vset.pattern.permute.xlu0 1
      %1580 = vperm.xlu0 %1579, %v469
      %v1581 = vpop.permute.xlu0 %1580
      %1583 = vset.pattern.permute.xlu0 1
      %1584 = vperm.xlu0 %1583, %v470
      %v1585 = vpop.permute.xlu0 %1584
      %1587 = vset.pattern.permute.xlu0 1
      %1588 = vperm.xlu0 %1587, %v471
      %v1589 = vpop.permute.xlu0 %1588
      %1591 = vset.pattern.permute.xlu0 1
      %1592 = vperm.xlu0 %1591, %v472
      %v1593 = vpop.permute.xlu0 %1592
      %1595 = vset.pattern.permute.xlu0 1
      %1596 = vperm.xlu0 %1595, %v473
      %v1597 = vpop.permute.xlu0 %1596
      %1599 = vset.pattern.permute.xlu0 1
      %1600 = vperm.xlu0 %1599, %v474
      %v1601 = vpop.permute.xlu0 %1600
      %1603 = vset.pattern.permute.xlu0 1
      %1604 = vperm.xlu0 %1603, %v475
      %v1605 = vpop.permute.xlu0 %1604
      %1607 = vset.pattern.permute.xlu0 1
      %1608 = vperm.xlu0 %1607, %v476
      %v1609 = vpop.permute.xlu0 %1608
      %1611 = vset.pattern.permute.xlu0 1
      %1612 = vperm.xlu0 %1611, %v477
      %v1613 = vpop.permute.xlu0 %1612
      %v1615 = vmul.f32 %v1226, %v1489
      %v1616 = vmul.f32 %v1227, %v1493
      %v1617 = vmul.f32 %v1196, %v1497
      %v1618 = vmul.f32 %v1197, %v1501
      %v1619 = vmul.f32 %v1198, %v1505
      %v1620 = vmul.f32 %v1199, %v1509
      %v1621 = vmul.f32 %v1200, %v1513
      %v1622 = vmul.f32 %v1201, %v1517
      %v1623 = vmul.f32 %v1202, %v1521
      %v1624 = vmul.f32 %v1203, %v1525
      %v1625 = vmul.f32 %v1204, %v1529
      %v1626 = vmul.f32 %v1205, %v1533
      %v1627 = vmul.f32 %v1206, %v1537
      %v1628 = vmul.f32 %v1207, %v1541
      %v1629 = vmul.f32 %v1208, %v1545
      %v1630 = vmul.f32 %v1209, %v1549
      %v1631 = vmul.f32 %v1210, %v1553
      %v1632 = vmul.f32 %v1211, %v1557
      %v1633 = vmul.f32 %v1212, %v1561
      %v1634 = vmul.f32 %v1213, %v1565
      %v1635 = vmul.f32 %v1214, %v1569
      %v1636 = vmul.f32 %v1215, %v1573
      %v1637 = vmul.f32 %v1216, %v1577
      %v1638 = vmul.f32 %v1217, %v1581
      %v1639 = vmul.f32 %v1218, %v1585
      %v1640 = vmul.f32 %v1219, %v1589
      %v1641 = vmul.f32 %v1220, %v1593
      %v1642 = vmul.f32 %v1221, %v1597
      %v1643 = vmul.f32 %v1222, %v1601
      %v1644 = vmul.f32 %v1223, %v1605
      %v1645 = vmul.f32 %v1224, %v1609
      %v1646 = vmul.f32 %v1225, %v1613
      %v1647 = vrot.slane %v1196, 1
      %v1648 = vrot.slane %v1197, 1
      %v1649 = vrot.slane %v1198, 1
      %v1650 = vrot.slane %v1199, 1
      %v1651 = vrot.slane %v1200, 1
      %v1652 = vrot.slane %v1201, 1
      %v1653 = vrot.slane %v1202, 1
      %v1654 = vrot.slane %v1203, 1
      %v1655 = vrot.slane %v1204, 1
      %v1656 = vrot.slane %v1205, 1
      %v1657 = vrot.slane %v1206, 1
      %v1658 = vrot.slane %v1207, 1
      %v1659 = vrot.slane %v1208, 1
      %v1660 = vrot.slane %v1209, 1
      %v1661 = vrot.slane %v1210, 1
      %v1662 = vrot.slane %v1211, 1
      %v1663 = vrot.slane %v1212, 1
      %v1664 = vrot.slane %v1213, 1
      %v1665 = vrot.slane %v1214, 1
      %v1666 = vrot.slane %v1215, 1
      %v1667 = vrot.slane %v1216, 1
      %v1668 = vrot.slane %v1217, 1
      %v1669 = vrot.slane %v1218, 1
      %v1670 = vrot.slane %v1219, 1
      %v1671 = vrot.slane %v1220, 1
      %v1672 = vrot.slane %v1221, 1
      %v1673 = vrot.slane %v1222, 1
      %v1674 = vrot.slane %v1223, 1
      %v1675 = vrot.slane %v1224, 1
      %v1676 = vrot.slane %v1225, 1
      %v1677 = vrot.slane %v1226, 1
      %v1678 = vrot.slane %v1227, 1
      %vm1679 = vcmp.lt.s32.totalorder %v1261, 7
      %v1680 = vsel %vm1679, %v1677, %v1678
      %v1681 = vsel %vm1679, %v1676, %v1677
      %v1682 = vsel %vm1679, %v1675, %v1676
      %v1683 = vsel %vm1679, %v1674, %v1675
      %v1684 = vsel %vm1679, %v1673, %v1674
      %v1685 = vsel %vm1679, %v1672, %v1673
      %v1686 = vsel %vm1679, %v1671, %v1672
      %v1687 = vsel %vm1679, %v1670, %v1671
      %v1688 = vsel %vm1679, %v1669, %v1670
      %v1689 = vsel %vm1679, %v1668, %v1669
      %v1690 = vsel %vm1679, %v1667, %v1668
      %v1691 = vsel %vm1679, %v1666, %v1667
      %v1692 = vsel %vm1679, %v1665, %v1666
      %v1693 = vsel %vm1679, %v1664, %v1665
      %v1694 = vsel %vm1679, %v1663, %v1664
      %v1695 = vsel %vm1679, %v1662, %v1663
      %v1696 = vsel %vm1679, %v1661, %v1662
      %v1697 = vsel %vm1679, %v1660, %v1661
      %v1698 = vsel %vm1679, %v1659, %v1660
      %v1699 = vsel %vm1679, %v1658, %v1659
      %v1700 = vsel %vm1679, %v1657, %v1658
      %v1701 = vsel %vm1679, %v1656, %v1657
      %v1702 = vsel %vm1679, %v1655, %v1656
      %v1703 = vsel %vm1679, %v1654, %v1655
      %v1704 = vsel %vm1679, %v1653, %v1654
      %v1705 = vsel %vm1679, %v1652, %v1653
      %v1706 = vsel %vm1679, %v1651, %v1652
      %v1707 = vsel %vm1679, %v1650, %v1651
      %v1708 = vsel %vm1679, %v1649, %v1650
      %v1709 = vsel %vm1679, %v1648, %v1649
      %v1710 = vsel %vm1679, %v1647, %v1648
      %v1711 = vsel %vm1679, %v1678, %v1647
      %1712 = vset.pattern.permute.xlu0 2
      %1713 = vperm.xlu0 %1712, %v446
      %v1714 = vpop.permute.xlu0 %1713
      %1716 = vset.pattern.permute.xlu0 2
      %1717 = vperm.xlu0 %1716, %v447
      %v1718 = vpop.permute.xlu0 %1717
      %1720 = vset.pattern.permute.xlu0 2
      %1721 = vperm.xlu0 %1720, %v448
      %v1722 = vpop.permute.xlu0 %1721
      %1724 = vset.pattern.permute.xlu0 2
      %1725 = vperm.xlu0 %1724, %v449
      %v1726 = vpop.permute.xlu0 %1725
      %1728 = vset.pattern.permute.xlu0 2
      %1729 = vperm.xlu0 %1728, %v450
      %v1730 = vpop.permute.xlu0 %1729
      %1732 = vset.pattern.permute.xlu0 2
      %1733 = vperm.xlu0 %1732, %v451
      %v1734 = vpop.permute.xlu0 %1733
      %1736 = vset.pattern.permute.xlu0 2
      %1737 = vperm.xlu0 %1736, %v452
      %v1738 = vpop.permute.xlu0 %1737
      %1740 = vset.pattern.permute.xlu0 2
      %1741 = vperm.xlu0 %1740, %v453
      %v1742 = vpop.permute.xlu0 %1741
      %1744 = vset.pattern.permute.xlu0 2
      %1745 = vperm.xlu0 %1744, %v454
      %v1746 = vpop.permute.xlu0 %1745
      %1748 = vset.pattern.permute.xlu0 2
      %1749 = vperm.xlu0 %1748, %v455
      %v1750 = vpop.permute.xlu0 %1749
      %1752 = vset.pattern.permute.xlu0 2
      %1753 = vperm.xlu0 %1752, %v456
      %v1754 = vpop.permute.xlu0 %1753
      %1756 = vset.pattern.permute.xlu0 2
      %1757 = vperm.xlu0 %1756, %v457
      %v1758 = vpop.permute.xlu0 %1757
      %1760 = vset.pattern.permute.xlu0 2
      %1761 = vperm.xlu0 %1760, %v458
      %v1762 = vpop.permute.xlu0 %1761
      %1764 = vset.pattern.permute.xlu0 2
      %1765 = vperm.xlu0 %1764, %v459
      %v1766 = vpop.permute.xlu0 %1765
      %1768 = vset.pattern.permute.xlu0 2
      %1769 = vperm.xlu0 %1768, %v460
      %v1770 = vpop.permute.xlu0 %1769
      %1772 = vset.pattern.permute.xlu0 2
      %1773 = vperm.xlu0 %1772, %v461
      %v1774 = vpop.permute.xlu0 %1773
      %1776 = vset.pattern.permute.xlu0 2
      %1777 = vperm.xlu0 %1776, %v462
      %v1778 = vpop.permute.xlu0 %1777
      %1780 = vset.pattern.permute.xlu0 2
      %1781 = vperm.xlu0 %1780, %v463
      %v1782 = vpop.permute.xlu0 %1781
      %1784 = vset.pattern.permute.xlu0 2
      %1785 = vperm.xlu0 %1784, %v464
      %v1786 = vpop.permute.xlu0 %1785
      %1788 = vset.pattern.permute.xlu0 2
      %1789 = vperm.xlu0 %1788, %v465
      %v1790 = vpop.permute.xlu0 %1789
      %1792 = vset.pattern.permute.xlu0 2
      %1793 = vperm.xlu0 %1792, %v466
      %v1794 = vpop.permute.xlu0 %1793
      %1796 = vset.pattern.permute.xlu0 2
      %1797 = vperm.xlu0 %1796, %v467
      %v1798 = vpop.permute.xlu0 %1797
      %1800 = vset.pattern.permute.xlu0 2
      %1801 = vperm.xlu0 %1800, %v468
      %v1802 = vpop.permute.xlu0 %1801
      %1804 = vset.pattern.permute.xlu0 2
      %1805 = vperm.xlu0 %1804, %v469
      %v1806 = vpop.permute.xlu0 %1805
      %1808 = vset.pattern.permute.xlu0 2
      %1809 = vperm.xlu0 %1808, %v470
      %v1810 = vpop.permute.xlu0 %1809
      %1812 = vset.pattern.permute.xlu0 2
      %1813 = vperm.xlu0 %1812, %v471
      %v1814 = vpop.permute.xlu0 %1813
      %1816 = vset.pattern.permute.xlu0 2
      %1817 = vperm.xlu0 %1816, %v472
      %v1818 = vpop.permute.xlu0 %1817
      %1820 = vset.pattern.permute.xlu0 2
      %1821 = vperm.xlu0 %1820, %v473
      %v1822 = vpop.permute.xlu0 %1821
      %1824 = vset.pattern.permute.xlu0 2
      %1825 = vperm.xlu0 %1824, %v474
      %v1826 = vpop.permute.xlu0 %1825
      %1828 = vset.pattern.permute.xlu0 2
      %1829 = vperm.xlu0 %1828, %v475
      %v1830 = vpop.permute.xlu0 %1829
      %1832 = vset.pattern.permute.xlu0 2
      %1833 = vperm.xlu0 %1832, %v476
      %v1834 = vpop.permute.xlu0 %1833
      %1836 = vset.pattern.permute.xlu0 2
      %1837 = vperm.xlu0 %1836, %v477
      %v1838 = vpop.permute.xlu0 %1837
      %v1840 = vmul.f32 %v1680, %v1714
      %v1841 = vmul.f32 %v1711, %v1718
      %v1842 = vmul.f32 %v1710, %v1722
      %v1843 = vmul.f32 %v1709, %v1726
      %v1844 = vmul.f32 %v1708, %v1730
      %v1845 = vmul.f32 %v1707, %v1734
      %v1846 = vmul.f32 %v1706, %v1738
      %v1847 = vmul.f32 %v1705, %v1742
      %v1848 = vmul.f32 %v1704, %v1746
      %v1849 = vmul.f32 %v1703, %v1750
      %v1850 = vmul.f32 %v1702, %v1754
      %v1851 = vmul.f32 %v1701, %v1758
      %v1852 = vmul.f32 %v1700, %v1762
      %v1853 = vmul.f32 %v1699, %v1766
      %v1854 = vmul.f32 %v1698, %v1770
      %v1855 = vmul.f32 %v1697, %v1774
      %v1856 = vmul.f32 %v1696, %v1778
      %v1857 = vmul.f32 %v1695, %v1782
      %v1858 = vmul.f32 %v1694, %v1786
      %v1859 = vmul.f32 %v1693, %v1790
      %v1860 = vmul.f32 %v1692, %v1794
      %v1861 = vmul.f32 %v1691, %v1798
      %v1862 = vmul.f32 %v1690, %v1802
      %v1863 = vmul.f32 %v1689, %v1806
      %v1864 = vmul.f32 %v1688, %v1810
      %v1865 = vmul.f32 %v1687, %v1814
      %v1866 = vmul.f32 %v1686, %v1818
      %v1867 = vmul.f32 %v1685, %v1822
      %v1868 = vmul.f32 %v1684, %v1826
      %v1869 = vmul.f32 %v1683, %v1830
      %v1870 = vmul.f32 %v1682, %v1834
      %v1871 = vmul.f32 %v1681, %v1838
      %1872 = vset.pattern.permute.xlu0 3
      %1873 = vperm.xlu0 %1872, %v446
      %v1874 = vpop.permute.xlu0 %1873
      %1876 = vset.pattern.permute.xlu0 3
      %1877 = vperm.xlu0 %1876, %v447
      %v1878 = vpop.permute.xlu0 %1877
      %1880 = vset.pattern.permute.xlu0 3
      %1881 = vperm.xlu0 %1880, %v448
      %v1882 = vpop.permute.xlu0 %1881
      %1884 = vset.pattern.permute.xlu0 3
      %1885 = vperm.xlu0 %1884, %v449
      %v1886 = vpop.permute.xlu0 %1885
      %1888 = vset.pattern.permute.xlu0 3
      %1889 = vperm.xlu0 %1888, %v450
      %v1890 = vpop.permute.xlu0 %1889
      %1892 = vset.pattern.permute.xlu0 3
      %1893 = vperm.xlu0 %1892, %v451
      %v1894 = vpop.permute.xlu0 %1893
      %1896 = vset.pattern.permute.xlu0 3
      %1897 = vperm.xlu0 %1896, %v452
      %v1898 = vpop.permute.xlu0 %1897
      %1900 = vset.pattern.permute.xlu0 3
      %1901 = vperm.xlu0 %1900, %v453
      %v1902 = vpop.permute.xlu0 %1901
      %1904 = vset.pattern.permute.xlu0 3
      %1905 = vperm.xlu0 %1904, %v454
      %v1906 = vpop.permute.xlu0 %1905
      %1908 = vset.pattern.permute.xlu0 3
      %1909 = vperm.xlu0 %1908, %v455
      %v1910 = vpop.permute.xlu0 %1909
      %1912 = vset.pattern.permute.xlu0 3
      %1913 = vperm.xlu0 %1912, %v456
      %v1914 = vpop.permute.xlu0 %1913
      %1916 = vset.pattern.permute.xlu0 3
      %1917 = vperm.xlu0 %1916, %v457
      %v1918 = vpop.permute.xlu0 %1917
      %1920 = vset.pattern.permute.xlu0 3
      %1921 = vperm.xlu0 %1920, %v458
      %v1922 = vpop.permute.xlu0 %1921
      %1924 = vset.pattern.permute.xlu0 3
      %1925 = vperm.xlu0 %1924, %v459
      %v1926 = vpop.permute.xlu0 %1925
      %1928 = vset.pattern.permute.xlu0 3
      %1929 = vperm.xlu0 %1928, %v460
      %v1930 = vpop.permute.xlu0 %1929
      %1932 = vset.pattern.permute.xlu0 3
      %1933 = vperm.xlu0 %1932, %v461
      %v1934 = vpop.permute.xlu0 %1933
      %1936 = vset.pattern.permute.xlu0 3
      %1937 = vperm.xlu0 %1936, %v462
      %v1938 = vpop.permute.xlu0 %1937
      %1940 = vset.pattern.permute.xlu0 3
      %1941 = vperm.xlu0 %1940, %v463
      %v1942 = vpop.permute.xlu0 %1941
      %1944 = vset.pattern.permute.xlu0 3
      %1945 = vperm.xlu0 %1944, %v464
      %v1946 = vpop.permute.xlu0 %1945
      %1948 = vset.pattern.permute.xlu0 3
      %1949 = vperm.xlu0 %1948, %v465
      %v1950 = vpop.permute.xlu0 %1949
      %1952 = vset.pattern.permute.xlu0 3
      %1953 = vperm.xlu0 %1952, %v466
      %v1954 = vpop.permute.xlu0 %1953
      %1956 = vset.pattern.permute.xlu0 3
      %1957 = vperm.xlu0 %1956, %v467
      %v1958 = vpop.permute.xlu0 %1957
      %1960 = vset.pattern.permute.xlu0 3
      %1961 = vperm.xlu0 %1960, %v468
      %v1962 = vpop.permute.xlu0 %1961
      %1964 = vset.pattern.permute.xlu0 3
      %1965 = vperm.xlu0 %1964, %v469
      %v1966 = vpop.permute.xlu0 %1965
      %1968 = vset.pattern.permute.xlu0 3
      %1969 = vperm.xlu0 %1968, %v470
      %v1970 = vpop.permute.xlu0 %1969
      %1972 = vset.pattern.permute.xlu0 3
      %1973 = vperm.xlu0 %1972, %v471
      %v1974 = vpop.permute.xlu0 %1973
      %1976 = vset.pattern.permute.xlu0 3
      %1977 = vperm.xlu0 %1976, %v472
      %v1978 = vpop.permute.xlu0 %1977
      %1980 = vset.pattern.permute.xlu0 3
      %1981 = vperm.xlu0 %1980, %v473
      %v1982 = vpop.permute.xlu0 %1981
      %1984 = vset.pattern.permute.xlu0 3
      %1985 = vperm.xlu0 %1984, %v474
      %v1986 = vpop.permute.xlu0 %1985
      %1988 = vset.pattern.permute.xlu0 3
      %1989 = vperm.xlu0 %1988, %v475
      %v1990 = vpop.permute.xlu0 %1989
      %1992 = vset.pattern.permute.xlu0 3
      %1993 = vperm.xlu0 %1992, %v476
      %v1994 = vpop.permute.xlu0 %1993
      %1996 = vset.pattern.permute.xlu0 3
      %1997 = vperm.xlu0 %1996, %v477
      %v1998 = vpop.permute.xlu0 %1997
      %v2000 = vmul.f32 %v1294, %v1874
      %v2001 = vmul.f32 %v1293, %v1878
      %v2002 = vmul.f32 %v1292, %v1882
      %v2003 = vmul.f32 %v1291, %v1886
      %v2004 = vmul.f32 %v1290, %v1890
      %v2005 = vmul.f32 %v1289, %v1894
      %v2006 = vmul.f32 %v1288, %v1898
      %v2007 = vmul.f32 %v1287, %v1902
      %v2008 = vmul.f32 %v1286, %v1906
      %v2009 = vmul.f32 %v1285, %v1910
      %v2010 = vmul.f32 %v1284, %v1914
      %v2011 = vmul.f32 %v1283, %v1918
      %v2012 = vmul.f32 %v1282, %v1922
      %v2013 = vmul.f32 %v1281, %v1926
      %v2014 = vmul.f32 %v1280, %v1930
      %v2015 = vmul.f32 %v1279, %v1934
      %v2016 = vmul.f32 %v1278, %v1938
      %v2017 = vmul.f32 %v1277, %v1942
      %v2018 = vmul.f32 %v1276, %v1946
      %v2019 = vmul.f32 %v1275, %v1950
      %v2020 = vmul.f32 %v1274, %v1954
      %v2021 = vmul.f32 %v1273, %v1958
      %v2022 = vmul.f32 %v1272, %v1962
      %v2023 = vmul.f32 %v1271, %v1966
      %v2024 = vmul.f32 %v1270, %v1970
      %v2025 = vmul.f32 %v1269, %v1974
      %v2026 = vmul.f32 %v1268, %v1978
      %v2027 = vmul.f32 %v1267, %v1982
      %v2028 = vmul.f32 %v1266, %v1986
      %v2029 = vmul.f32 %v1265, %v1990
      %v2030 = vmul.f32 %v1264, %v1994
      %v2031 = vmul.f32 %v1263, %v1998
      %2032 = vset.pattern.permute.xlu0 4
      %2033 = vperm.xlu0 %2032, %v446
      %v2034 = vpop.permute.xlu0 %2033
      %2036 = vset.pattern.permute.xlu0 4
      %2037 = vperm.xlu0 %2036, %v447
      %v2038 = vpop.permute.xlu0 %2037
      %2040 = vset.pattern.permute.xlu0 4
      %2041 = vperm.xlu0 %2040, %v448
      %v2042 = vpop.permute.xlu0 %2041
      %2044 = vset.pattern.permute.xlu0 4
      %2045 = vperm.xlu0 %2044, %v449
      %v2046 = vpop.permute.xlu0 %2045
      %2048 = vset.pattern.permute.xlu0 4
      %2049 = vperm.xlu0 %2048, %v450
      %v2050 = vpop.permute.xlu0 %2049
      %2052 = vset.pattern.permute.xlu0 4
      %2053 = vperm.xlu0 %2052, %v451
      %v2054 = vpop.permute.xlu0 %2053
      %2056 = vset.pattern.permute.xlu0 4
      %2057 = vperm.xlu0 %2056, %v452
      %v2058 = vpop.permute.xlu0 %2057
      %2060 = vset.pattern.permute.xlu0 4
      %2061 = vperm.xlu0 %2060, %v453
      %v2062 = vpop.permute.xlu0 %2061
      %2064 = vset.pattern.permute.xlu0 4
      %2065 = vperm.xlu0 %2064, %v454
      %v2066 = vpop.permute.xlu0 %2065
      %2068 = vset.pattern.permute.xlu0 4
      %2069 = vperm.xlu0 %2068, %v455
      %v2070 = vpop.permute.xlu0 %2069
      %2072 = vset.pattern.permute.xlu0 4
      %2073 = vperm.xlu0 %2072, %v456
      %v2074 = vpop.permute.xlu0 %2073
      %2076 = vset.pattern.permute.xlu0 4
      %2077 = vperm.xlu0 %2076, %v457
      %v2078 = vpop.permute.xlu0 %2077
      %2080 = vset.pattern.permute.xlu0 4
      %2081 = vperm.xlu0 %2080, %v458
      %v2082 = vpop.permute.xlu0 %2081
      %2084 = vset.pattern.permute.xlu0 4
      %2085 = vperm.xlu0 %2084, %v459
      %v2086 = vpop.permute.xlu0 %2085
      %2088 = vset.pattern.permute.xlu0 4
      %2089 = vperm.xlu0 %2088, %v460
      %v2090 = vpop.permute.xlu0 %2089
      %2092 = vset.pattern.permute.xlu0 4
      %2093 = vperm.xlu0 %2092, %v461
      %v2094 = vpop.permute.xlu0 %2093
      %2096 = vset.pattern.permute.xlu0 4
      %2097 = vperm.xlu0 %2096, %v462
      %v2098 = vpop.permute.xlu0 %2097
      %2100 = vset.pattern.permute.xlu0 4
      %2101 = vperm.xlu0 %2100, %v463
      %v2102 = vpop.permute.xlu0 %2101
      %2104 = vset.pattern.permute.xlu0 4
      %2105 = vperm.xlu0 %2104, %v464
      %v2106 = vpop.permute.xlu0 %2105
      %2108 = vset.pattern.permute.xlu0 4
      %2109 = vperm.xlu0 %2108, %v465
      %v2110 = vpop.permute.xlu0 %2109
      %2112 = vset.pattern.permute.xlu0 4
      %2113 = vperm.xlu0 %2112, %v466
      %v2114 = vpop.permute.xlu0 %2113
      %2116 = vset.pattern.permute.xlu0 4
      %2117 = vperm.xlu0 %2116, %v467
      %v2118 = vpop.permute.xlu0 %2117
      %2120 = vset.pattern.permute.xlu0 4
      %2121 = vperm.xlu0 %2120, %v468
      %v2122 = vpop.permute.xlu0 %2121
      %2124 = vset.pattern.permute.xlu0 4
      %2125 = vperm.xlu0 %2124, %v469
      %v2126 = vpop.permute.xlu0 %2125
      %2128 = vset.pattern.permute.xlu0 4
      %2129 = vperm.xlu0 %2128, %v470
      %v2130 = vpop.permute.xlu0 %2129
      %2132 = vset.pattern.permute.xlu0 4
      %2133 = vperm.xlu0 %2132, %v471
      %v2134 = vpop.permute.xlu0 %2133
      %2136 = vset.pattern.permute.xlu0 4
      %2137 = vperm.xlu0 %2136, %v472
      %v2138 = vpop.permute.xlu0 %2137
      %2140 = vset.pattern.permute.xlu0 4
      %2141 = vperm.xlu0 %2140, %v473
      %v2142 = vpop.permute.xlu0 %2141
      %2144 = vset.pattern.permute.xlu0 4
      %2145 = vperm.xlu0 %2144, %v474
      %v2146 = vpop.permute.xlu0 %2145
      %2148 = vset.pattern.permute.xlu0 4
      %2149 = vperm.xlu0 %2148, %v475
      %v2150 = vpop.permute.xlu0 %2149
      %2152 = vset.pattern.permute.xlu0 4
      %2153 = vperm.xlu0 %2152, %v476
      %v2154 = vpop.permute.xlu0 %2153
      %2156 = vset.pattern.permute.xlu0 4
      %2157 = vperm.xlu0 %2156, %v477
      %v2158 = vpop.permute.xlu0 %2157
      %v2160 = vmul.f32 %v1196, %v2034
      %v2161 = vmul.f32 %v1197, %v2038
      %v2162 = vmul.f32 %v1198, %v2042
      %v2163 = vmul.f32 %v1199, %v2046
      %v2164 = vmul.f32 %v1200, %v2050
      %v2165 = vmul.f32 %v1201, %v2054
      %v2166 = vmul.f32 %v1202, %v2058
      %v2167 = vmul.f32 %v1203, %v2062
      %v2168 = vmul.f32 %v1204, %v2066
      %v2169 = vmul.f32 %v1205, %v2070
      %v2170 = vmul.f32 %v1206, %v2074
      %v2171 = vmul.f32 %v1207, %v2078
      %v2172 = vmul.f32 %v1208, %v2082
      %v2173 = vmul.f32 %v1209, %v2086
      %v2174 = vmul.f32 %v1210, %v2090
      %v2175 = vmul.f32 %v1211, %v2094
      %v2176 = vmul.f32 %v1212, %v2098
      %v2177 = vmul.f32 %v1213, %v2102
      %v2178 = vmul.f32 %v1214, %v2106
      %v2179 = vmul.f32 %v1215, %v2110
      %v2180 = vmul.f32 %v1216, %v2114
      %v2181 = vmul.f32 %v1217, %v2118
      %v2182 = vmul.f32 %v1218, %v2122
      %v2183 = vmul.f32 %v1219, %v2126
      %v2184 = vmul.f32 %v1220, %v2130
      %v2185 = vmul.f32 %v1221, %v2134
      %v2186 = vmul.f32 %v1222, %v2138
      %v2187 = vmul.f32 %v1223, %v2142
      %v2188 = vmul.f32 %v1224, %v2146
      %v2189 = vmul.f32 %v1225, %v2150
      %v2190 = vmul.f32 %v1226, %v2154
      %v2191 = vmul.f32 %v1227, %v2158
      %2192 = vset.pattern.permute.xlu0 5
      %2193 = vperm.xlu0 %2192, %v446
      %v2194 = vpop.permute.xlu0 %2193
      %2196 = vset.pattern.permute.xlu0 5
      %2197 = vperm.xlu0 %2196, %v447
      %v2198 = vpop.permute.xlu0 %2197
      %2200 = vset.pattern.permute.xlu0 5
      %2201 = vperm.xlu0 %2200, %v448
      %v2202 = vpop.permute.xlu0 %2201
      %2204 = vset.pattern.permute.xlu0 5
      %2205 = vperm.xlu0 %2204, %v449
      %v2206 = vpop.permute.xlu0 %2205
      %2208 = vset.pattern.permute.xlu0 5
      %2209 = vperm.xlu0 %2208, %v450
      %v2210 = vpop.permute.xlu0 %2209
      %2212 = vset.pattern.permute.xlu0 5
      %2213 = vperm.xlu0 %2212, %v451
      %v2214 = vpop.permute.xlu0 %2213
      %2216 = vset.pattern.permute.xlu0 5
      %2217 = vperm.xlu0 %2216, %v452
      %v2218 = vpop.permute.xlu0 %2217
      %2220 = vset.pattern.permute.xlu0 5
      %2221 = vperm.xlu0 %2220, %v453
      %v2222 = vpop.permute.xlu0 %2221
      %2224 = vset.pattern.permute.xlu0 5
      %2225 = vperm.xlu0 %2224, %v454
      %v2226 = vpop.permute.xlu0 %2225
      %2228 = vset.pattern.permute.xlu0 5
      %2229 = vperm.xlu0 %2228, %v455
      %v2230 = vpop.permute.xlu0 %2229
      %2232 = vset.pattern.permute.xlu0 5
      %2233 = vperm.xlu0 %2232, %v456
      %v2234 = vpop.permute.xlu0 %2233
      %2236 = vset.pattern.permute.xlu0 5
      %2237 = vperm.xlu0 %2236, %v457
      %v2238 = vpop.permute.xlu0 %2237
      %2240 = vset.pattern.permute.xlu0 5
      %2241 = vperm.xlu0 %2240, %v458
      %v2242 = vpop.permute.xlu0 %2241
      %2244 = vset.pattern.permute.xlu0 5
      %2245 = vperm.xlu0 %2244, %v459
      %v2246 = vpop.permute.xlu0 %2245
      %2248 = vset.pattern.permute.xlu0 5
      %2249 = vperm.xlu0 %2248, %v460
      %v2250 = vpop.permute.xlu0 %2249
      %2252 = vset.pattern.permute.xlu0 5
      %2253 = vperm.xlu0 %2252, %v461
      %v2254 = vpop.permute.xlu0 %2253
      %2256 = vset.pattern.permute.xlu0 5
      %2257 = vperm.xlu0 %2256, %v462
      %v2258 = vpop.permute.xlu0 %2257
      %2260 = vset.pattern.permute.xlu0 5
      %2261 = vperm.xlu0 %2260, %v463
      %v2262 = vpop.permute.xlu0 %2261
      %2264 = vset.pattern.permute.xlu0 5
      %2265 = vperm.xlu0 %2264, %v464
      %v2266 = vpop.permute.xlu0 %2265
      %2268 = vset.pattern.permute.xlu0 5
      %2269 = vperm.xlu0 %2268, %v465
      %v2270 = vpop.permute.xlu0 %2269
      %2272 = vset.pattern.permute.xlu0 5
      %2273 = vperm.xlu0 %2272, %v466
      %v2274 = vpop.permute.xlu0 %2273
      %2276 = vset.pattern.permute.xlu0 5
      %2277 = vperm.xlu0 %2276, %v467
      %v2278 = vpop.permute.xlu0 %2277
      %2280 = vset.pattern.permute.xlu0 5
      %2281 = vperm.xlu0 %2280, %v468
      %v2282 = vpop.permute.xlu0 %2281
      %2284 = vset.pattern.permute.xlu0 5
      %2285 = vperm.xlu0 %2284, %v469
      %v2286 = vpop.permute.xlu0 %2285
      %2288 = vset.pattern.permute.xlu0 5
      %2289 = vperm.xlu0 %2288, %v470
      %v2290 = vpop.permute.xlu0 %2289
      %2292 = vset.pattern.permute.xlu0 5
      %2293 = vperm.xlu0 %2292, %v471
      %v2294 = vpop.permute.xlu0 %2293
      %2296 = vset.pattern.permute.xlu0 5
      %2297 = vperm.xlu0 %2296, %v472
      %v2298 = vpop.permute.xlu0 %2297
      %2300 = vset.pattern.permute.xlu0 5
      %2301 = vperm.xlu0 %2300, %v473
      %v2302 = vpop.permute.xlu0 %2301
      %2304 = vset.pattern.permute.xlu0 5
      %2305 = vperm.xlu0 %2304, %v474
      %v2306 = vpop.permute.xlu0 %2305
      %2308 = vset.pattern.permute.xlu0 5
      %2309 = vperm.xlu0 %2308, %v475
      %v2310 = vpop.permute.xlu0 %2309
      %2312 = vset.pattern.permute.xlu0 5
      %2313 = vperm.xlu0 %2312, %v476
      %v2314 = vpop.permute.xlu0 %2313
      %2316 = vset.pattern.permute.xlu0 5
      %2317 = vperm.xlu0 %2316, %v477
      %v2318 = vpop.permute.xlu0 %2317
      %v2320 = vmul.f32 %v1710, %v2194
      %v2321 = vmul.f32 %v1709, %v2198
      %v2322 = vmul.f32 %v1708, %v2202
      %v2323 = vmul.f32 %v1707, %v2206
      %v2324 = vmul.f32 %v1706, %v2210
      %v2325 = vmul.f32 %v1705, %v2214
      %v2326 = vmul.f32 %v1704, %v2218
      %v2327 = vmul.f32 %v1703, %v2222
      %v2328 = vmul.f32 %v1702, %v2226
      %v2329 = vmul.f32 %v1701, %v2230
      %v2330 = vmul.f32 %v1700, %v2234
      %v2331 = vmul.f32 %v1699, %v2238
      %v2332 = vmul.f32 %v1698, %v2242
      %v2333 = vmul.f32 %v1697, %v2246
      %v2334 = vmul.f32 %v1696, %v2250
      %v2335 = vmul.f32 %v1695, %v2254
      %v2336 = vmul.f32 %v1694, %v2258
      %v2337 = vmul.f32 %v1693, %v2262
      %v2338 = vmul.f32 %v1692, %v2266
      %v2339 = vmul.f32 %v1691, %v2270
      %v2340 = vmul.f32 %v1690, %v2274
      %v2341 = vmul.f32 %v1689, %v2278
      %v2342 = vmul.f32 %v1688, %v2282
      %v2343 = vmul.f32 %v1687, %v2286
      %v2344 = vmul.f32 %v1686, %v2290
      %v2345 = vmul.f32 %v1685, %v2294
      %v2346 = vmul.f32 %v1684, %v2298
      %v2347 = vmul.f32 %v1683, %v2302
      %v2348 = vmul.f32 %v1682, %v2306
      %v2349 = vmul.f32 %v1681, %v2310
      %v2350 = vmul.f32 %v1680, %v2314
      %v2351 = vmul.f32 %v1711, %v2318
      %2352 = vset.pattern.permute.xlu0 6
      %2353 = vperm.xlu0 %2352, %v446
      %v2354 = vpop.permute.xlu0 %2353
      %2356 = vset.pattern.permute.xlu0 6
      %2357 = vperm.xlu0 %2356, %v447
      %v2358 = vpop.permute.xlu0 %2357
      %2360 = vset.pattern.permute.xlu0 6
      %2361 = vperm.xlu0 %2360, %v448
      %v2362 = vpop.permute.xlu0 %2361
      %2364 = vset.pattern.permute.xlu0 6
      %2365 = vperm.xlu0 %2364, %v449
      %v2366 = vpop.permute.xlu0 %2365
      %2368 = vset.pattern.permute.xlu0 6
      %2369 = vperm.xlu0 %2368, %v450
      %v2370 = vpop.permute.xlu0 %2369
      %2372 = vset.pattern.permute.xlu0 6
      %2373 = vperm.xlu0 %2372, %v451
      %v2374 = vpop.permute.xlu0 %2373
      %2376 = vset.pattern.permute.xlu0 6
      %2377 = vperm.xlu0 %2376, %v452
      %v2378 = vpop.permute.xlu0 %2377
      %2380 = vset.pattern.permute.xlu0 6
      %2381 = vperm.xlu0 %2380, %v453
      %v2382 = vpop.permute.xlu0 %2381
      %2384 = vset.pattern.permute.xlu0 6
      %2385 = vperm.xlu0 %2384, %v454
      %v2386 = vpop.permute.xlu0 %2385
      %2388 = vset.pattern.permute.xlu0 6
      %2389 = vperm.xlu0 %2388, %v455
      %v2390 = vpop.permute.xlu0 %2389
      %2392 = vset.pattern.permute.xlu0 6
      %2393 = vperm.xlu0 %2392, %v456
      %v2394 = vpop.permute.xlu0 %2393
      %2396 = vset.pattern.permute.xlu0 6
      %2397 = vperm.xlu0 %2396, %v457
      %v2398 = vpop.permute.xlu0 %2397
      %2400 = vset.pattern.permute.xlu0 6
      %2401 = vperm.xlu0 %2400, %v458
      %v2402 = vpop.permute.xlu0 %2401
      %2404 = vset.pattern.permute.xlu0 6
      %2405 = vperm.xlu0 %2404, %v459
      %v2406 = vpop.permute.xlu0 %2405
      %2408 = vset.pattern.permute.xlu0 6
      %2409 = vperm.xlu0 %2408, %v460
      %v2410 = vpop.permute.xlu0 %2409
      %2412 = vset.pattern.permute.xlu0 6
      %2413 = vperm.xlu0 %2412, %v461
      %v2414 = vpop.permute.xlu0 %2413
      %2416 = vset.pattern.permute.xlu0 6
      %2417 = vperm.xlu0 %2416, %v462
      %v2418 = vpop.permute.xlu0 %2417
      %2420 = vset.pattern.permute.xlu0 6
      %2421 = vperm.xlu0 %2420, %v463
      %v2422 = vpop.permute.xlu0 %2421
      %2424 = vset.pattern.permute.xlu0 6
      %2425 = vperm.xlu0 %2424, %v464
      %v2426 = vpop.permute.xlu0 %2425
      %2428 = vset.pattern.permute.xlu0 6
      %2429 = vperm.xlu0 %2428, %v465
      %v2430 = vpop.permute.xlu0 %2429
      %2432 = vset.pattern.permute.xlu0 6
      %2433 = vperm.xlu0 %2432, %v466
      %v2434 = vpop.permute.xlu0 %2433
      %2436 = vset.pattern.permute.xlu0 6
      %2437 = vperm.xlu0 %2436, %v467
      %v2438 = vpop.permute.xlu0 %2437
      %2440 = vset.pattern.permute.xlu0 6
      %2441 = vperm.xlu0 %2440, %v468
      %v2442 = vpop.permute.xlu0 %2441
      %2444 = vset.pattern.permute.xlu0 6
      %2445 = vperm.xlu0 %2444, %v469
      %v2446 = vpop.permute.xlu0 %2445
      %2448 = vset.pattern.permute.xlu0 6
      %2449 = vperm.xlu0 %2448, %v470
      %v2450 = vpop.permute.xlu0 %2449
      %2452 = vset.pattern.permute.xlu0 6
      %2453 = vperm.xlu0 %2452, %v471
      %v2454 = vpop.permute.xlu0 %2453
      %2456 = vset.pattern.permute.xlu0 6
      %2457 = vperm.xlu0 %2456, %v472
      %v2458 = vpop.permute.xlu0 %2457
      %2460 = vset.pattern.permute.xlu0 6
      %2461 = vperm.xlu0 %2460, %v473
      %v2462 = vpop.permute.xlu0 %2461
      %2464 = vset.pattern.permute.xlu0 6
      %2465 = vperm.xlu0 %2464, %v474
      %v2466 = vpop.permute.xlu0 %2465
      %2468 = vset.pattern.permute.xlu0 6
      %2469 = vperm.xlu0 %2468, %v475
      %v2470 = vpop.permute.xlu0 %2469
      %2472 = vset.pattern.permute.xlu0 6
      %2473 = vperm.xlu0 %2472, %v476
      %v2474 = vpop.permute.xlu0 %2473
      %2476 = vset.pattern.permute.xlu0 6
      %2477 = vperm.xlu0 %2476, %v477
      %v2478 = vpop.permute.xlu0 %2477
      %v2480 = vmul.f32 %v1292, %v2354
      %v2481 = vmul.f32 %v1291, %v2358
      %v2482 = vmul.f32 %v1290, %v2362
      %v2483 = vmul.f32 %v1289, %v2366
      %v2484 = vmul.f32 %v1288, %v2370
      %v2485 = vmul.f32 %v1287, %v2374
      %v2486 = vmul.f32 %v1286, %v2378
      %v2487 = vmul.f32 %v1285, %v2382
      %v2488 = vmul.f32 %v1284, %v2386
      %v2489 = vmul.f32 %v1283, %v2390
      %v2490 = vmul.f32 %v1282, %v2394
      %v2491 = vmul.f32 %v1281, %v2398
      %v2492 = vmul.f32 %v1280, %v2402
      %v2493 = vmul.f32 %v1279, %v2406
      %v2494 = vmul.f32 %v1278, %v2410
      %v2495 = vmul.f32 %v1277, %v2414
      %v2496 = vmul.f32 %v1276, %v2418
      %v2497 = vmul.f32 %v1275, %v2422
      %v2498 = vmul.f32 %v1274, %v2426
      %v2499 = vmul.f32 %v1273, %v2430
      %v2500 = vmul.f32 %v1272, %v2434
      %v2501 = vmul.f32 %v1271, %v2438
      %v2502 = vmul.f32 %v1270, %v2442
      %v2503 = vmul.f32 %v1269, %v2446
      %v2504 = vmul.f32 %v1268, %v2450
      %v2505 = vmul.f32 %v1267, %v2454
      %v2506 = vmul.f32 %v1266, %v2458
      %v2507 = vmul.f32 %v1265, %v2462
      %v2508 = vmul.f32 %v1264, %v2466
      %v2509 = vmul.f32 %v1263, %v2470
      %v2510 = vmul.f32 %v1294, %v2474
      %v2511 = vmul.f32 %v1293, %v2478
      %2512 = vset.pattern.permute.xlu0 7
      %2513 = vperm.xlu0 %2512, %v446
      %v2514 = vpop.permute.xlu0 %2513
      %2516 = vset.pattern.permute.xlu0 7
      %2517 = vperm.xlu0 %2516, %v447
      %v2518 = vpop.permute.xlu0 %2517
      %2520 = vset.pattern.permute.xlu0 7
      %2521 = vperm.xlu0 %2520, %v448
      %v2522 = vpop.permute.xlu0 %2521
      %2524 = vset.pattern.permute.xlu0 7
      %2525 = vperm.xlu0 %2524, %v449
      %v2526 = vpop.permute.xlu0 %2525
      %2528 = vset.pattern.permute.xlu0 7
      %2529 = vperm.xlu0 %2528, %v450
      %v2530 = vpop.permute.xlu0 %2529
      %2532 = vset.pattern.permute.xlu0 7
      %2533 = vperm.xlu0 %2532, %v451
      %v2534 = vpop.permute.xlu0 %2533
      %2536 = vset.pattern.permute.xlu0 7
      %2537 = vperm.xlu0 %2536, %v452
      %v2538 = vpop.permute.xlu0 %2537
      %2540 = vset.pattern.permute.xlu0 7
      %2541 = vperm.xlu0 %2540, %v453
      %v2542 = vpop.permute.xlu0 %2541
      %2544 = vset.pattern.permute.xlu0 7
      %2545 = vperm.xlu0 %2544, %v454
      %v2546 = vpop.permute.xlu0 %2545
      %2548 = vset.pattern.permute.xlu0 7
      %2549 = vperm.xlu0 %2548, %v455
      %v2550 = vpop.permute.xlu0 %2549
      %2552 = vset.pattern.permute.xlu0 7
      %2553 = vperm.xlu0 %2552, %v456
      %v2554 = vpop.permute.xlu0 %2553
      %2556 = vset.pattern.permute.xlu0 7
      %2557 = vperm.xlu0 %2556, %v457
      %v2558 = vpop.permute.xlu0 %2557
      %2560 = vset.pattern.permute.xlu0 7
      %2561 = vperm.xlu0 %2560, %v458
      %v2562 = vpop.permute.xlu0 %2561
      %2564 = vset.pattern.permute.xlu0 7
      %2565 = vperm.xlu0 %2564, %v459
      %v2566 = vpop.permute.xlu0 %2565
      %2568 = vset.pattern.permute.xlu0 7
      %2569 = vperm.xlu0 %2568, %v460
      %v2570 = vpop.permute.xlu0 %2569
      %2572 = vset.pattern.permute.xlu0 7
      %2573 = vperm.xlu0 %2572, %v461
      %v2574 = vpop.permute.xlu0 %2573
      %2576 = vset.pattern.permute.xlu0 7
      %2577 = vperm.xlu0 %2576, %v462
      %v2578 = vpop.permute.xlu0 %2577
      %2580 = vset.pattern.permute.xlu0 7
      %2581 = vperm.xlu0 %2580, %v463
      %v2582 = vpop.permute.xlu0 %2581
      %2584 = vset.pattern.permute.xlu0 7
      %2585 = vperm.xlu0 %2584, %v464
      %v2586 = vpop.permute.xlu0 %2585
      %2588 = vset.pattern.permute.xlu0 7
      %2589 = vperm.xlu0 %2588, %v465
      %v2590 = vpop.permute.xlu0 %2589
      %2592 = vset.pattern.permute.xlu0 7
      %2593 = vperm.xlu0 %2592, %v466
      %v2594 = vpop.permute.xlu0 %2593
      %2596 = vset.pattern.permute.xlu0 7
      %2597 = vperm.xlu0 %2596, %v467
      %v2598 = vpop.permute.xlu0 %2597
      %2600 = vset.pattern.permute.xlu0 7
      %2601 = vperm.xlu0 %2600, %v468
      %v2602 = vpop.permute.xlu0 %2601
      %2604 = vset.pattern.permute.xlu0 7
      %2605 = vperm.xlu0 %2604, %v469
      %v2606 = vpop.permute.xlu0 %2605
      %2608 = vset.pattern.permute.xlu0 7
      %2609 = vperm.xlu0 %2608, %v470
      %v2610 = vpop.permute.xlu0 %2609
      %2612 = vset.pattern.permute.xlu0 7
      %2613 = vperm.xlu0 %2612, %v471
      %v2614 = vpop.permute.xlu0 %2613
      %2616 = vset.pattern.permute.xlu0 7
      %2617 = vperm.xlu0 %2616, %v472
      %v2618 = vpop.permute.xlu0 %2617
      %2620 = vset.pattern.permute.xlu0 7
      %2621 = vperm.xlu0 %2620, %v473
      %v2622 = vpop.permute.xlu0 %2621
      %2624 = vset.pattern.permute.xlu0 7
      %2625 = vperm.xlu0 %2624, %v474
      %v2626 = vpop.permute.xlu0 %2625
      %2628 = vset.pattern.permute.xlu0 7
      %2629 = vperm.xlu0 %2628, %v475
      %v2630 = vpop.permute.xlu0 %2629
      %2632 = vset.pattern.permute.xlu0 7
      %2633 = vperm.xlu0 %2632, %v476
      %v2634 = vpop.permute.xlu0 %2633
      %2636 = vset.pattern.permute.xlu0 7
      %2637 = vperm.xlu0 %2636, %v477
      %v2638 = vpop.permute.xlu0 %2637
      %v2640 = vmul.f32 %v1198, %v2514
      %v2641 = vmul.f32 %v1199, %v2518
      %v2642 = vmul.f32 %v1200, %v2522
      %v2643 = vmul.f32 %v1201, %v2526
      %v2644 = vmul.f32 %v1202, %v2530
      %v2645 = vmul.f32 %v1203, %v2534
      %v2646 = vmul.f32 %v1204, %v2538
      %v2647 = vmul.f32 %v1205, %v2542
      %v2648 = vmul.f32 %v1206, %v2546
      %v2649 = vmul.f32 %v1207, %v2550
      %v2650 = vmul.f32 %v1208, %v2554
      %v2651 = vmul.f32 %v1209, %v2558
      %v2652 = vmul.f32 %v1210, %v2562
      %v2653 = vmul.f32 %v1211, %v2566
      %v2654 = vmul.f32 %v1212, %v2570
      %v2655 = vmul.f32 %v1213, %v2574
      %v2656 = vmul.f32 %v1214, %v2578
      %v2657 = vmul.f32 %v1215, %v2582
      %v2658 = vmul.f32 %v1216, %v2586
      %v2659 = vmul.f32 %v1217, %v2590
      %v2660 = vmul.f32 %v1218, %v2594
      %v2661 = vmul.f32 %v1219, %v2598
      %v2662 = vmul.f32 %v1220, %v2602
      %v2663 = vmul.f32 %v1221, %v2606
      %v2664 = vmul.f32 %v1222, %v2610
      %v2665 = vmul.f32 %v1223, %v2614
      %v2666 = vmul.f32 %v1224, %v2618
      %v2667 = vmul.f32 %v1225, %v2622
      %v2668 = vmul.f32 %v1226, %v2626
      %v2669 = vmul.f32 %v1227, %v2630
      %v2670 = vmul.f32 %v1196, %v2634
      %v2671 = vmul.f32 %v1197, %v2638
      %2672 = vset.pattern.permute.xlu0 8
      %2673 = vperm.xlu0 %2672, %v446
      %v2674 = vpop.permute.xlu0 %2673
      %2676 = vset.pattern.permute.xlu0 8
      %2677 = vperm.xlu0 %2676, %v447
      %v2678 = vpop.permute.xlu0 %2677
      %2680 = vset.pattern.permute.xlu0 8
      %2681 = vperm.xlu0 %2680, %v448
      %v2682 = vpop.permute.xlu0 %2681
      %2684 = vset.pattern.permute.xlu0 8
      %2685 = vperm.xlu0 %2684, %v449
      %v2686 = vpop.permute.xlu0 %2685
      %2688 = vset.pattern.permute.xlu0 8
      %2689 = vperm.xlu0 %2688, %v450
      %v2690 = vpop.permute.xlu0 %2689
      %2692 = vset.pattern.permute.xlu0 8
      %2693 = vperm.xlu0 %2692, %v451
      %v2694 = vpop.permute.xlu0 %2693
      %2696 = vset.pattern.permute.xlu0 8
      %2697 = vperm.xlu0 %2696, %v452
      %v2698 = vpop.permute.xlu0 %2697
      %2700 = vset.pattern.permute.xlu0 8
      %2701 = vperm.xlu0 %2700, %v453
      %v2702 = vpop.permute.xlu0 %2701
      %2704 = vset.pattern.permute.xlu0 8
      %2705 = vperm.xlu0 %2704, %v454
      %v2706 = vpop.permute.xlu0 %2705
      %2708 = vset.pattern.permute.xlu0 8
      %2709 = vperm.xlu0 %2708, %v455
      %v2710 = vpop.permute.xlu0 %2709
      %2712 = vset.pattern.permute.xlu0 8
      %2713 = vperm.xlu0 %2712, %v456
      %v2714 = vpop.permute.xlu0 %2713
      %2716 = vset.pattern.permute.xlu0 8
      %2717 = vperm.xlu0 %2716, %v457
      %v2718 = vpop.permute.xlu0 %2717
      %2720 = vset.pattern.permute.xlu0 8
      %2721 = vperm.xlu0 %2720, %v458
      %v2722 = vpop.permute.xlu0 %2721
      %2724 = vset.pattern.permute.xlu0 8
      %2725 = vperm.xlu0 %2724, %v459
      %v2726 = vpop.permute.xlu0 %2725
      %2728 = vset.pattern.permute.xlu0 8
      %2729 = vperm.xlu0 %2728, %v460
      %v2730 = vpop.permute.xlu0 %2729
      %2732 = vset.pattern.permute.xlu0 8
      %2733 = vperm.xlu0 %2732, %v461
      %v2734 = vpop.permute.xlu0 %2733
      %2736 = vset.pattern.permute.xlu0 8
      %2737 = vperm.xlu0 %2736, %v462
      %v2738 = vpop.permute.xlu0 %2737
      %2740 = vset.pattern.permute.xlu0 8
      %2741 = vperm.xlu0 %2740, %v463
      %v2742 = vpop.permute.xlu0 %2741
      %2744 = vset.pattern.permute.xlu0 8
      %2745 = vperm.xlu0 %2744, %v464
      %v2746 = vpop.permute.xlu0 %2745
      %2748 = vset.pattern.permute.xlu0 8
      %2749 = vperm.xlu0 %2748, %v465
      %v2750 = vpop.permute.xlu0 %2749
      %2752 = vset.pattern.permute.xlu0 8
      %2753 = vperm.xlu0 %2752, %v466
      %v2754 = vpop.permute.xlu0 %2753
      %2756 = vset.pattern.permute.xlu0 8
      %2757 = vperm.xlu0 %2756, %v467
      %v2758 = vpop.permute.xlu0 %2757
      %2760 = vset.pattern.permute.xlu0 8
      %2761 = vperm.xlu0 %2760, %v468
      %v2762 = vpop.permute.xlu0 %2761
      %2764 = vset.pattern.permute.xlu0 8
      %2765 = vperm.xlu0 %2764, %v469
      %v2766 = vpop.permute.xlu0 %2765
      %2768 = vset.pattern.permute.xlu0 8
      %2769 = vperm.xlu0 %2768, %v470
      %v2770 = vpop.permute.xlu0 %2769
      %2772 = vset.pattern.permute.xlu0 8
      %2773 = vperm.xlu0 %2772, %v471
      %v2774 = vpop.permute.xlu0 %2773
      %2776 = vset.pattern.permute.xlu0 8
      %2777 = vperm.xlu0 %2776, %v472
      %v2778 = vpop.permute.xlu0 %2777
      %2780 = vset.pattern.permute.xlu0 8
      %2781 = vperm.xlu0 %2780, %v473
      %v2782 = vpop.permute.xlu0 %2781
      %2784 = vset.pattern.permute.xlu0 8
      %2785 = vperm.xlu0 %2784, %v474
      %v2786 = vpop.permute.xlu0 %2785
      %2788 = vset.pattern.permute.xlu0 8
      %2789 = vperm.xlu0 %2788, %v475
      %v2790 = vpop.permute.xlu0 %2789
      %2792 = vset.pattern.permute.xlu0 8
      %2793 = vperm.xlu0 %2792, %v476
      %v2794 = vpop.permute.xlu0 %2793
      %2796 = vset.pattern.permute.xlu0 8
      %2797 = vperm.xlu0 %2796, %v477
      %v2798 = vpop.permute.xlu0 %2797
      %v2800 = vmul.f32 %v1708, %v2674
      %v2801 = vmul.f32 %v1707, %v2678
      %v2802 = vmul.f32 %v1706, %v2682
      %v2803 = vmul.f32 %v1705, %v2686
      %v2804 = vmul.f32 %v1704, %v2690
      %v2805 = vmul.f32 %v1703, %v2694
      %v2806 = vmul.f32 %v1702, %v2698
      %v2807 = vmul.f32 %v1701, %v2702
      %v2808 = vmul.f32 %v1700, %v2706
      %v2809 = vmul.f32 %v1699, %v2710
      %v2810 = vmul.f32 %v1698, %v2714
      %v2811 = vmul.f32 %v1697, %v2718
      %v2812 = vmul.f32 %v1696, %v2722
      %v2813 = vmul.f32 %v1695, %v2726
      %v2814 = vmul.f32 %v1694, %v2730
      %v2815 = vmul.f32 %v1693, %v2734
      %v2816 = vmul.f32 %v1692, %v2738
      %v2817 = vmul.f32 %v1691, %v2742
      %v2818 = vmul.f32 %v1690, %v2746
      %v2819 = vmul.f32 %v1689, %v2750
      %v2820 = vmul.f32 %v1688, %v2754
      %v2821 = vmul.f32 %v1687, %v2758
      %v2822 = vmul.f32 %v1686, %v2762
      %v2823 = vmul.f32 %v1685, %v2766
      %v2824 = vmul.f32 %v1684, %v2770
      %v2825 = vmul.f32 %v1683, %v2774
      %v2826 = vmul.f32 %v1682, %v2778
      %v2827 = vmul.f32 %v1681, %v2782
      %v2828 = vmul.f32 %v1680, %v2786
      %v2829 = vmul.f32 %v1711, %v2790
      %v2830 = vmul.f32 %v1710, %v2794
      %v2831 = vmul.f32 %v1709, %v2798
      %2864 = vrot.lane.b32.xlu0 %v1615, 8
      %v2865 = vpop.permute.xlu0 %2864
      %2866 = vrot.lane.b32.xlu0 %v1616, 8
      %v2867 = vpop.permute.xlu0 %2866
      %2868 = vrot.lane.b32.xlu0 %v1617, 8
      %v2869 = vpop.permute.xlu0 %2868
      %2870 = vrot.lane.b32.xlu0 %v1618, 8
      %v2871 = vpop.permute.xlu0 %2870
      %2872 = vrot.lane.b32.xlu0 %v1619, 8
      %v2873 = vpop.permute.xlu0 %2872
      %2874 = vrot.lane.b32.xlu0 %v1620, 8
      %v2875 = vpop.permute.xlu0 %2874
      %2876 = vrot.lane.b32.xlu0 %v1621, 8
      %v2877 = vpop.permute.xlu0 %2876
      %2878 = vrot.lane.b32.xlu0 %v1622, 8
      %v2879 = vpop.permute.xlu0 %2878
      %2880 = vrot.lane.b32.xlu0 %v1623, 8
      %v2881 = vpop.permute.xlu0 %2880
      %2882 = vrot.lane.b32.xlu0 %v1624, 8
      %v2883 = vpop.permute.xlu0 %2882
      %2884 = vrot.lane.b32.xlu0 %v1625, 8
      %v2885 = vpop.permute.xlu0 %2884
      %2886 = vrot.lane.b32.xlu0 %v1626, 8
      %v2887 = vpop.permute.xlu0 %2886
      %2888 = vrot.lane.b32.xlu0 %v1627, 8
      %v2889 = vpop.permute.xlu0 %2888
      %2890 = vrot.lane.b32.xlu0 %v1628, 8
      %v2891 = vpop.permute.xlu0 %2890
      %2892 = vrot.lane.b32.xlu0 %v1629, 8
      %v2893 = vpop.permute.xlu0 %2892
      %2894 = vrot.lane.b32.xlu0 %v1630, 8
      %v2895 = vpop.permute.xlu0 %2894
      %2896 = vrot.lane.b32.xlu0 %v1631, 8
      %v2897 = vpop.permute.xlu0 %2896
      %2898 = vrot.lane.b32.xlu0 %v1632, 8
      %v2899 = vpop.permute.xlu0 %2898
      %2900 = vrot.lane.b32.xlu0 %v1633, 8
      %v2901 = vpop.permute.xlu0 %2900
      %2902 = vrot.lane.b32.xlu0 %v1634, 8
      %v2903 = vpop.permute.xlu0 %2902
      %2904 = vrot.lane.b32.xlu0 %v1635, 8
      %v2905 = vpop.permute.xlu0 %2904
      %2906 = vrot.lane.b32.xlu0 %v1636, 8
      %v2907 = vpop.permute.xlu0 %2906
      %2908 = vrot.lane.b32.xlu0 %v1637, 8
      %v2909 = vpop.permute.xlu0 %2908
      %2910 = vrot.lane.b32.xlu0 %v1638, 8
      %v2911 = vpop.permute.xlu0 %2910
      %2912 = vrot.lane.b32.xlu0 %v1639, 8
      %v2913 = vpop.permute.xlu0 %2912
      %2914 = vrot.lane.b32.xlu0 %v1640, 8
      %v2915 = vpop.permute.xlu0 %2914
      %2916 = vrot.lane.b32.xlu0 %v1641, 8
      %v2917 = vpop.permute.xlu0 %2916
      %2918 = vrot.lane.b32.xlu0 %v1642, 8
      %v2919 = vpop.permute.xlu0 %2918
      %2920 = vrot.lane.b32.xlu0 %v1643, 8
      %v2921 = vpop.permute.xlu0 %2920
      %2922 = vrot.lane.b32.xlu0 %v1644, 8
      %v2923 = vpop.permute.xlu0 %2922
      %2924 = vrot.lane.b32.xlu0 %v1645, 8
      %v2925 = vpop.permute.xlu0 %2924
      %2926 = vrot.lane.b32.xlu0 %v1646, 8
      %v2927 = vpop.permute.xlu0 %2926
      %2992 = vrot.lane.b32.xlu0 %v1840, 16
      %v2993 = vpop.permute.xlu0 %2992
      %2994 = vrot.lane.b32.xlu0 %v1841, 16
      %v2995 = vpop.permute.xlu0 %2994
      %2996 = vrot.lane.b32.xlu0 %v1842, 16
      %v2997 = vpop.permute.xlu0 %2996
      %2998 = vrot.lane.b32.xlu0 %v1843, 16
      %v2999 = vpop.permute.xlu0 %2998
      %3000 = vrot.lane.b32.xlu0 %v1844, 16
      %v3001 = vpop.permute.xlu0 %3000
      %3002 = vrot.lane.b32.xlu0 %v1845, 16
      %v3003 = vpop.permute.xlu0 %3002
      %3004 = vrot.lane.b32.xlu0 %v1846, 16
      %v3005 = vpop.permute.xlu0 %3004
      %3006 = vrot.lane.b32.xlu0 %v1847, 16
      %v3007 = vpop.permute.xlu0 %3006
      %3008 = vrot.lane.b32.xlu0 %v1848, 16
      %v3009 = vpop.permute.xlu0 %3008
      %3010 = vrot.lane.b32.xlu0 %v1849, 16
      %v3011 = vpop.permute.xlu0 %3010
      %3012 = vrot.lane.b32.xlu0 %v1850, 16
      %v3013 = vpop.permute.xlu0 %3012
      %3014 = vrot.lane.b32.xlu0 %v1851, 16
      %v3015 = vpop.permute.xlu0 %3014
      %3016 = vrot.lane.b32.xlu0 %v1852, 16
      %v3017 = vpop.permute.xlu0 %3016
      %3018 = vrot.lane.b32.xlu0 %v1853, 16
      %v3019 = vpop.permute.xlu0 %3018
      %3020 = vrot.lane.b32.xlu0 %v1854, 16
      %v3021 = vpop.permute.xlu0 %3020
      %3022 = vrot.lane.b32.xlu0 %v1855, 16
      %v3023 = vpop.permute.xlu0 %3022
      %3024 = vrot.lane.b32.xlu0 %v1856, 16
      %v3025 = vpop.permute.xlu0 %3024
      %3026 = vrot.lane.b32.xlu0 %v1857, 16
      %v3027 = vpop.permute.xlu0 %3026
      %3028 = vrot.lane.b32.xlu0 %v1858, 16
      %v3029 = vpop.permute.xlu0 %3028
      %3030 = vrot.lane.b32.xlu0 %v1859, 16
      %v3031 = vpop.permute.xlu0 %3030
      %3032 = vrot.lane.b32.xlu0 %v1860, 16
      %v3033 = vpop.permute.xlu0 %3032
      %3034 = vrot.lane.b32.xlu0 %v1861, 16
      %v3035 = vpop.permute.xlu0 %3034
      %3036 = vrot.lane.b32.xlu0 %v1862, 16
      %v3037 = vpop.permute.xlu0 %3036
      %3038 = vrot.lane.b32.xlu0 %v1863, 16
      %v3039 = vpop.permute.xlu0 %3038
      %3040 = vrot.lane.b32.xlu0 %v1864, 16
      %v3041 = vpop.permute.xlu0 %3040
      %3042 = vrot.lane.b32.xlu0 %v1865, 16
      %v3043 = vpop.permute.xlu0 %3042
      %3044 = vrot.lane.b32.xlu0 %v1866, 16
      %v3045 = vpop.permute.xlu0 %3044
      %3046 = vrot.lane.b32.xlu0 %v1867, 16
      %v3047 = vpop.permute.xlu0 %3046
      %3048 = vrot.lane.b32.xlu0 %v1868, 16
      %v3049 = vpop.permute.xlu0 %3048
      %3050 = vrot.lane.b32.xlu0 %v1869, 16
      %v3051 = vpop.permute.xlu0 %3050
      %3052 = vrot.lane.b32.xlu0 %v1870, 16
      %v3053 = vpop.permute.xlu0 %3052
      %3054 = vrot.lane.b32.xlu0 %v1871, 16
      %v3055 = vpop.permute.xlu0 %3054
      %3120 = vrot.lane.b32.xlu0 %v2000, 24
      %v3121 = vpop.permute.xlu0 %3120
      %3122 = vrot.lane.b32.xlu0 %v2001, 24
      %v3123 = vpop.permute.xlu0 %3122
      %3124 = vrot.lane.b32.xlu0 %v2002, 24
      %v3125 = vpop.permute.xlu0 %3124
      %3126 = vrot.lane.b32.xlu0 %v2003, 24
      %v3127 = vpop.permute.xlu0 %3126
      %3128 = vrot.lane.b32.xlu0 %v2004, 24
      %v3129 = vpop.permute.xlu0 %3128
      %3130 = vrot.lane.b32.xlu0 %v2005, 24
      %v3131 = vpop.permute.xlu0 %3130
      %3132 = vrot.lane.b32.xlu0 %v2006, 24
      %v3133 = vpop.permute.xlu0 %3132
      %3134 = vrot.lane.b32.xlu0 %v2007, 24
      %v3135 = vpop.permute.xlu0 %3134
      %3136 = vrot.lane.b32.xlu0 %v2008, 24
      %v3137 = vpop.permute.xlu0 %3136
      %3138 = vrot.lane.b32.xlu0 %v2009, 24
      %v3139 = vpop.permute.xlu0 %3138
      %3140 = vrot.lane.b32.xlu0 %v2010, 24
      %v3141 = vpop.permute.xlu0 %3140
      %3142 = vrot.lane.b32.xlu0 %v2011, 24
      %v3143 = vpop.permute.xlu0 %3142
      %3144 = vrot.lane.b32.xlu0 %v2012, 24
      %v3145 = vpop.permute.xlu0 %3144
      %3146 = vrot.lane.b32.xlu0 %v2013, 24
      %v3147 = vpop.permute.xlu0 %3146
      %3148 = vrot.lane.b32.xlu0 %v2014, 24
      %v3149 = vpop.permute.xlu0 %3148
      %3150 = vrot.lane.b32.xlu0 %v2015, 24
      %v3151 = vpop.permute.xlu0 %3150
      %3152 = vrot.lane.b32.xlu0 %v2016, 24
      %v3153 = vpop.permute.xlu0 %3152
      %3154 = vrot.lane.b32.xlu0 %v2017, 24
      %v3155 = vpop.permute.xlu0 %3154
      %3156 = vrot.lane.b32.xlu0 %v2018, 24
      %v3157 = vpop.permute.xlu0 %3156
      %3158 = vrot.lane.b32.xlu0 %v2019, 24
      %v3159 = vpop.permute.xlu0 %3158
      %3160 = vrot.lane.b32.xlu0 %v2020, 24
      %v3161 = vpop.permute.xlu0 %3160
      %3162 = vrot.lane.b32.xlu0 %v2021, 24
      %v3163 = vpop.permute.xlu0 %3162
      %3164 = vrot.lane.b32.xlu0 %v2022, 24
      %v3165 = vpop.permute.xlu0 %3164
      %3166 = vrot.lane.b32.xlu0 %v2023, 24
      %v3167 = vpop.permute.xlu0 %3166
      %3168 = vrot.lane.b32.xlu0 %v2024, 24
      %v3169 = vpop.permute.xlu0 %3168
      %3170 = vrot.lane.b32.xlu0 %v2025, 24
      %v3171 = vpop.permute.xlu0 %3170
      %3172 = vrot.lane.b32.xlu0 %v2026, 24
      %v3173 = vpop.permute.xlu0 %3172
      %3174 = vrot.lane.b32.xlu0 %v2027, 24
      %v3175 = vpop.permute.xlu0 %3174
      %3176 = vrot.lane.b32.xlu0 %v2028, 24
      %v3177 = vpop.permute.xlu0 %3176
      %3178 = vrot.lane.b32.xlu0 %v2029, 24
      %v3179 = vpop.permute.xlu0 %3178
      %3180 = vrot.lane.b32.xlu0 %v2030, 24
      %v3181 = vpop.permute.xlu0 %3180
      %3182 = vrot.lane.b32.xlu0 %v2031, 24
      %v3183 = vpop.permute.xlu0 %3182
      %3248 = vrot.lane.b32.xlu0 %v2160, 32
      %v3249 = vpop.permute.xlu0 %3248
      %3250 = vrot.lane.b32.xlu0 %v2161, 32
      %v3251 = vpop.permute.xlu0 %3250
      %3252 = vrot.lane.b32.xlu0 %v2162, 32
      %v3253 = vpop.permute.xlu0 %3252
      %3254 = vrot.lane.b32.xlu0 %v2163, 32
      %v3255 = vpop.permute.xlu0 %3254
      %3256 = vrot.lane.b32.xlu0 %v2164, 32
      %v3257 = vpop.permute.xlu0 %3256
      %3258 = vrot.lane.b32.xlu0 %v2165, 32
      %v3259 = vpop.permute.xlu0 %3258
      %3260 = vrot.lane.b32.xlu0 %v2166, 32
      %v3261 = vpop.permute.xlu0 %3260
      %3262 = vrot.lane.b32.xlu0 %v2167, 32
      %v3263 = vpop.permute.xlu0 %3262
      %3264 = vrot.lane.b32.xlu0 %v2168, 32
      %v3265 = vpop.permute.xlu0 %3264
      %3266 = vrot.lane.b32.xlu0 %v2169, 32
      %v3267 = vpop.permute.xlu0 %3266
      %3268 = vrot.lane.b32.xlu0 %v2170, 32
      %v3269 = vpop.permute.xlu0 %3268
      %3270 = vrot.lane.b32.xlu0 %v2171, 32
      %v3271 = vpop.permute.xlu0 %3270
      %3272 = vrot.lane.b32.xlu0 %v2172, 32
      %v3273 = vpop.permute.xlu0 %3272
      %3274 = vrot.lane.b32.xlu0 %v2173, 32
      %v3275 = vpop.permute.xlu0 %3274
      %3276 = vrot.lane.b32.xlu0 %v2174, 32
      %v3277 = vpop.permute.xlu0 %3276
      %3278 = vrot.lane.b32.xlu0 %v2175, 32
      %v3279 = vpop.permute.xlu0 %3278
      %3280 = vrot.lane.b32.xlu0 %v2176, 32
      %v3281 = vpop.permute.xlu0 %3280
      %3282 = vrot.lane.b32.xlu0 %v2177, 32
      %v3283 = vpop.permute.xlu0 %3282
      %3284 = vrot.lane.b32.xlu0 %v2178, 32
      %v3285 = vpop.permute.xlu0 %3284
      %3286 = vrot.lane.b32.xlu0 %v2179, 32
      %v3287 = vpop.permute.xlu0 %3286
      %3288 = vrot.lane.b32.xlu0 %v2180, 32
      %v3289 = vpop.permute.xlu0 %3288
      %3290 = vrot.lane.b32.xlu0 %v2181, 32
      %v3291 = vpop.permute.xlu0 %3290
      %3292 = vrot.lane.b32.xlu0 %v2182, 32
      %v3293 = vpop.permute.xlu0 %3292
      %3294 = vrot.lane.b32.xlu0 %v2183, 32
      %v3295 = vpop.permute.xlu0 %3294
      %3296 = vrot.lane.b32.xlu0 %v2184, 32
      %v3297 = vpop.permute.xlu0 %3296
      %3298 = vrot.lane.b32.xlu0 %v2185, 32
      %v3299 = vpop.permute.xlu0 %3298
      %3300 = vrot.lane.b32.xlu0 %v2186, 32
      %v3301 = vpop.permute.xlu0 %3300
      %3302 = vrot.lane.b32.xlu0 %v2187, 32
      %v3303 = vpop.permute.xlu0 %3302
      %3304 = vrot.lane.b32.xlu0 %v2188, 32
      %v3305 = vpop.permute.xlu0 %3304
      %3306 = vrot.lane.b32.xlu0 %v2189, 32
      %v3307 = vpop.permute.xlu0 %3306
      %3308 = vrot.lane.b32.xlu0 %v2190, 32
      %v3309 = vpop.permute.xlu0 %3308
      %3310 = vrot.lane.b32.xlu0 %v2191, 32
      %v3311 = vpop.permute.xlu0 %3310
      %3376 = vrot.lane.b32.xlu0 %v2320, 40
      %v3377 = vpop.permute.xlu0 %3376
      %3378 = vrot.lane.b32.xlu0 %v2321, 40
      %v3379 = vpop.permute.xlu0 %3378
      %3380 = vrot.lane.b32.xlu0 %v2322, 40
      %v3381 = vpop.permute.xlu0 %3380
      %3382 = vrot.lane.b32.xlu0 %v2323, 40
      %v3383 = vpop.permute.xlu0 %3382
      %3384 = vrot.lane.b32.xlu0 %v2324, 40
      %v3385 = vpop.permute.xlu0 %3384
      %3386 = vrot.lane.b32.xlu0 %v2325, 40
      %v3387 = vpop.permute.xlu0 %3386
      %3388 = vrot.lane.b32.xlu0 %v2326, 40
      %v3389 = vpop.permute.xlu0 %3388
      %3390 = vrot.lane.b32.xlu0 %v2327, 40
      %v3391 = vpop.permute.xlu0 %3390
      %3392 = vrot.lane.b32.xlu0 %v2328, 40
      %v3393 = vpop.permute.xlu0 %3392
      %3394 = vrot.lane.b32.xlu0 %v2329, 40
      %v3395 = vpop.permute.xlu0 %3394
      %3396 = vrot.lane.b32.xlu0 %v2330, 40
      %v3397 = vpop.permute.xlu0 %3396
      %3398 = vrot.lane.b32.xlu0 %v2331, 40
      %v3399 = vpop.permute.xlu0 %3398
      %3400 = vrot.lane.b32.xlu0 %v2332, 40
      %v3401 = vpop.permute.xlu0 %3400
      %3402 = vrot.lane.b32.xlu0 %v2333, 40
      %v3403 = vpop.permute.xlu0 %3402
      %3404 = vrot.lane.b32.xlu0 %v2334, 40
      %v3405 = vpop.permute.xlu0 %3404
      %3406 = vrot.lane.b32.xlu0 %v2335, 40
      %v3407 = vpop.permute.xlu0 %3406
      %3408 = vrot.lane.b32.xlu0 %v2336, 40
      %v3409 = vpop.permute.xlu0 %3408
      %3410 = vrot.lane.b32.xlu0 %v2337, 40
      %v3411 = vpop.permute.xlu0 %3410
      %3412 = vrot.lane.b32.xlu0 %v2338, 40
      %v3413 = vpop.permute.xlu0 %3412
      %3414 = vrot.lane.b32.xlu0 %v2339, 40
      %v3415 = vpop.permute.xlu0 %3414
      %3416 = vrot.lane.b32.xlu0 %v2340, 40
      %v3417 = vpop.permute.xlu0 %3416
      %3418 = vrot.lane.b32.xlu0 %v2341, 40
      %v3419 = vpop.permute.xlu0 %3418
      %3420 = vrot.lane.b32.xlu0 %v2342, 40
      %v3421 = vpop.permute.xlu0 %3420
      %3422 = vrot.lane.b32.xlu0 %v2343, 40
      %v3423 = vpop.permute.xlu0 %3422
      %3424 = vrot.lane.b32.xlu0 %v2344, 40
      %v3425 = vpop.permute.xlu0 %3424
      %3426 = vrot.lane.b32.xlu0 %v2345, 40
      %v3427 = vpop.permute.xlu0 %3426
      %3428 = vrot.lane.b32.xlu0 %v2346, 40
      %v3429 = vpop.permute.xlu0 %3428
      %3430 = vrot.lane.b32.xlu0 %v2347, 40
      %v3431 = vpop.permute.xlu0 %3430
      %3432 = vrot.lane.b32.xlu0 %v2348, 40
      %v3433 = vpop.permute.xlu0 %3432
      %3434 = vrot.lane.b32.xlu0 %v2349, 40
      %v3435 = vpop.permute.xlu0 %3434
      %3436 = vrot.lane.b32.xlu0 %v2350, 40
      %v3437 = vpop.permute.xlu0 %3436
      %3438 = vrot.lane.b32.xlu0 %v2351, 40
      %v3439 = vpop.permute.xlu0 %3438
      %3504 = vrot.lane.b32.xlu0 %v2480, 48
      %v3505 = vpop.permute.xlu0 %3504
      %3506 = vrot.lane.b32.xlu0 %v2481, 48
      %v3507 = vpop.permute.xlu0 %3506
      %3508 = vrot.lane.b32.xlu0 %v2482, 48
      %v3509 = vpop.permute.xlu0 %3508
      %3510 = vrot.lane.b32.xlu0 %v2483, 48
      %v3511 = vpop.permute.xlu0 %3510
      %3512 = vrot.lane.b32.xlu0 %v2484, 48
      %v3513 = vpop.permute.xlu0 %3512
      %3514 = vrot.lane.b32.xlu0 %v2485, 48
      %v3515 = vpop.permute.xlu0 %3514
      %3516 = vrot.lane.b32.xlu0 %v2486, 48
      %v3517 = vpop.permute.xlu0 %3516
      %3518 = vrot.lane.b32.xlu0 %v2487, 48
      %v3519 = vpop.permute.xlu0 %3518
      %3520 = vrot.lane.b32.xlu0 %v2488, 48
      %v3521 = vpop.permute.xlu0 %3520
      %3522 = vrot.lane.b32.xlu0 %v2489, 48
      %v3523 = vpop.permute.xlu0 %3522
      %3524 = vrot.lane.b32.xlu0 %v2490, 48
      %v3525 = vpop.permute.xlu0 %3524
      %3526 = vrot.lane.b32.xlu0 %v2491, 48
      %v3527 = vpop.permute.xlu0 %3526
      %3528 = vrot.lane.b32.xlu0 %v2492, 48
      %v3529 = vpop.permute.xlu0 %3528
      %3530 = vrot.lane.b32.xlu0 %v2493, 48
      %v3531 = vpop.permute.xlu0 %3530
      %3532 = vrot.lane.b32.xlu0 %v2494, 48
      %v3533 = vpop.permute.xlu0 %3532
      %3534 = vrot.lane.b32.xlu0 %v2495, 48
      %v3535 = vpop.permute.xlu0 %3534
      %3536 = vrot.lane.b32.xlu0 %v2496, 48
      %v3537 = vpop.permute.xlu0 %3536
      %3538 = vrot.lane.b32.xlu0 %v2497, 48
      %v3539 = vpop.permute.xlu0 %3538
      %3540 = vrot.lane.b32.xlu0 %v2498, 48
      %v3541 = vpop.permute.xlu0 %3540
      %3542 = vrot.lane.b32.xlu0 %v2499, 48
      %v3543 = vpop.permute.xlu0 %3542
      %3544 = vrot.lane.b32.xlu0 %v2500, 48
      %v3545 = vpop.permute.xlu0 %3544
      %3546 = vrot.lane.b32.xlu0 %v2501, 48
      %v3547 = vpop.permute.xlu0 %3546
      %3548 = vrot.lane.b32.xlu0 %v2502, 48
      %v3549 = vpop.permute.xlu0 %3548
      %3550 = vrot.lane.b32.xlu0 %v2503, 48
      %v3551 = vpop.permute.xlu0 %3550
      %3552 = vrot.lane.b32.xlu0 %v2504, 48
      %v3553 = vpop.permute.xlu0 %3552
      %3554 = vrot.lane.b32.xlu0 %v2505, 48
      %v3555 = vpop.permute.xlu0 %3554
      %3556 = vrot.lane.b32.xlu0 %v2506, 48
      %v3557 = vpop.permute.xlu0 %3556
      %3558 = vrot.lane.b32.xlu0 %v2507, 48
      %v3559 = vpop.permute.xlu0 %3558
      %3560 = vrot.lane.b32.xlu0 %v2508, 48
      %v3561 = vpop.permute.xlu0 %3560
      %3562 = vrot.lane.b32.xlu0 %v2509, 48
      %v3563 = vpop.permute.xlu0 %3562
      %3564 = vrot.lane.b32.xlu0 %v2510, 48
      %v3565 = vpop.permute.xlu0 %3564
      %3566 = vrot.lane.b32.xlu0 %v2511, 48
      %v3567 = vpop.permute.xlu0 %3566
      %3632 = vrot.lane.b32.xlu0 %v2640, 56
      %v3633 = vpop.permute.xlu0 %3632
      %3634 = vrot.lane.b32.xlu0 %v2641, 56
      %v3635 = vpop.permute.xlu0 %3634
      %3636 = vrot.lane.b32.xlu0 %v2642, 56
      %v3637 = vpop.permute.xlu0 %3636
      %3638 = vrot.lane.b32.xlu0 %v2643, 56
      %v3639 = vpop.permute.xlu0 %3638
      %3640 = vrot.lane.b32.xlu0 %v2644, 56
      %v3641 = vpop.permute.xlu0 %3640
      %3642 = vrot.lane.b32.xlu0 %v2645, 56
      %v3643 = vpop.permute.xlu0 %3642
      %3644 = vrot.lane.b32.xlu0 %v2646, 56
      %v3645 = vpop.permute.xlu0 %3644
      %3646 = vrot.lane.b32.xlu0 %v2647, 56
      %v3647 = vpop.permute.xlu0 %3646
      %3648 = vrot.lane.b32.xlu0 %v2648, 56
      %v3649 = vpop.permute.xlu0 %3648
      %3650 = vrot.lane.b32.xlu0 %v2649, 56
      %v3651 = vpop.permute.xlu0 %3650
      %3652 = vrot.lane.b32.xlu0 %v2650, 56
      %v3653 = vpop.permute.xlu0 %3652
      %3654 = vrot.lane.b32.xlu0 %v2651, 56
      %v3655 = vpop.permute.xlu0 %3654
      %3656 = vrot.lane.b32.xlu0 %v2652, 56
      %v3657 = vpop.permute.xlu0 %3656
      %3658 = vrot.lane.b32.xlu0 %v2653, 56
      %v3659 = vpop.permute.xlu0 %3658
      %3660 = vrot.lane.b32.xlu0 %v2654, 56
      %v3661 = vpop.permute.xlu0 %3660
      %3662 = vrot.lane.b32.xlu0 %v2655, 56
      %v3663 = vpop.permute.xlu0 %3662
      %3664 = vrot.lane.b32.xlu0 %v2656, 56
      %v3665 = vpop.permute.xlu0 %3664
      %3666 = vrot.lane.b32.xlu0 %v2657, 56
      %v3667 = vpop.permute.xlu0 %3666
      %3668 = vrot.lane.b32.xlu0 %v2658, 56
      %v3669 = vpop.permute.xlu0 %3668
      %3670 = vrot.lane.b32.xlu0 %v2659, 56
      %v3671 = vpop.permute.xlu0 %3670
      %3672 = vrot.lane.b32.xlu0 %v2660, 56
      %v3673 = vpop.permute.xlu0 %3672
      %3674 = vrot.lane.b32.xlu0 %v2661, 56
      %v3675 = vpop.permute.xlu0 %3674
      %3676 = vrot.lane.b32.xlu0 %v2662, 56
      %v3677 = vpop.permute.xlu0 %3676
      %3678 = vrot.lane.b32.xlu0 %v2663, 56
      %v3679 = vpop.permute.xlu0 %3678
      %3680 = vrot.lane.b32.xlu0 %v2664, 56
      %v3681 = vpop.permute.xlu0 %3680
      %3682 = vrot.lane.b32.xlu0 %v2665, 56
      %v3683 = vpop.permute.xlu0 %3682
      %3684 = vrot.lane.b32.xlu0 %v2666, 56
      %v3685 = vpop.permute.xlu0 %3684
      %3686 = vrot.lane.b32.xlu0 %v2667, 56
      %v3687 = vpop.permute.xlu0 %3686
      %3688 = vrot.lane.b32.xlu0 %v2668, 56
      %v3689 = vpop.permute.xlu0 %3688
      %3690 = vrot.lane.b32.xlu0 %v2669, 56
      %v3691 = vpop.permute.xlu0 %3690
      %3692 = vrot.lane.b32.xlu0 %v2670, 56
      %v3693 = vpop.permute.xlu0 %3692
      %3694 = vrot.lane.b32.xlu0 %v2671, 56
      %v3695 = vpop.permute.xlu0 %3694
      %3760 = vrot.lane.b32.xlu0 %v2800, 64
      %v3761 = vpop.permute.xlu0 %3760
      %3762 = vrot.lane.b32.xlu0 %v2801, 64
      %v3763 = vpop.permute.xlu0 %3762
      %3764 = vrot.lane.b32.xlu0 %v2802, 64
      %v3765 = vpop.permute.xlu0 %3764
      %3766 = vrot.lane.b32.xlu0 %v2803, 64
      %v3767 = vpop.permute.xlu0 %3766
      %3768 = vrot.lane.b32.xlu0 %v2804, 64
      %v3769 = vpop.permute.xlu0 %3768
      %3770 = vrot.lane.b32.xlu0 %v2805, 64
      %v3771 = vpop.permute.xlu0 %3770
      %3772 = vrot.lane.b32.xlu0 %v2806, 64
      %v3773 = vpop.permute.xlu0 %3772
      %3774 = vrot.lane.b32.xlu0 %v2807, 64
      %v3775 = vpop.permute.xlu0 %3774
      %3776 = vrot.lane.b32.xlu0 %v2808, 64
      %v3777 = vpop.permute.xlu0 %3776
      %3778 = vrot.lane.b32.xlu0 %v2809, 64
      %v3779 = vpop.permute.xlu0 %3778
      %3780 = vrot.lane.b32.xlu0 %v2810, 64
      %v3781 = vpop.permute.xlu0 %3780
      %3782 = vrot.lane.b32.xlu0 %v2811, 64
      %v3783 = vpop.permute.xlu0 %3782
      %3784 = vrot.lane.b32.xlu0 %v2812, 64
      %v3785 = vpop.permute.xlu0 %3784
      %3786 = vrot.lane.b32.xlu0 %v2813, 64
      %v3787 = vpop.permute.xlu0 %3786
      %3788 = vrot.lane.b32.xlu0 %v2814, 64
      %v3789 = vpop.permute.xlu0 %3788
      %3790 = vrot.lane.b32.xlu0 %v2815, 64
      %v3791 = vpop.permute.xlu0 %3790
      %3792 = vrot.lane.b32.xlu0 %v2816, 64
      %v3793 = vpop.permute.xlu0 %3792
      %3794 = vrot.lane.b32.xlu0 %v2817, 64
      %v3795 = vpop.permute.xlu0 %3794
      %3796 = vrot.lane.b32.xlu0 %v2818, 64
      %v3797 = vpop.permute.xlu0 %3796
      %3798 = vrot.lane.b32.xlu0 %v2819, 64
      %v3799 = vpop.permute.xlu0 %3798
      %3800 = vrot.lane.b32.xlu0 %v2820, 64
      %v3801 = vpop.permute.xlu0 %3800
      %3802 = vrot.lane.b32.xlu0 %v2821, 64
      %v3803 = vpop.permute.xlu0 %3802
      %3804 = vrot.lane.b32.xlu0 %v2822, 64
      %v3805 = vpop.permute.xlu0 %3804
      %3806 = vrot.lane.b32.xlu0 %v2823, 64
      %v3807 = vpop.permute.xlu0 %3806
      %3808 = vrot.lane.b32.xlu0 %v2824, 64
      %v3809 = vpop.permute.xlu0 %3808
      %3810 = vrot.lane.b32.xlu0 %v2825, 64
      %v3811 = vpop.permute.xlu0 %3810
      %3812 = vrot.lane.b32.xlu0 %v2826, 64
      %v3813 = vpop.permute.xlu0 %3812
      %3814 = vrot.lane.b32.xlu0 %v2827, 64
      %v3815 = vpop.permute.xlu0 %3814
      %3816 = vrot.lane.b32.xlu0 %v2828, 64
      %v3817 = vpop.permute.xlu0 %3816
      %3818 = vrot.lane.b32.xlu0 %v2829, 64
      %v3819 = vpop.permute.xlu0 %3818
      %3820 = vrot.lane.b32.xlu0 %v2830, 64
      %v3821 = vpop.permute.xlu0 %3820
      %3822 = vrot.lane.b32.xlu0 %v2831, 64
      %v3823 = vpop.permute.xlu0 %3822
      %vm3856 = vcmask 64512
      %v3857 = vsel %vm3856, %v1455, %v2865
      %v3858 = vsel %vm3856, %v1456, %v2867
      %v3859 = vsel %vm3856, %v1457, %v2869
      %v3860 = vsel %vm3856, %v1458, %v2871
      %v3861 = vsel %vm3856, %v1459, %v2873
      %v3862 = vsel %vm3856, %v1460, %v2875
      %v3863 = vsel %vm3856, %v1461, %v2877
      %v3864 = vsel %vm3856, %v1462, %v2879
      %v3865 = vsel %vm3856, %v1463, %v2881
      %v3866 = vsel %vm3856, %v1464, %v2883
      %v3867 = vsel %vm3856, %v1465, %v2885
      %v3868 = vsel %vm3856, %v1466, %v2887
      %v3869 = vsel %vm3856, %v1467, %v2889
      %v3870 = vsel %vm3856, %v1468, %v2891
      %v3871 = vsel %vm3856, %v1469, %v2893
      %v3872 = vsel %vm3856, %v1470, %v2895
      %v3873 = vsel %vm3856, %v1471, %v2897
      %v3874 = vsel %vm3856, %v1472, %v2899
      %v3875 = vsel %vm3856, %v1473, %v2901
      %v3876 = vsel %vm3856, %v1474, %v2903
      %v3877 = vsel %vm3856, %v1475, %v2905
      %v3878 = vsel %vm3856, %v1476, %v2907
      %v3879 = vsel %vm3856, %v1477, %v2909
      %v3880 = vsel %vm3856, %v1478, %v2911
      %v3881 = vsel %vm3856, %v1479, %v2913
      %v3882 = vsel %vm3856, %v1480, %v2915
      %v3883 = vsel %vm3856, %v1481, %v2917
      %v3884 = vsel %vm3856, %v1482, %v2919
      %v3885 = vsel %vm3856, %v1483, %v2921
      %v3886 = vsel %vm3856, %v1484, %v2923
      %v3887 = vsel %vm3856, %v1485, %v2925
      %v3888 = vsel %vm3856, %v1486, %v2927
      %vm3889 = vcmask 130048
      %v3890 = vsel %vm3889, %v3857, %v2993
      %v3891 = vsel %vm3889, %v3858, %v2995
      %v3892 = vsel %vm3889, %v3859, %v2997
      %v3893 = vsel %vm3889, %v3860, %v2999
      %v3894 = vsel %vm3889, %v3861, %v3001
      %v3895 = vsel %vm3889, %v3862, %v3003
      %v3896 = vsel %vm3889, %v3863, %v3005
      %v3897 = vsel %vm3889, %v3864, %v3007
      %v3898 = vsel %vm3889, %v3865, %v3009
      %v3899 = vsel %vm3889, %v3866, %v3011
      %v3900 = vsel %vm3889, %v3867, %v3013
      %v3901 = vsel %vm3889, %v3868, %v3015
      %v3902 = vsel %vm3889, %v3869, %v3017
      %v3903 = vsel %vm3889, %v3870, %v3019
      %v3904 = vsel %vm3889, %v3871, %v3021
      %v3905 = vsel %vm3889, %v3872, %v3023
      %v3906 = vsel %vm3889, %v3873, %v3025
      %v3907 = vsel %vm3889, %v3874, %v3027
      %v3908 = vsel %vm3889, %v3875, %v3029
      %v3909 = vsel %vm3889, %v3876, %v3031
      %v3910 = vsel %vm3889, %v3877, %v3033
      %v3911 = vsel %vm3889, %v3878, %v3035
      %v3912 = vsel %vm3889, %v3879, %v3037
      %v3913 = vsel %vm3889, %v3880, %v3039
      %v3914 = vsel %vm3889, %v3881, %v3041
      %v3915 = vsel %vm3889, %v3882, %v3043
      %v3916 = vsel %vm3889, %v3883, %v3045
      %v3917 = vsel %vm3889, %v3884, %v3047
      %v3918 = vsel %vm3889, %v3885, %v3049
      %v3919 = vsel %vm3889, %v3886, %v3051
      %v3920 = vsel %vm3889, %v3887, %v3053
      %v3921 = vsel %vm3889, %v3888, %v3055
      %vm3922 = vcmask 195584
      %v3923 = vsel %vm3922, %v3890, %v3121
      %v3924 = vsel %vm3922, %v3891, %v3123
      %v3925 = vsel %vm3922, %v3892, %v3125
      %v3926 = vsel %vm3922, %v3893, %v3127
      %v3927 = vsel %vm3922, %v3894, %v3129
      %v3928 = vsel %vm3922, %v3895, %v3131
      %v3929 = vsel %vm3922, %v3896, %v3133
      %v3930 = vsel %vm3922, %v3897, %v3135
      %v3931 = vsel %vm3922, %v3898, %v3137
      %v3932 = vsel %vm3922, %v3899, %v3139
      %v3933 = vsel %vm3922, %v3900, %v3141
      %v3934 = vsel %vm3922, %v3901, %v3143
      %v3935 = vsel %vm3922, %v3902, %v3145
      %v3936 = vsel %vm3922, %v3903, %v3147
      %v3937 = vsel %vm3922, %v3904, %v3149
      %v3938 = vsel %vm3922, %v3905, %v3151
      %v3939 = vsel %vm3922, %v3906, %v3153
      %v3940 = vsel %vm3922, %v3907, %v3155
      %v3941 = vsel %vm3922, %v3908, %v3157
      %v3942 = vsel %vm3922, %v3909, %v3159
      %v3943 = vsel %vm3922, %v3910, %v3161
      %v3944 = vsel %vm3922, %v3911, %v3163
      %v3945 = vsel %vm3922, %v3912, %v3165
      %v3946 = vsel %vm3922, %v3913, %v3167
      %v3947 = vsel %vm3922, %v3914, %v3169
      %v3948 = vsel %vm3922, %v3915, %v3171
      %v3949 = vsel %vm3922, %v3916, %v3173
      %v3950 = vsel %vm3922, %v3917, %v3175
      %v3951 = vsel %vm3922, %v3918, %v3177
      %v3952 = vsel %vm3922, %v3919, %v3179
      %v3953 = vsel %vm3922, %v3920, %v3181
      %v3954 = vsel %vm3922, %v3921, %v3183
      %v3955 = vsel %vm489, %v3923, %v3249
      %v3956 = vsel %vm489, %v3924, %v3251
      %v3957 = vsel %vm489, %v3925, %v3253
      %v3958 = vsel %vm489, %v3926, %v3255
      %v3959 = vsel %vm489, %v3927, %v3257
      %v3960 = vsel %vm489, %v3928, %v3259
      %v3961 = vsel %vm489, %v3929, %v3261
      %v3962 = vsel %vm489, %v3930, %v3263
      %v3963 = vsel %vm489, %v3931, %v3265
      %v3964 = vsel %vm489, %v3932, %v3267
      %v3965 = vsel %vm489, %v3933, %v3269
      %v3966 = vsel %vm489, %v3934, %v3271
      %v3967 = vsel %vm489, %v3935, %v3273
      %v3968 = vsel %vm489, %v3936, %v3275
      %v3969 = vsel %vm489, %v3937, %v3277
      %v3970 = vsel %vm489, %v3938, %v3279
      %v3971 = vsel %vm489, %v3939, %v3281
      %v3972 = vsel %vm489, %v3940, %v3283
      %v3973 = vsel %vm489, %v3941, %v3285
      %v3974 = vsel %vm489, %v3942, %v3287
      %v3975 = vsel %vm489, %v3943, %v3289
      %v3976 = vsel %vm489, %v3944, %v3291
      %v3977 = vsel %vm489, %v3945, %v3293
      %v3978 = vsel %vm489, %v3946, %v3295
      %v3979 = vsel %vm489, %v3947, %v3297
      %v3980 = vsel %vm489, %v3948, %v3299
      %v3981 = vsel %vm489, %v3949, %v3301
      %v3982 = vsel %vm489, %v3950, %v3303
      %v3983 = vsel %vm489, %v3951, %v3305
      %v3984 = vsel %vm489, %v3952, %v3307
      %v3985 = vsel %vm489, %v3953, %v3309
      %v3986 = vsel %vm489, %v3954, %v3311
      %vm3987 = vcmask 326656
      %v3988 = vsel %vm3987, %v3955, %v3377
      %v3989 = vsel %vm3987, %v3956, %v3379
      %v3990 = vsel %vm3987, %v3957, %v3381
      %v3991 = vsel %vm3987, %v3958, %v3383
      %v3992 = vsel %vm3987, %v3959, %v3385
      %v3993 = vsel %vm3987, %v3960, %v3387
      %v3994 = vsel %vm3987, %v3961, %v3389
      %v3995 = vsel %vm3987, %v3962, %v3391
      %v3996 = vsel %vm3987, %v3963, %v3393
      %v3997 = vsel %vm3987, %v3964, %v3395
      %v3998 = vsel %vm3987, %v3965, %v3397
      %v3999 = vsel %vm3987, %v3966, %v3399
      %v4000 = vsel %vm3987, %v3967, %v3401
      %v4001 = vsel %vm3987, %v3968, %v3403
      %v4002 = vsel %vm3987, %v3969, %v3405
      %v4003 = vsel %vm3987, %v3970, %v3407
      %v4004 = vsel %vm3987, %v3971, %v3409
      %v4005 = vsel %vm3987, %v3972, %v3411
      %v4006 = vsel %vm3987, %v3973, %v3413
      %v4007 = vsel %vm3987, %v3974, %v3415
      %v4008 = vsel %vm3987, %v3975, %v3417
      %v4009 = vsel %vm3987, %v3976, %v3419
      %v4010 = vsel %vm3987, %v3977, %v3421
      %v4011 = vsel %vm3987, %v3978, %v3423
      %v4012 = vsel %vm3987, %v3979, %v3425
      %v4013 = vsel %vm3987, %v3980, %v3427
      %v4014 = vsel %vm3987, %v3981, %v3429
      %v4015 = vsel %vm3987, %v3982, %v3431
      %v4016 = vsel %vm3987, %v3983, %v3433
      %v4017 = vsel %vm3987, %v3984, %v3435
      %v4018 = vsel %vm3987, %v3985, %v3437
      %v4019 = vsel %vm3987, %v3986, %v3439
      %vm4020 = vcmask 392192
      %v4021 = vsel %vm4020, %v3988, %v3505
      %v4022 = vsel %vm4020, %v3989, %v3507
      %v4023 = vsel %vm4020, %v3990, %v3509
      %v4024 = vsel %vm4020, %v3991, %v3511
      %v4025 = vsel %vm4020, %v3992, %v3513
      %v4026 = vsel %vm4020, %v3993, %v3515
      %v4027 = vsel %vm4020, %v3994, %v3517
      %v4028 = vsel %vm4020, %v3995, %v3519
      %v4029 = vsel %vm4020, %v3996, %v3521
      %v4030 = vsel %vm4020, %v3997, %v3523
      %v4031 = vsel %vm4020, %v3998, %v3525
      %v4032 = vsel %vm4020, %v3999, %v3527
      %v4033 = vsel %vm4020, %v4000, %v3529
      %v4034 = vsel %vm4020, %v4001, %v3531
      %v4035 = vsel %vm4020, %v4002, %v3533
      %v4036 = vsel %vm4020, %v4003, %v3535
      %v4037 = vsel %vm4020, %v4004, %v3537
      %v4038 = vsel %vm4020, %v4005, %v3539
      %v4039 = vsel %vm4020, %v4006, %v3541
      %v4040 = vsel %vm4020, %v4007, %v3543
      %v4041 = vsel %vm4020, %v4008, %v3545
      %v4042 = vsel %vm4020, %v4009, %v3547
      %v4043 = vsel %vm4020, %v4010, %v3549
      %v4044 = vsel %vm4020, %v4011, %v3551
      %v4045 = vsel %vm4020, %v4012, %v3553
      %v4046 = vsel %vm4020, %v4013, %v3555
      %v4047 = vsel %vm4020, %v4014, %v3557
      %v4048 = vsel %vm4020, %v4015, %v3559
      %v4049 = vsel %vm4020, %v4016, %v3561
      %v4050 = vsel %vm4020, %v4017, %v3563
      %v4051 = vsel %vm4020, %v4018, %v3565
      %v4052 = vsel %vm4020, %v4019, %v3567
      %vm4053 = vcmask 457728
      %v4054 = vsel %vm4053, %v4021, %v3633
      %v4055 = vsel %vm4053, %v4022, %v3635
      %v4056 = vsel %vm4053, %v4023, %v3637
      %v4057 = vsel %vm4053, %v4024, %v3639
      %v4058 = vsel %vm4053, %v4025, %v3641
      %v4059 = vsel %vm4053, %v4026, %v3643
      %v4060 = vsel %vm4053, %v4027, %v3645
      %v4061 = vsel %vm4053, %v4028, %v3647
      %v4062 = vsel %vm4053, %v4029, %v3649
      %v4063 = vsel %vm4053, %v4030, %v3651
      %v4064 = vsel %vm4053, %v4031, %v3653
      %v4065 = vsel %vm4053, %v4032, %v3655
      %v4066 = vsel %vm4053, %v4033, %v3657
      %v4067 = vsel %vm4053, %v4034, %v3659
      %v4068 = vsel %vm4053, %v4035, %v3661
      %v4069 = vsel %vm4053, %v4036, %v3663
      %v4070 = vsel %vm4053, %v4037, %v3665
      %v4071 = vsel %vm4053, %v4038, %v3667
      %v4072 = vsel %vm4053, %v4039, %v3669
      %v4073 = vsel %vm4053, %v4040, %v3671
      %v4074 = vsel %vm4053, %v4041, %v3673
      %v4075 = vsel %vm4053, %v4042, %v3675
      %v4076 = vsel %vm4053, %v4043, %v3677
      %v4077 = vsel %vm4053, %v4044, %v3679
      %v4078 = vsel %vm4053, %v4045, %v3681
      %v4079 = vsel %vm4053, %v4046, %v3683
      %v4080 = vsel %vm4053, %v4047, %v3685
      %v4081 = vsel %vm4053, %v4048, %v3687
      %v4082 = vsel %vm4053, %v4049, %v3689
      %v4083 = vsel %vm4053, %v4050, %v3691
      %v4084 = vsel %vm4053, %v4051, %v3693
      %v4085 = vsel %vm4053, %v4052, %v3695
      %vm4086 = vcmask 523264
      %v4087 = vsel %vm4086, %v4054, %v3761
      %v4088 = vsel %vm4086, %v4055, %v3763
      %v4089 = vsel %vm4086, %v4056, %v3765
      %v4090 = vsel %vm4086, %v4057, %v3767
      %v4091 = vsel %vm4086, %v4058, %v3769
      %v4092 = vsel %vm4086, %v4059, %v3771
      %v4093 = vsel %vm4086, %v4060, %v3773
      %v4094 = vsel %vm4086, %v4061, %v3775
      %v4095 = vsel %vm4086, %v4062, %v3777
      %v4096 = vsel %vm4086, %v4063, %v3779
      %v4097 = vsel %vm4086, %v4064, %v3781
      %v4098 = vsel %vm4086, %v4065, %v3783
      %v4099 = vsel %vm4086, %v4066, %v3785
      %v4100 = vsel %vm4086, %v4067, %v3787
      %v4101 = vsel %vm4086, %v4068, %v3789
      %v4102 = vsel %vm4086, %v4069, %v3791
      %v4103 = vsel %vm4086, %v4070, %v3793
      %v4104 = vsel %vm4086, %v4071, %v3795
      %v4105 = vsel %vm4086, %v4072, %v3797
      %v4106 = vsel %vm4086, %v4073, %v3799
      %v4107 = vsel %vm4086, %v4074, %v3801
      %v4108 = vsel %vm4086, %v4075, %v3803
      %v4109 = vsel %vm4086, %v4076, %v3805
      %v4110 = vsel %vm4086, %v4077, %v3807
      %v4111 = vsel %vm4086, %v4078, %v3809
      %v4112 = vsel %vm4086, %v4079, %v3811
      %v4113 = vsel %vm4086, %v4080, %v3813
      %v4114 = vsel %vm4086, %v4081, %v3815
      %v4115 = vsel %vm4086, %v4082, %v3817
      %v4116 = vsel %vm4086, %v4083, %v3819
      %v4117 = vsel %vm4086, %v4084, %v3821
      %v4118 = vsel %vm4086, %v4085, %v3823
      %v4119 = vld [vmem:[%s5] sm:$0xff]
      %v4120 = vld [vmem:[%s5 + $0x8] sm:$0xff]
      %v4121 = vld [vmem:[%s5 + $0x10] sm:$0xff]
      %v4122 = vld [vmem:[%s5 + $0x18] sm:$0xff]
      %v4123 = vld [vmem:[%s5 + $0x20] sm:$0xff]
      %v4124 = vld [vmem:[%s5 + $0x28] sm:$0xff]
      %v4125 = vld [vmem:[%s5 + $0x30] sm:$0xff]
      %v4126 = vld [vmem:[%s5 + $0x38] sm:$0xff]
      %v4127 = vld [vmem:[%s5 + $0x40] sm:$0xff]
      %v4128 = vld [vmem:[%s6] sm:$0x1]
      %v4130 = vlaneseq
      %v4131 = vshrl.u32 %v4130, 7
      %v4132 = vsub.s32 0, %v4131
      %v4133 = vrot.slane %v4128, %v4132
      %vm4135 = vcmask 588800
      %v4137 = vsel %vm4135, %v4087, 0
      %v4140 = vsel %vm4135, %v4088, 0
      %v4143 = vsel %vm4135, %v4089, 0
      %v4146 = vsel %vm4135, %v4090, 0
      %v4149 = vsel %vm4135, %v4091, 0
      %v4152 = vsel %vm4135, %v4092, 0
      %v4155 = vsel %vm4135, %v4093, 0
      %v4158 = vsel %vm4135, %v4094, 0
      %v4161 = vsel %vm4135, %v4095, 0
      %v4164 = vsel %vm4135, %v4096, 0
      %v4167 = vsel %vm4135, %v4097, 0
      %v4170 = vsel %vm4135, %v4098, 0
      %v4173 = vsel %vm4135, %v4099, 0
      %v4176 = vsel %vm4135, %v4100, 0
      %v4179 = vsel %vm4135, %v4101, 0
      %v4182 = vsel %vm4135, %v4102, 0
      %v4185 = vsel %vm4135, %v4103, 0
      %v4188 = vsel %vm4135, %v4104, 0
      %v4191 = vsel %vm4135, %v4105, 0
      %v4194 = vsel %vm4135, %v4106, 0
      %v4197 = vsel %vm4135, %v4107, 0
      %v4200 = vsel %vm4135, %v4108, 0
      %v4203 = vsel %vm4135, %v4109, 0
      %v4206 = vsel %vm4135, %v4110, 0
      %v4209 = vsel %vm4135, %v4111, 0
      %v4212 = vsel %vm4135, %v4112, 0
      %v4215 = vsel %vm4135, %v4113, 0
      %v4218 = vsel %vm4135, %v4114, 0
      %v4221 = vsel %vm4135, %v4115, 0
      %v4224 = vsel %vm4135, %v4116, 0
      %v4227 = vsel %vm4135, %v4117, 0
      %v4230 = vsel %vm4135, %v4118, 0
      %4232 = vmatprep.subr.mxu0 0.0
      %4233 = vmatpush1.msra.mxu0 0.0
      %4234 = vmatprep.subr.mxu0 0.0
      %4235 = vmatpush1.msra.mxu0 0.0
      %4236 = vmatprep.subr.mxu0 0.0
      %4237 = vmatpush1.msra.mxu0 0.0
      %4238 = vmatprep.subr.mxu0 0.0
      %4239 = vmatpush1.msra.mxu0 0.0
      %4240 = vmatprep.subr.mxu0 0.0
      %4241 = vmatpush1.msra.mxu0 0.0
      %4242 = vmatprep.subr.mxu0 0.0
      %4243 = vmatpush1.msra.mxu0 0.0
      %4244 = vmatprep.subr.mxu0 0.0
      %4245 = vmatpush1.msra.mxu0 0.0
      %4246 = vmatprep.subr.mxu0 0.0
      %4247 = vmatpush1.msra.mxu0 %v4127
      %4248 = vmatprep.subr.mxu0 0.0
      %4249 = vmatpush1.msra.mxu0 %v4126
      %4250 = vmatprep.subr.mxu0 0.0
      %4251 = vmatpush1.msra.mxu0 %v4125
      %4252 = vmatprep.subr.mxu0 0.0
      %4253 = vmatpush1.msra.mxu0 %v4124
      %4254 = vmatprep.subr.mxu0 0.0
      %4255 = vmatpush1.msra.mxu0 %v4123
      %4256 = vmatprep.subr.mxu0 0.0
      %4257 = vmatpush1.msra.mxu0 %v4122
      %4258 = vmatprep.subr.mxu0 0.0
      %4259 = vmatpush1.msra.mxu0 %v4121
      %4260 = vmatprep.subr.mxu0 0.0
      %4261 = vmatpush1.msra.mxu0 %v4120
      %4262 = vmatprep.subr.mxu0 0.0
      %4263 = vmatpush1.msra.mxu0 %v4119
      %4264 = vmatprep.subr.mxu0 0.0
      %4265 = vmatpush2.msra.mxu0 0.0
      %4266 = vmatprep.subr.mxu0 0.0
      %4267 = vmatpush2.msra.mxu0 0.0
      %4268 = vmatprep.subr.mxu0 0.0
      %4269 = vmatpush2.msra.mxu0 0.0
      %4270 = vmatprep.subr.mxu0 0.0
      %4271 = vmatpush2.msra.mxu0 0.0
      %4272 = vmatprep.subr.mxu0 0.0
      %4273 = vmatpush2.msra.mxu0 0.0
      %4274 = vmatprep.subr.mxu0 0.0
      %4275 = vmatpush2.msra.mxu0 0.0
      %4276 = vmatprep.subr.mxu0 0.0
      %4277 = vmatpush2.msra.mxu0 0.0
      %4278 = vmatprep.subr.mxu0 0.0
      %4279 = vmatpush2.msra.mxu0 0.0
      %4280 = vmatprep.subr.mxu0 0.0
      %4281 = vmatpush2.msra.mxu0 0.0
      %4282 = vmatprep.subr.mxu0 0.0
      %4283 = vmatpush2.msra.mxu0 0.0
      %4284 = vmatprep.subr.mxu0 0.0
      %4285 = vmatpush2.msra.mxu0 0.0
      %4286 = vmatprep.subr.mxu0 0.0
      %4287 = vmatpush2.msra.mxu0 0.0
      %4288 = vmatprep.subr.mxu0 0.0
      %4289 = vmatpush2.msra.mxu0 0.0
      %4290 = vmatprep.subr.mxu0 0.0
      %4291 = vmatpush2.msra.mxu0 0.0
      %4292 = vmatprep.subr.mxu0 0.0
      %4293 = vmatpush2.msra.mxu0 0.0
      %4294 = vmatprep.subr.mxu0 0.0
      %4295 = vmatpush2.msra.mxu0 0.0
      %4296 = vmatprep.mubr.f32.mxu0 0.0
      %4297 = vmatmul.mubr.f32.gmra.mxu0 %v4137
      %v4298 = vpop.f32.mrf.mxu0
      %v4299 = vadd.f32 %v4133, %v4298
      %v4300 = vpop.f32.mrf.mxu0
      %4301 = vmatprep.mubr.f32.mxu0 0.0
      %4302 = vmatmul.mubr.f32.gmra.mxu0 %v4140
      %v4303 = vpop.f32.mrf.mxu0
      %v4304 = vadd.f32 %v4133, %v4303
      %v4305 = vpop.f32.mrf.mxu0
      %4306 = vmatprep.mubr.f32.mxu0 0.0
      %4307 = vmatmul.mubr.f32.gmra.mxu0 %v4143
      %v4308 = vpop.f32.mrf.mxu0
      %v4309 = vadd.f32 %v4133, %v4308
      %v4310 = vpop.f32.mrf.mxu0
      %4311 = vmatprep.mubr.f32.mxu0 0.0
      %4312 = vmatmul.mubr.f32.gmra.mxu0 %v4146
      %v4313 = vpop.f32.mrf.mxu0
      %v4314 = vadd.f32 %v4133, %v4313
      %v4315 = vpop.f32.mrf.mxu0
      %4316 = vmatprep.mubr.f32.mxu0 0.0
      %4317 = vmatmul.mubr.f32.gmra.mxu0 %v4149
      %v4318 = vpop.f32.mrf.mxu0
      %v4319 = vadd.f32 %v4133, %v4318
      %v4320 = vpop.f32.mrf.mxu0
      %4321 = vmatprep.mubr.f32.mxu0 0.0
      %4322 = vmatmul.mubr.f32.gmra.mxu0 %v4152
      %v4323 = vpop.f32.mrf.mxu0
      %v4324 = vadd.f32 %v4133, %v4323
      %v4325 = vpop.f32.mrf.mxu0
      %4326 = vmatprep.mubr.f32.mxu0 0.0
      %4327 = vmatmul.mubr.f32.gmra.mxu0 %v4155
      %v4328 = vpop.f32.mrf.mxu0
      %v4329 = vadd.f32 %v4133, %v4328
      %v4330 = vpop.f32.mrf.mxu0
      %4331 = vmatprep.mubr.f32.mxu0 0.0
      %4332 = vmatmul.mubr.f32.gmra.mxu0 %v4158
      %v4333 = vpop.f32.mrf.mxu0
      %v4334 = vadd.f32 %v4133, %v4333
      %v4335 = vpop.f32.mrf.mxu0
      %4336 = vmatprep.mubr.f32.mxu0 0.0
      %4337 = vmatmul.mubr.f32.gmra.mxu0 %v4161
      %v4338 = vpop.f32.mrf.mxu0
      %v4339 = vadd.f32 %v4133, %v4338
      %v4340 = vpop.f32.mrf.mxu0
      %4341 = vmatprep.mubr.f32.mxu0 0.0
      %4342 = vmatmul.mubr.f32.gmra.mxu0 %v4164
      %v4343 = vpop.f32.mrf.mxu0
      %v4344 = vadd.f32 %v4133, %v4343
      %v4345 = vpop.f32.mrf.mxu0
      %4346 = vmatprep.mubr.f32.mxu0 0.0
      %4347 = vmatmul.mubr.f32.gmra.mxu0 %v4167
      %v4348 = vpop.f32.mrf.mxu0
      %v4349 = vadd.f32 %v4133, %v4348
      %v4350 = vpop.f32.mrf.mxu0
      %4351 = vmatprep.mubr.f32.mxu0 0.0
      %4352 = vmatmul.mubr.f32.gmra.mxu0 %v4170
      %v4353 = vpop.f32.mrf.mxu0
      %v4354 = vadd.f32 %v4133, %v4353
      %v4355 = vpop.f32.mrf.mxu0
      %4356 = vmatprep.mubr.f32.mxu0 0.0
      %4357 = vmatmul.mubr.f32.gmra.mxu0 %v4173
      %v4358 = vpop.f32.mrf.mxu0
      %v4359 = vadd.f32 %v4133, %v4358
      %v4360 = vpop.f32.mrf.mxu0
      %4361 = vmatprep.mubr.f32.mxu0 0.0
      %4362 = vmatmul.mubr.f32.gmra.mxu0 %v4176
      %v4363 = vpop.f32.mrf.mxu0
      %v4364 = vadd.f32 %v4133, %v4363
      %v4365 = vpop.f32.mrf.mxu0
      %4366 = vmatprep.mubr.f32.mxu0 0.0
      %4367 = vmatmul.mubr.f32.gmra.mxu0 %v4179
      %v4368 = vpop.f32.mrf.mxu0
      %v4369 = vadd.f32 %v4133, %v4368
      %v4370 = vpop.f32.mrf.mxu0
      %4371 = vmatprep.mubr.f32.mxu0 0.0
      %4372 = vmatmul.mubr.f32.gmra.mxu0 %v4182
      %v4373 = vpop.f32.mrf.mxu0
      %v4374 = vadd.f32 %v4133, %v4373
      %v4375 = vpop.f32.mrf.mxu0
      %4376 = vmatprep.mubr.f32.mxu0 0.0
      %4377 = vmatmul.mubr.f32.gmra.mxu0 %v4185
      %v4378 = vpop.f32.mrf.mxu0
      %v4379 = vadd.f32 %v4133, %v4378
      %v4380 = vpop.f32.mrf.mxu0
      %4381 = vmatprep.mubr.f32.mxu0 0.0
      %4382 = vmatmul.mubr.f32.gmra.mxu0 %v4188
      %v4383 = vpop.f32.mrf.mxu0
      %v4384 = vadd.f32 %v4133, %v4383
      %v4385 = vpop.f32.mrf.mxu0
      %4386 = vmatprep.mubr.f32.mxu0 0.0
      %4387 = vmatmul.mubr.f32.gmra.mxu0 %v4191
      %v4388 = vpop.f32.mrf.mxu0
      %v4389 = vadd.f32 %v4133, %v4388
      %v4390 = vpop.f32.mrf.mxu0
      %4391 = vmatprep.mubr.f32.mxu0 0.0
      %4392 = vmatmul.mubr.f32.gmra.mxu0 %v4194
      %v4393 = vpop.f32.mrf.mxu0
      %v4394 = vadd.f32 %v4133, %v4393
      %v4395 = vpop.f32.mrf.mxu0
      %4396 = vmatprep.mubr.f32.mxu0 0.0
      %4397 = vmatmul.mubr.f32.gmra.mxu0 %v4197
      %v4398 = vpop.f32.mrf.mxu0
      %v4399 = vadd.f32 %v4133, %v4398
      %v4400 = vpop.f32.mrf.mxu0
      %4401 = vmatprep.mubr.f32.mxu0 0.0
      %4402 = vmatmul.mubr.f32.gmra.mxu0 %v4200
      %v4403 = vpop.f32.mrf.mxu0
      %v4404 = vadd.f32 %v4133, %v4403
      %v4405 = vpop.f32.mrf.mxu0
      %4406 = vmatprep.mubr.f32.mxu0 0.0
      %4407 = vmatmul.mubr.f32.gmra.mxu0 %v4203
      %v4408 = vpop.f32.mrf.mxu0
      %v4409 = vadd.f32 %v4133, %v4408
      %v4410 = vpop.f32.mrf.mxu0
      %4411 = vmatprep.mubr.f32.mxu0 0.0
      %4412 = vmatmul.mubr.f32.gmra.mxu0 %v4206
      %v4413 = vpop.f32.mrf.mxu0
      %v4414 = vadd.f32 %v4133, %v4413
      %v4415 = vpop.f32.mrf.mxu0
      %4416 = vmatprep.mubr.f32.mxu0 0.0
      %4417 = vmatmul.mubr.f32.gmra.mxu0 %v4209
      %v4418 = vpop.f32.mrf.mxu0
      %v4419 = vadd.f32 %v4133, %v4418
      %v4420 = vpop.f32.mrf.mxu0
      %4421 = vmatprep.mubr.f32.mxu0 0.0
      %4422 = vmatmul.mubr.f32.gmra.mxu0 %v4212
      %v4423 = vpop.f32.mrf.mxu0
      %v4424 = vadd.f32 %v4133, %v4423
      %v4425 = vpop.f32.mrf.mxu0
      %4426 = vmatprep.mubr.f32.mxu0 0.0
      %4427 = vmatmul.mubr.f32.gmra.mxu0 %v4215
      %v4428 = vpop.f32.mrf.mxu0
      %v4429 = vadd.f32 %v4133, %v4428
      %v4430 = vpop.f32.mrf.mxu0
      %4431 = vmatprep.mubr.f32.mxu0 0.0
      %4432 = vmatmul.mubr.f32.gmra.mxu0 %v4218
      %v4433 = vpop.f32.mrf.mxu0
      %v4434 = vadd.f32 %v4133, %v4433
      %v4435 = vpop.f32.mrf.mxu0
      %4436 = vmatprep.mubr.f32.mxu0 0.0
      %4437 = vmatmul.mubr.f32.gmra.mxu0 %v4221
      %v4438 = vpop.f32.mrf.mxu0
      %v4439 = vadd.f32 %v4133, %v4438
      %v4440 = vpop.f32.mrf.mxu0
      %4441 = vmatprep.mubr.f32.mxu0 0.0
      %4442 = vmatmul.mubr.f32.gmra.mxu0 %v4224
      %v4443 = vpop.f32.mrf.mxu0
      %v4444 = vadd.f32 %v4133, %v4443
      %v4445 = vpop.f32.mrf.mxu0
      %4446 = vmatprep.mubr.f32.mxu0 0.0
      %4447 = vmatmul.mubr.f32.gmra.mxu0 %v4227
      %v4448 = vpop.f32.mrf.mxu0
      %v4449 = vadd.f32 %v4133, %v4448
      %v4450 = vpop.f32.mrf.mxu0
      %4451 = vmatprep.mubr.f32.mxu0 0.0
      %4452 = vmatmul.mubr.f32.gmra.mxu0 %v4230
      %v4453 = vpop.f32.mrf.mxu0
      %v4454 = vadd.f32 %v4133, %v4453
      %v4455 = vpop.f32.mrf.mxu0
      %4456 = vdwg.mxu0
      %v4457 = vld [vmem:[%s7] sm:$0xff]
      %v4458 = vld [vmem:[%s8] sm:$0x1]
      %v4460 = vlaneseq
      %v4461 = vshrl.u32 %v4460, 7
      %v4462 = vsub.s32 0, %v4461
      %v4463 = vrot.slane %v4458, %v4462
      %v4466 = vsel %vm3856, %v4299, 0
      %v4469 = vsel %vm3856, %v4304, 0
      %v4472 = vsel %vm3856, %v4309, 0
      %v4475 = vsel %vm3856, %v4314, 0
      %v4478 = vsel %vm3856, %v4319, 0
      %v4481 = vsel %vm3856, %v4324, 0
      %v4484 = vsel %vm3856, %v4329, 0
      %v4487 = vsel %vm3856, %v4334, 0
      %v4490 = vsel %vm3856, %v4339, 0
      %v4493 = vsel %vm3856, %v4344, 0
      %v4496 = vsel %vm3856, %v4349, 0
      %v4499 = vsel %vm3856, %v4354, 0
      %v4502 = vsel %vm3856, %v4359, 0
      %v4505 = vsel %vm3856, %v4364, 0
      %v4508 = vsel %vm3856, %v4369, 0
      %v4511 = vsel %vm3856, %v4374, 0
      %v4514 = vsel %vm3856, %v4379, 0
      %v4517 = vsel %vm3856, %v4384, 0
      %v4520 = vsel %vm3856, %v4389, 0
      %v4523 = vsel %vm3856, %v4394, 0
      %v4526 = vsel %vm3856, %v4399, 0
      %v4529 = vsel %vm3856, %v4404, 0
      %v4532 = vsel %vm3856, %v4409, 0
      %v4535 = vsel %vm3856, %v4414, 0
      %v4538 = vsel %vm3856, %v4419, 0
      %v4541 = vsel %vm3856, %v4424, 0
      %v4544 = vsel %vm3856, %v4429, 0
      %v4547 = vsel %vm3856, %v4434, 0
      %v4550 = vsel %vm3856, %v4439, 0
      %v4553 = vsel %vm3856, %v4444, 0
      %v4556 = vsel %vm3856, %v4449, 0
      %v4559 = vsel %vm3856, %v4454, 0
      %4561 = vmatprep.subr.mxu0 0.0
      %4562 = vmatpush1.msra.mxu0 0.0
      %4563 = vmatprep.subr.mxu0 0.0
      %4564 = vmatpush1.msra.mxu0 0.0
      %4565 = vmatprep.subr.mxu0 0.0
      %4566 = vmatpush1.msra.mxu0 0.0
      %4567 = vmatprep.subr.mxu0 0.0
      %4568 = vmatpush1.msra.mxu0 0.0
      %4569 = vmatprep.subr.mxu0 0.0
      %4570 = vmatpush1.msra.mxu0 0.0
      %4571 = vmatprep.subr.mxu0 0.0
      %4572 = vmatpush1.msra.mxu0 0.0
      %4573 = vmatprep.subr.mxu0 0.0
      %4574 = vmatpush1.msra.mxu0 0.0
      %4575 = vmatprep.subr.mxu0 0.0
      %4576 = vmatpush1.msra.mxu0 0.0
      %4577 = vmatprep.subr.mxu0 0.0
      %4578 = vmatpush1.msra.mxu0 0.0
      %4579 = vmatprep.subr.mxu0 0.0
      %4580 = vmatpush1.msra.mxu0 0.0
      %4581 = vmatprep.subr.mxu0 0.0
      %4582 = vmatpush1.msra.mxu0 0.0
      %4583 = vmatprep.subr.mxu0 0.0
      %4584 = vmatpush1.msra.mxu0 0.0
      %4585 = vmatprep.subr.mxu0 0.0
      %4586 = vmatpush1.msra.mxu0 0.0
      %4587 = vmatprep.subr.mxu0 0.0
      %4588 = vmatpush1.msra.mxu0 0.0
      %4589 = vmatprep.subr.mxu0 0.0
      %4590 = vmatpush1.msra.mxu0 0.0
      %4591 = vmatprep.subr.mxu0 0.0
      %4592 = vmatpush1.msra.mxu0 %v4457
      %4593 = vmatprep.subr.mxu0 0.0
      %4594 = vmatpush2.msra.mxu0 0.0
      %4595 = vmatprep.subr.mxu0 0.0
      %4596 = vmatpush2.msra.mxu0 0.0
      %4597 = vmatprep.subr.mxu0 0.0
      %4598 = vmatpush2.msra.mxu0 0.0
      %4599 = vmatprep.subr.mxu0 0.0
      %4600 = vmatpush2.msra.mxu0 0.0
      %4601 = vmatprep.subr.mxu0 0.0
      %4602 = vmatpush2.msra.mxu0 0.0
      %4603 = vmatprep.subr.mxu0 0.0
      %4604 = vmatpush2.msra.mxu0 0.0
      %4605 = vmatprep.subr.mxu0 0.0
      %4606 = vmatpush2.msra.mxu0 0.0
      %4607 = vmatprep.subr.mxu0 0.0
      %4608 = vmatpush2.msra.mxu0 0.0
      %4609 = vmatprep.subr.mxu0 0.0
      %4610 = vmatpush2.msra.mxu0 0.0
      %4611 = vmatprep.subr.mxu0 0.0
      %4612 = vmatpush2.msra.mxu0 0.0
      %4613 = vmatprep.subr.mxu0 0.0
      %4614 = vmatpush2.msra.mxu0 0.0
      %4615 = vmatprep.subr.mxu0 0.0
      %4616 = vmatpush2.msra.mxu0 0.0
      %4617 = vmatprep.subr.mxu0 0.0
      %4618 = vmatpush2.msra.mxu0 0.0
      %4619 = vmatprep.subr.mxu0 0.0
      %4620 = vmatpush2.msra.mxu0 0.0
      %4621 = vmatprep.subr.mxu0 0.0
      %4622 = vmatpush2.msra.mxu0 0.0
      %4623 = vmatprep.subr.mxu0 0.0
      %4624 = vmatpush2.msra.mxu0 0.0
      %4625 = vmatprep.mubr.f32.mxu0 0.0
      %4626 = vmatmul.mubr.f32.gmra.mxu0 %v4466
      %v4627 = vpop.f32.mrf.mxu0
      %v4628 = vadd.f32 %v4463, %v4627
      %v4629 = vpop.f32.mrf.mxu0
      %4630 = vmatprep.mubr.f32.mxu0 0.0
      %4631 = vmatmul.mubr.f32.gmra.mxu0 %v4469
      %v4632 = vpop.f32.mrf.mxu0
      %v4633 = vadd.f32 %v4463, %v4632
      %v4634 = vpop.f32.mrf.mxu0
      %4635 = vmatprep.mubr.f32.mxu0 0.0
      %4636 = vmatmul.mubr.f32.gmra.mxu0 %v4472
      %v4637 = vpop.f32.mrf.mxu0
      %v4638 = vadd.f32 %v4463, %v4637
      %v4639 = vpop.f32.mrf.mxu0
      %4640 = vmatprep.mubr.f32.mxu0 0.0
      %4641 = vmatmul.mubr.f32.gmra.mxu0 %v4475
      %v4642 = vpop.f32.mrf.mxu0
      %v4643 = vadd.f32 %v4463, %v4642
      %v4644 = vpop.f32.mrf.mxu0
      %4645 = vmatprep.mubr.f32.mxu0 0.0
      %4646 = vmatmul.mubr.f32.gmra.mxu0 %v4478
      %v4647 = vpop.f32.mrf.mxu0
      %v4648 = vadd.f32 %v4463, %v4647
      %v4649 = vpop.f32.mrf.mxu0
      %4650 = vmatprep.mubr.f32.mxu0 0.0
      %4651 = vmatmul.mubr.f32.gmra.mxu0 %v4481
      %v4652 = vpop.f32.mrf.mxu0
      %v4653 = vadd.f32 %v4463, %v4652
      %v4654 = vpop.f32.mrf.mxu0
      %4655 = vmatprep.mubr.f32.mxu0 0.0
      %4656 = vmatmul.mubr.f32.gmra.mxu0 %v4484
      %v4657 = vpop.f32.mrf.mxu0
      %v4658 = vadd.f32 %v4463, %v4657
      %v4659 = vpop.f32.mrf.mxu0
      %4660 = vmatprep.mubr.f32.mxu0 0.0
      %4661 = vmatmul.mubr.f32.gmra.mxu0 %v4487
      %v4662 = vpop.f32.mrf.mxu0
      %v4663 = vadd.f32 %v4463, %v4662
      %v4664 = vpop.f32.mrf.mxu0
      %4665 = vmatprep.mubr.f32.mxu0 0.0
      %4666 = vmatmul.mubr.f32.gmra.mxu0 %v4490
      %v4667 = vpop.f32.mrf.mxu0
      %v4668 = vadd.f32 %v4463, %v4667
      %v4669 = vpop.f32.mrf.mxu0
      %4670 = vmatprep.mubr.f32.mxu0 0.0
      %4671 = vmatmul.mubr.f32.gmra.mxu0 %v4493
      %v4672 = vpop.f32.mrf.mxu0
      %v4673 = vadd.f32 %v4463, %v4672
      %v4674 = vpop.f32.mrf.mxu0
      %4675 = vmatprep.mubr.f32.mxu0 0.0
      %4676 = vmatmul.mubr.f32.gmra.mxu0 %v4496
      %v4677 = vpop.f32.mrf.mxu0
      %v4678 = vadd.f32 %v4463, %v4677
      %v4679 = vpop.f32.mrf.mxu0
      %4680 = vmatprep.mubr.f32.mxu0 0.0
      %4681 = vmatmul.mubr.f32.gmra.mxu0 %v4499
      %v4682 = vpop.f32.mrf.mxu0
      %v4683 = vadd.f32 %v4463, %v4682
      %v4684 = vpop.f32.mrf.mxu0
      %4685 = vmatprep.mubr.f32.mxu0 0.0
      %4686 = vmatmul.mubr.f32.gmra.mxu0 %v4502
      %v4687 = vpop.f32.mrf.mxu0
      %v4688 = vadd.f32 %v4463, %v4687
      %v4689 = vpop.f32.mrf.mxu0
      %4690 = vmatprep.mubr.f32.mxu0 0.0
      %4691 = vmatmul.mubr.f32.gmra.mxu0 %v4505
      %v4692 = vpop.f32.mrf.mxu0
      %v4693 = vadd.f32 %v4463, %v4692
      %v4694 = vpop.f32.mrf.mxu0
      %4695 = vmatprep.mubr.f32.mxu0 0.0
      %4696 = vmatmul.mubr.f32.gmra.mxu0 %v4508
      %v4697 = vpop.f32.mrf.mxu0
      %v4698 = vadd.f32 %v4463, %v4697
      %v4699 = vpop.f32.mrf.mxu0
      %4700 = vmatprep.mubr.f32.mxu0 0.0
      %4701 = vmatmul.mubr.f32.gmra.mxu0 %v4511
      %v4702 = vpop.f32.mrf.mxu0
      %v4703 = vadd.f32 %v4463, %v4702
      %v4704 = vpop.f32.mrf.mxu0
      %4705 = vmatprep.mubr.f32.mxu0 0.0
      %4706 = vmatmul.mubr.f32.gmra.mxu0 %v4514
      %v4707 = vpop.f32.mrf.mxu0
      %v4708 = vadd.f32 %v4463, %v4707
      %v4709 = vpop.f32.mrf.mxu0
      %4710 = vmatprep.mubr.f32.mxu0 0.0
      %4711 = vmatmul.mubr.f32.gmra.mxu0 %v4517
      %v4712 = vpop.f32.mrf.mxu0
      %v4713 = vadd.f32 %v4463, %v4712
      %v4714 = vpop.f32.mrf.mxu0
      %4715 = vmatprep.mubr.f32.mxu0 0.0
      %4716 = vmatmul.mubr.f32.gmra.mxu0 %v4520
      %v4717 = vpop.f32.mrf.mxu0
      %v4718 = vadd.f32 %v4463, %v4717
      %v4719 = vpop.f32.mrf.mxu0
      %4720 = vmatprep.mubr.f32.mxu0 0.0
      %4721 = vmatmul.mubr.f32.gmra.mxu0 %v4523
      %v4722 = vpop.f32.mrf.mxu0
      %v4723 = vadd.f32 %v4463, %v4722
      %v4724 = vpop.f32.mrf.mxu0
      %4725 = vmatprep.mubr.f32.mxu0 0.0
      %4726 = vmatmul.mubr.f32.gmra.mxu0 %v4526
      %v4727 = vpop.f32.mrf.mxu0
      %v4728 = vadd.f32 %v4463, %v4727
      %v4729 = vpop.f32.mrf.mxu0
      %4730 = vmatprep.mubr.f32.mxu0 0.0
      %4731 = vmatmul.mubr.f32.gmra.mxu0 %v4529
      %v4732 = vpop.f32.mrf.mxu0
      %v4733 = vadd.f32 %v4463, %v4732
      %v4734 = vpop.f32.mrf.mxu0
      %4735 = vmatprep.mubr.f32.mxu0 0.0
      %4736 = vmatmul.mubr.f32.gmra.mxu0 %v4532
      %v4737 = vpop.f32.mrf.mxu0
      %v4738 = vadd.f32 %v4463, %v4737
      %v4739 = vpop.f32.mrf.mxu0
      %4740 = vmatprep.mubr.f32.mxu0 0.0
      %4741 = vmatmul.mubr.f32.gmra.mxu0 %v4535
      %v4742 = vpop.f32.mrf.mxu0
      %v4743 = vadd.f32 %v4463, %v4742
      %v4744 = vpop.f32.mrf.mxu0
      %4745 = vmatprep.mubr.f32.mxu0 0.0
      %4746 = vmatmul.mubr.f32.gmra.mxu0 %v4538
      %v4747 = vpop.f32.mrf.mxu0
      %v4748 = vadd.f32 %v4463, %v4747
      %v4749 = vpop.f32.mrf.mxu0
      %4750 = vmatprep.mubr.f32.mxu0 0.0
      %4751 = vmatmul.mubr.f32.gmra.mxu0 %v4541
      %v4752 = vpop.f32.mrf.mxu0
      %v4753 = vadd.f32 %v4463, %v4752
      %v4754 = vpop.f32.mrf.mxu0
      %4755 = vmatprep.mubr.f32.mxu0 0.0
      %4756 = vmatmul.mubr.f32.gmra.mxu0 %v4544
      %v4757 = vpop.f32.mrf.mxu0
      %v4758 = vadd.f32 %v4463, %v4757
      %v4759 = vpop.f32.mrf.mxu0
      %4760 = vmatprep.mubr.f32.mxu0 0.0
      %4761 = vmatmul.mubr.f32.gmra.mxu0 %v4547
      %v4762 = vpop.f32.mrf.mxu0
      %v4763 = vadd.f32 %v4463, %v4762
      %v4764 = vpop.f32.mrf.mxu0
      %4765 = vmatprep.mubr.f32.mxu0 0.0
      %4766 = vmatmul.mubr.f32.gmra.mxu0 %v4550
      %v4767 = vpop.f32.mrf.mxu0
      %v4768 = vadd.f32 %v4463, %v4767
      %v4769 = vpop.f32.mrf.mxu0
      %4770 = vmatprep.mubr.f32.mxu0 0.0
      %4771 = vmatmul.mubr.f32.gmra.mxu0 %v4553
      %v4772 = vpop.f32.mrf.mxu0
      %v4773 = vadd.f32 %v4463, %v4772
      %v4774 = vpop.f32.mrf.mxu0
      %4775 = vmatprep.mubr.f32.mxu0 0.0
      %4776 = vmatmul.mubr.f32.gmra.mxu0 %v4556
      %v4777 = vpop.f32.mrf.mxu0
      %v4778 = vadd.f32 %v4463, %v4777
      %v4779 = vpop.f32.mrf.mxu0
      %4780 = vmatprep.mubr.f32.mxu0 0.0
      %4781 = vmatmul.mubr.f32.gmra.mxu0 %v4559
      %v4782 = vpop.f32.mrf.mxu0
      %v4783 = vadd.f32 %v4463, %v4782
      %v4784 = vpop.f32.mrf.mxu0
      %4785 = vdwg.mxu0
      %v4786 = vsel %vm4086, %v4628, 0.0
      %v4787 = vsel %vm4086, %v4633, 0.0
      %v4788 = vadd.f32 %v4786, %v4787
      %v4789 = vsel %vm4086, %v4638, 0.0
      %v4790 = vadd.f32 %v4788, %v4789
      %v4791 = vsel %vm4086, %v4643, 0.0
      %v4792 = vadd.f32 %v4790, %v4791
      %v4793 = vsel %vm4086, %v4648, 0.0
      %v4794 = vadd.f32 %v4792, %v4793
      %v4795 = vsel %vm4086, %v4653, 0.0
      %v4796 = vadd.f32 %v4794, %v4795
      %v4797 = vsel %vm4086, %v4658, 0.0
      %v4798 = vadd.f32 %v4796, %v4797
      %v4799 = vsel %vm4086, %v4663, 0.0
      %v4800 = vadd.f32 %v4798, %v4799
      %v4801 = vsel %vm4086, %v4668, 0.0
      %v4802 = vadd.f32 %v4800, %v4801
      %v4803 = vsel %vm4086, %v4673, 0.0
      %v4804 = vadd.f32 %v4802, %v4803
      %v4805 = vsel %vm4086, %v4678, 0.0
      %v4806 = vadd.f32 %v4804, %v4805
      %v4807 = vsel %vm4086, %v4683, 0.0
      %v4808 = vadd.f32 %v4806, %v4807
      %v4809 = vsel %vm4086, %v4688, 0.0
      %v4810 = vadd.f32 %v4808, %v4809
      %v4811 = vsel %vm4086, %v4693, 0.0
      %v4812 = vadd.f32 %v4810, %v4811
      %v4813 = vsel %vm4086, %v4698, 0.0
      %v4814 = vadd.f32 %v4812, %v4813
      %v4815 = vsel %vm4086, %v4703, 0.0
      %v4816 = vadd.f32 %v4814, %v4815
      %v4817 = vsel %vm4086, %v4708, 0.0
      %v4818 = vadd.f32 %v4816, %v4817
      %v4819 = vsel %vm4086, %v4713, 0.0
      %v4820 = vadd.f32 %v4818, %v4819
      %v4821 = vsel %vm4086, %v4718, 0.0
      %v4822 = vadd.f32 %v4820, %v4821
      %v4823 = vsel %vm4086, %v4723, 0.0
      %v4824 = vadd.f32 %v4822, %v4823
      %v4825 = vsel %vm4086, %v4728, 0.0
      %v4826 = vadd.f32 %v4824, %v4825
      %v4827 = vsel %vm4086, %v4733, 0.0
      %v4828 = vadd.f32 %v4826, %v4827
      %v4829 = vsel %vm4086, %v4738, 0.0
      %v4830 = vadd.f32 %v4828, %v4829
      %v4831 = vsel %vm4086, %v4743, 0.0
      %v4832 = vadd.f32 %v4830, %v4831
      %v4833 = vsel %vm4086, %v4748, 0.0
      %v4834 = vadd.f32 %v4832, %v4833
      %v4835 = vsel %vm4086, %v4753, 0.0
      %v4836 = vadd.f32 %v4834, %v4835
      %v4837 = vsel %vm4086, %v4758, 0.0
      %v4838 = vadd.f32 %v4836, %v4837
      %v4839 = vsel %vm4086, %v4763, 0.0
      %v4840 = vadd.f32 %v4838, %v4839
      %v4841 = vsel %vm4086, %v4768, 0.0
      %v4842 = vadd.f32 %v4840, %v4841
      %v4843 = vsel %vm4086, %v4773, 0.0
      %v4844 = vadd.f32 %v4842, %v4843
      %v4845 = vsel %vm4086, %v4778, 0.0
      %v4846 = vadd.f32 %v4844, %v4845
      %v4847 = vsel %vm4086, %v4783, 0.0
      %v4848 = vadd.f32 %v4846, %v4847
      %v4849 = vrot.slane %v4848, 4
      %v4850 = vadd.f32 %v4848, %v4849
      %v4851 = vrot.slane %v4850, 2
      %v4852 = vadd.f32 %v4850, %v4851
      %v4853 = vrot.slane %v4852, 1
      %v4854 = vadd.f32 %v4852, %v4853
      %v4855 = vsel %vm4086, %v4628, -inf
      %v4856 = vsel %vm4086, %v4633, -inf
      %v4857 = vsel %vm4086, %v4638, -inf
      %v4858 = vsel %vm4086, %v4643, -inf
      %v4859 = vsel %vm4086, %v4648, -inf
      %v4860 = vmax.f32 %v4855, %v4859
      %v4861 = vsel %vm4086, %v4653, -inf
      %v4862 = vmax.f32 %v4856, %v4861
      %v4863 = vsel %vm4086, %v4658, -inf
      %v4864 = vmax.f32 %v4857, %v4863
      %v4865 = vsel %vm4086, %v4663, -inf
      %v4866 = vmax.f32 %v4858, %v4865
      %v4867 = vsel %vm4086, %v4668, -inf
      %v4868 = vmax.f32 %v4860, %v4867
      %v4869 = vsel %vm4086, %v4673, -inf
      %v4870 = vmax.f32 %v4862, %v4869
      %v4871 = vsel %vm4086, %v4678, -inf
      %v4872 = vmax.f32 %v4864, %v4871
      %v4873 = vsel %vm4086, %v4683, -inf
      %v4874 = vmax.f32 %v4866, %v4873
      %v4875 = vsel %vm4086, %v4688, -inf
      %v4876 = vmax.f32 %v4868, %v4875
      %v4877 = vsel %vm4086, %v4693, -inf
      %v4878 = vmax.f32 %v4870, %v4877
      %v4879 = vsel %vm4086, %v4698, -inf
      %v4880 = vmax.f32 %v4872, %v4879
      %v4881 = vsel %vm4086, %v4703, -inf
      %v4882 = vmax.f32 %v4874, %v4881
      %v4883 = vsel %vm4086, %v4708, -inf
      %v4884 = vmax.f32 %v4876, %v4883
      %v4885 = vsel %vm4086, %v4713, -inf
      %v4886 = vmax.f32 %v4878, %v4885
      %v4887 = vsel %vm4086, %v4718, -inf
      %v4888 = vmax.f32 %v4880, %v4887
      %v4889 = vsel %vm4086, %v4723, -inf
      %v4890 = vmax.f32 %v4882, %v4889
      %v4891 = vsel %vm4086, %v4728, -inf
      %v4892 = vmax.f32 %v4884, %v4891
      %v4893 = vsel %vm4086, %v4733, -inf
      %v4894 = vmax.f32 %v4886, %v4893
      %v4895 = vsel %vm4086, %v4738, -inf
      %v4896 = vmax.f32 %v4888, %v4895
      %v4897 = vsel %vm4086, %v4743, -inf
      %v4898 = vmax.f32 %v4890, %v4897
      %v4899 = vsel %vm4086, %v4748, -inf
      %v4900 = vmax.f32 %v4892, %v4899
      %v4901 = vsel %vm4086, %v4753, -inf
      %v4902 = vmax.f32 %v4894, %v4901
      %v4903 = vsel %vm4086, %v4758, -inf
      %v4904 = vmax.f32 %v4896, %v4903
      %v4905 = vsel %vm4086, %v4763, -inf
      %v4906 = vmax.f32 %v4898, %v4905
      %v4907 = vsel %vm4086, %v4768, -inf
      %v4908 = vmax.f32 %v4900, %v4907
      %v4909 = vsel %vm4086, %v4773, -inf
      %v4910 = vmax.f32 %v4902, %v4909
      %v4911 = vsel %vm4086, %v4778, -inf
      %v4912 = vmax.f32 %v4904, %v4911
      %v4913 = vsel %vm4086, %v4783, -inf
      %v4914 = vmax.f32 %v4906, %v4913
      %v4915 = vmax.f32 %v4908, %v4910
      %v4916 = vmax.f32 %v4912, %v4914
      %v4917 = vmax.f32 %v4915, %v4916
      %v4918 = vrot.slane %v4917, 4
      %v4919 = vmax.f32 %v4917, %v4918
      %v4920 = vrot.slane %v4919, 2
      %v4921 = vmax.f32 %v4919, %v4920
      %v4922 = vrot.slane %v4921, 1
      %v4923 = vmax.f32 %v4921, %v4922
      %v4924 = vmul.f32 %v4854, 0.00390625
      %v4925 = vmax.f32 %v4924, %v4923
      %v4926 = vsel %vm4086, %v4925, -inf
      %4927 = vmax.xlane.f32.xlu0 %v4926
      %v4928 = vpop.xlane.xlu0 %4927
      %v4929 = vsub.f32 %v4924, %v4928
      %v4930 = vmul.f32 %v4929, 1.442695
      %v4931 = vpow.pop %v4930
      %v4932 = vsub.f32 %v4923, %v4928
      %v4933 = vmul.f32 %v4932, 1.442695
      %v4934 = vpow.pop %v4933
      %v4935 = vadd.f32 %v4931, %v4934
      %v4936 = vsel %vm4086, %v4935, 0.0
      %4937 = vadd.xlane.f32.xlu0 %v4936
      %v4938 = vpop.xlane.xlu0 %4937
      %v4939 = vrcp.pop %v4938
      %v4940 = vmul.f32 %v4938, %v4939
      %v4941 = vsub.f32 2.0, %v4940
      %v4942 = vmul.f32 %v4939, %v4941
      %4944 = vrot.lane.b32.xlu0 %v4931, 127
      %v4945 = vpop.permute.xlu0 %4944
      %v4947 = vadd.f32 %v4931, %v4945
      %v4948 = vmul.f32 %v4947, %v4942
      %v4949 = vld [vmem:[#allocation2] sm:$0x1]
      %s4951 = vtos %v4948
      %v4952 = vstv %s4951
      %v4954 = vmul.f32 %v4628, %v4952
      %v4955 = vmul.f32 %v4633, %v4952
      %v4956 = vmul.f32 %v4638, %v4952
      %v4957 = vmul.f32 %v4643, %v4952
      %v4958 = vmul.f32 %v4648, %v4952
      %v4959 = vmul.f32 %v4653, %v4952
      %v4960 = vmul.f32 %v4658, %v4952
      %v4961 = vmul.f32 %v4663, %v4952
      %v4962 = vmul.f32 %v4668, %v4952
      %v4963 = vmul.f32 %v4673, %v4952
      %v4964 = vmul.f32 %v4678, %v4952
      %v4965 = vmul.f32 %v4683, %v4952
      %v4966 = vmul.f32 %v4688, %v4952
      %v4967 = vmul.f32 %v4693, %v4952
      %v4968 = vmul.f32 %v4698, %v4952
      %v4969 = vmul.f32 %v4703, %v4952
      %v4970 = vmul.f32 %v4708, %v4952
      %v4971 = vmul.f32 %v4713, %v4952
      %v4972 = vmul.f32 %v4718, %v4952
      %v4973 = vmul.f32 %v4723, %v4952
      %v4974 = vmul.f32 %v4728, %v4952
      %v4975 = vmul.f32 %v4733, %v4952
      %v4976 = vmul.f32 %v4738, %v4952
      %v4977 = vmul.f32 %v4743, %v4952
      %v4978 = vmul.f32 %v4748, %v4952
      %v4979 = vmul.f32 %v4753, %v4952
      %v4980 = vmul.f32 %v4758, %v4952
      %v4981 = vmul.f32 %v4763, %v4952
      %v4982 = vmul.f32 %v4768, %v4952
      %v4983 = vmul.f32 %v4773, %v4952
      %v4984 = vmul.f32 %v4778, %v4952
      %v4985 = vmul.f32 %v4783, %v4952
      %4986 = vrot.lane.b32.xlu0 %v4948, 126
      %v4987 = vpop.permute.xlu0 %4986
      %s4988 = vtos %v4987
      %v4989 = vstv %s4988
      %v4991 = vmul.f32 %v4628, %v4989
      %v4992 = vmul.f32 %v4633, %v4989
      %v4993 = vmul.f32 %v4638, %v4989
      %v4994 = vmul.f32 %v4643, %v4989
      %v4995 = vmul.f32 %v4648, %v4989
      %v4996 = vmul.f32 %v4653, %v4989
      %v4997 = vmul.f32 %v4658, %v4989
      %v4998 = vmul.f32 %v4663, %v4989
      %v4999 = vmul.f32 %v4668, %v4989
      %v5000 = vmul.f32 %v4673, %v4989
      %v5001 = vmul.f32 %v4678, %v4989
      %v5002 = vmul.f32 %v4683, %v4989
      %v5003 = vmul.f32 %v4688, %v4989
      %v5004 = vmul.f32 %v4693, %v4989
      %v5005 = vmul.f32 %v4698, %v4989
      %v5006 = vmul.f32 %v4703, %v4989
      %v5007 = vmul.f32 %v4708, %v4989
      %v5008 = vmul.f32 %v4713, %v4989
      %v5009 = vmul.f32 %v4718, %v4989
      %v5010 = vmul.f32 %v4723, %v4989
      %v5011 = vmul.f32 %v4728, %v4989
      %v5012 = vmul.f32 %v4733, %v4989
      %v5013 = vmul.f32 %v4738, %v4989
      %v5014 = vmul.f32 %v4743, %v4989
      %v5015 = vmul.f32 %v4748, %v4989
      %v5016 = vmul.f32 %v4753, %v4989
      %v5017 = vmul.f32 %v4758, %v4989
      %v5018 = vmul.f32 %v4763, %v4989
      %v5019 = vmul.f32 %v4768, %v4989
      %v5020 = vmul.f32 %v4773, %v4989
      %v5021 = vmul.f32 %v4778, %v4989
      %v5022 = vmul.f32 %v4783, %v4989
      %5055 = vrot.lane.b32.xlu0 %v4991, 96
      %v5056 = vpop.permute.xlu0 %5055
      %5057 = vrot.lane.b32.xlu0 %v4992, 96
      %v5058 = vpop.permute.xlu0 %5057
      %5059 = vrot.lane.b32.xlu0 %v4993, 96
      %v5060 = vpop.permute.xlu0 %5059
      %5061 = vrot.lane.b32.xlu0 %v4994, 96
      %v5062 = vpop.permute.xlu0 %5061
      %5063 = vrot.lane.b32.xlu0 %v4995, 96
      %v5064 = vpop.permute.xlu0 %5063
      %5065 = vrot.lane.b32.xlu0 %v4996, 96
      %v5066 = vpop.permute.xlu0 %5065
      %5067 = vrot.lane.b32.xlu0 %v4997, 96
      %v5068 = vpop.permute.xlu0 %5067
      %5069 = vrot.lane.b32.xlu0 %v4998, 96
      %v5070 = vpop.permute.xlu0 %5069
      %5071 = vrot.lane.b32.xlu0 %v4999, 96
      %v5072 = vpop.permute.xlu0 %5071
      %5073 = vrot.lane.b32.xlu0 %v5000, 96
      %v5074 = vpop.permute.xlu0 %5073
      %5075 = vrot.lane.b32.xlu0 %v5001, 96
      %v5076 = vpop.permute.xlu0 %5075
      %5077 = vrot.lane.b32.xlu0 %v5002, 96
      %v5078 = vpop.permute.xlu0 %5077
      %5079 = vrot.lane.b32.xlu0 %v5003, 96
      %v5080 = vpop.permute.xlu0 %5079
      %5081 = vrot.lane.b32.xlu0 %v5004, 96
      %v5082 = vpop.permute.xlu0 %5081
      %5083 = vrot.lane.b32.xlu0 %v5005, 96
      %v5084 = vpop.permute.xlu0 %5083
      %5085 = vrot.lane.b32.xlu0 %v5006, 96
      %v5086 = vpop.permute.xlu0 %5085
      %5087 = vrot.lane.b32.xlu0 %v5007, 96
      %v5088 = vpop.permute.xlu0 %5087
      %5089 = vrot.lane.b32.xlu0 %v5008, 96
      %v5090 = vpop.permute.xlu0 %5089
      %5091 = vrot.lane.b32.xlu0 %v5009, 96
      %v5092 = vpop.permute.xlu0 %5091
      %5093 = vrot.lane.b32.xlu0 %v5010, 96
      %v5094 = vpop.permute.xlu0 %5093
      %5095 = vrot.lane.b32.xlu0 %v5011, 96
      %v5096 = vpop.permute.xlu0 %5095
      %5097 = vrot.lane.b32.xlu0 %v5012, 96
      %v5098 = vpop.permute.xlu0 %5097
      %5099 = vrot.lane.b32.xlu0 %v5013, 96
      %v5100 = vpop.permute.xlu0 %5099
      %5101 = vrot.lane.b32.xlu0 %v5014, 96
      %v5102 = vpop.permute.xlu0 %5101
      %5103 = vrot.lane.b32.xlu0 %v5015, 96
      %v5104 = vpop.permute.xlu0 %5103
      %5105 = vrot.lane.b32.xlu0 %v5016, 96
      %v5106 = vpop.permute.xlu0 %5105
      %5107 = vrot.lane.b32.xlu0 %v5017, 96
      %v5108 = vpop.permute.xlu0 %5107
      %5109 = vrot.lane.b32.xlu0 %v5018, 96
      %v5110 = vpop.permute.xlu0 %5109
      %5111 = vrot.lane.b32.xlu0 %v5019, 96
      %v5112 = vpop.permute.xlu0 %5111
      %5113 = vrot.lane.b32.xlu0 %v5020, 96
      %v5114 = vpop.permute.xlu0 %5113
      %5115 = vrot.lane.b32.xlu0 %v5021, 96
      %v5116 = vpop.permute.xlu0 %5115
      %5117 = vrot.lane.b32.xlu0 %v5022, 96
      %v5118 = vpop.permute.xlu0 %5117
      %v5151 = vadd.f32 %v4954, %v5056
      %v5152 = vadd.f32 %v4955, %v5058
      %v5153 = vadd.f32 %v4956, %v5060
      %v5154 = vadd.f32 %v4957, %v5062
      %v5155 = vadd.f32 %v4958, %v5064
      %v5156 = vadd.f32 %v4959, %v5066
      %v5157 = vadd.f32 %v4960, %v5068
      %v5158 = vadd.f32 %v4961, %v5070
      %v5159 = vadd.f32 %v4962, %v5072
      %v5160 = vadd.f32 %v4963, %v5074
      %v5161 = vadd.f32 %v4964, %v5076
      %v5162 = vadd.f32 %v4965, %v5078
      %v5163 = vadd.f32 %v4966, %v5080
      %v5164 = vadd.f32 %v4967, %v5082
      %v5165 = vadd.f32 %v4968, %v5084
      %v5166 = vadd.f32 %v4969, %v5086
      %v5167 = vadd.f32 %v4970, %v5088
      %v5168 = vadd.f32 %v4971, %v5090
      %v5169 = vadd.f32 %v4972, %v5092
      %v5170 = vadd.f32 %v4973, %v5094
      %v5171 = vadd.f32 %v4974, %v5096
      %v5172 = vadd.f32 %v4975, %v5098
      %v5173 = vadd.f32 %v4976, %v5100
      %v5174 = vadd.f32 %v4977, %v5102
      %v5175 = vadd.f32 %v4978, %v5104
      %v5176 = vadd.f32 %v4979, %v5106
      %v5177 = vadd.f32 %v4980, %v5108
      %v5178 = vadd.f32 %v4981, %v5110
      %v5179 = vadd.f32 %v4982, %v5112
      %v5180 = vadd.f32 %v4983, %v5114
      %v5181 = vadd.f32 %v4984, %v5116
      %v5182 = vadd.f32 %v4985, %v5118
      %v5184 = vlaneseq
      %v5185 = vshrl.u32 %v5184, 7
      %v5186 = vsub.s32 0, %v5185
      %v5187 = vrot.slane %v4949, %v5186
      %5188 = vset.pattern.permute.xlu0 0
      %5189 = vperm.xlu0 %5188, %v5187
      %v5190 = vpop.permute.xlu0 %5189
      %v5192 = vmul.f32 %v5190, %v5151
      %v5193 = vmul.f32 %v5190, %v5152
      %v5194 = vmul.f32 %v5190, %v5153
      %v5195 = vmul.f32 %v5190, %v5154
      %v5196 = vmul.f32 %v5190, %v5155
      %v5197 = vmul.f32 %v5190, %v5156
      %v5198 = vmul.f32 %v5190, %v5157
      %v5199 = vmul.f32 %v5190, %v5158
      %v5200 = vmul.f32 %v5190, %v5159
      %v5201 = vmul.f32 %v5190, %v5160
      %v5202 = vmul.f32 %v5190, %v5161
      %v5203 = vmul.f32 %v5190, %v5162
      %v5204 = vmul.f32 %v5190, %v5163
      %v5205 = vmul.f32 %v5190, %v5164
      %v5206 = vmul.f32 %v5190, %v5165
      %v5207 = vmul.f32 %v5190, %v5166
      %v5208 = vmul.f32 %v5190, %v5167
      %v5209 = vmul.f32 %v5190, %v5168
      %v5210 = vmul.f32 %v5190, %v5169
      %v5211 = vmul.f32 %v5190, %v5170
      %v5212 = vmul.f32 %v5190, %v5171
      %v5213 = vmul.f32 %v5190, %v5172
      %v5214 = vmul.f32 %v5190, %v5173
      %v5215 = vmul.f32 %v5190, %v5174
      %v5216 = vmul.f32 %v5190, %v5175
      %v5217 = vmul.f32 %v5190, %v5176
      %v5218 = vmul.f32 %v5190, %v5177
      %v5219 = vmul.f32 %v5190, %v5178
      %v5220 = vmul.f32 %v5190, %v5179
      %v5221 = vmul.f32 %v5190, %v5180
      %v5222 = vmul.f32 %v5190, %v5181
      %v5223 = vmul.f32 %v5190, %v5182
      %v5224 = vadd.f32 %v5192, %v382
      %v5225 = vadd.f32 %v5193, %v383
      %v5226 = vadd.f32 %v5194, %v384
      %v5227 = vadd.f32 %v5195, %v385
      %v5228 = vadd.f32 %v5196, %v386
      %v5229 = vadd.f32 %v5197, %v387
      %v5230 = vadd.f32 %v5198, %v388
      %v5231 = vadd.f32 %v5199, %v389
      %v5232 = vadd.f32 %v5200, %v390
      %v5233 = vadd.f32 %v5201, %v391
      %v5234 = vadd.f32 %v5202, %v392
      %v5235 = vadd.f32 %v5203, %v393
      %v5236 = vadd.f32 %v5204, %v394
      %v5237 = vadd.f32 %v5205, %v395
      %v5238 = vadd.f32 %v5206, %v396
      %v5239 = vadd.f32 %v5207, %v397
      %v5240 = vadd.f32 %v5208, %v398
      %v5241 = vadd.f32 %v5209, %v399
      %v5242 = vadd.f32 %v5210, %v400
      %v5243 = vadd.f32 %v5211, %v401
      %v5244 = vadd.f32 %v5212, %v402
      %v5245 = vadd.f32 %v5213, %v403
      %v5246 = vadd.f32 %v5214, %v404
      %v5247 = vadd.f32 %v5215, %v405
      %v5248 = vadd.f32 %v5216, %v406
      %v5249 = vadd.f32 %v5217, %v407
      %v5250 = vadd.f32 %v5218, %v408
      %v5251 = vadd.f32 %v5219, %v409
      %v5252 = vadd.f32 %v5220, %v410
      %v5253 = vadd.f32 %v5221, %v411
      %v5254 = vadd.f32 %v5222, %v412
      %v5255 = vadd.f32 %v5223, %v413
      %5256 = vst.msk [vmem:[%s381] sm:$0xff] %vm489, %v5224
      %5257 = vst.msk [vmem:[%s381 + $0x8] sm:$0xff] %vm489, %v5225
      %5258 = vst.msk [vmem:[%s381 + $0x10] sm:$0xff] %vm489, %v5226
      %5259 = vst.msk [vmem:[%s381 + $0x18] sm:$0xff] %vm489, %v5227
      %5260 = vst.msk [vmem:[%s381 + $0x20] sm:$0xff] %vm489, %v5228
      %5261 = vst.msk [vmem:[%s381 + $0x28] sm:$0xff] %vm489, %v5229
      %5262 = vst.msk [vmem:[%s381 + $0x30] sm:$0xff] %vm489, %v5230
      %5263 = vst.msk [vmem:[%s381 + $0x38] sm:$0xff] %vm489, %v5231
      %5264 = vst.msk [vmem:[%s381 + $0x40] sm:$0xff] %vm489, %v5232
      %5265 = vst.msk [vmem:[%s381 + $0x48] sm:$0xff] %vm489, %v5233
      %5266 = vst.msk [vmem:[%s381 + $0x50] sm:$0xff] %vm489, %v5234
      %5267 = vst.msk [vmem:[%s381 + $0x58] sm:$0xff] %vm489, %v5235
      %5268 = vst.msk [vmem:[%s381 + $0x60] sm:$0xff] %vm489, %v5236
      %5269 = vst.msk [vmem:[%s381 + $0x68] sm:$0xff] %vm489, %v5237
      %5270 = vst.msk [vmem:[%s381 + $0x70] sm:$0xff] %vm489, %v5238
      %5271 = vst.msk [vmem:[%s381 + $0x78] sm:$0xff] %vm489, %v5239
      %5272 = vst.msk [vmem:[%s381 + $0x80] sm:$0xff] %vm489, %v5240
      %5273 = vst.msk [vmem:[%s381 + $0x88] sm:$0xff] %vm489, %v5241
      %5274 = vst.msk [vmem:[%s381 + $0x90] sm:$0xff] %vm489, %v5242
      %5275 = vst.msk [vmem:[%s381 + $0x98] sm:$0xff] %vm489, %v5243
      %5276 = vst.msk [vmem:[%s381 + $0xa0] sm:$0xff] %vm489, %v5244
      %5277 = vst.msk [vmem:[%s381 + $0xa8] sm:$0xff] %vm489, %v5245
      %5278 = vst.msk [vmem:[%s381 + $0xb0] sm:$0xff] %vm489, %v5246
      %5279 = vst.msk [vmem:[%s381 + $0xb8] sm:$0xff] %vm489, %v5247
      %5280 = vst.msk [vmem:[%s381 + $0xc0] sm:$0xff] %vm489, %v5248
      %5281 = vst.msk [vmem:[%s381 + $0xc8] sm:$0xff] %vm489, %v5249
      %5282 = vst.msk [vmem:[%s381 + $0xd0] sm:$0xff] %vm489, %v5250
      %5283 = vst.msk [vmem:[%s381 + $0xd8] sm:$0xff] %vm489, %v5251
      %5284 = vst.msk [vmem:[%s381 + $0xe0] sm:$0xff] %vm489, %v5252
      %5285 = vst.msk [vmem:[%s381 + $0xe8] sm:$0xff] %vm489, %v5253
      %5286 = vst.msk [vmem:[%s381 + $0xf0] sm:$0xff] %vm489, %v5254
      %5287 = vst.msk [vmem:[%s381 + $0xf8] sm:$0xff] %vm489, %v5255
      %p5288 = scmp.lt.s32.totalorder %s23, 1
      %s5289 = scalar_select %p5288, %s23, 1
      %s5290 = smul.addr %s5289, 32
      %s5291 = smul.addr %s5290, 8
      %s5292 = scalar_lea.vmem %s10, %s5291
      // Predicated region
      $region61: #{sam_pallas.1} parent=59 // pred_check
        %p5293 = pneg %p261
      $region62: #{sam_pallas.1} parent=59 // pred_check_branch
        %5295 = sbr.rel (%p5293) target = $region64
      $region63: #{sam_pallas.1} parent=59 // pred_region
        _
      $region64: #{sam_pallas.1} parent=59 // pred_fallthru
        _
    $region60: #{sam_pallas.1} parent=5 // pred_fallthru
      _
    %p5296 = scmp.le.s32.totalorder 2, %s18
    // Predicated region
    $region65: #{sam_pallas.1} parent=5 // pred_check
      %p5297 = pneg %p5296
    $region66: #{sam_pallas.1} parent=5 // pred_check_branch
      %5299 = sbr.rel (%p5297) target = $region68
    $region67: #{sam_pallas.1} parent=5 // pred_region
      %s5300 = ssub.s32 %s18, 2
      // Predicated region
      $region69: #{sam_pallas.1} parent=67 // pred_check
        %p5301 = pneg %p267
      $region70: #{sam_pallas.1} parent=67 // pred_check_branch
        %5303 = sbr.rel (%p5301) target = $region72
      $region71: #{sam_pallas.1} parent=67 // pred_region
        %p5304 = scmp.lt.s32.totalorder %s24, 1
        %s5305 = scalar_select %p5304, %s24, 1
        %s5306 = smul.addr %s5305, 32
        %s5307 = smul.addr %s5306, 8
        %s5308 = scalar_lea.vmem %s10, %s5307
      $region72: #{sam_pallas.1} parent=67 // pred_fallthru
        _
    $region68: #{sam_pallas.1} parent=5 // pred_fallthru
      _
  $region6: #{sam_pallas.1} parent=0 // loop_footer
    %s22 = sadd.s32 1, %s18
  $region7: #{sam_pallas.1} parent=0 // loop_footer_branch
    %17 = sbr.rel target = $region3
  $region8: #{sam_pallas.1} parent=0 // loop_exit
    _

</llo_original>
